<compile_context>
chip_gen: v7x
topology: tpu7x:2x2x1
jax: 0.10.0
libtpu: 0.0.40
codegen_flags: <defaults>
</compile_context>

<pallas_src>
import functools

import jax
import jax.numpy as jnp
from jax.experimental import pallas as pl
from jax.experimental.pallas import tpu as pltpu

LANE = 128


def _round_up(n, m):
    return ((n + m - 1) // m) * m


# ------------------------------ fused kernel --------------------------------
def fused_gru_mlp_kernel(*refs, num_layers, T, B, H, classification):
    """refs = (x2d, [wih, whh, bi, bh]*L, w1, b1, w2, b2, out, [seq_scratch]).

    x2d is time-major (T*B, D_in); all H / O dims are pre-padded to LANE.
    """
    n_in = 1 + 4 * num_layers + 4
    x_ref = refs[0]
    p = refs[1:n_in]
    out_ref = refs[n_in]
    seq_scratch = refs[n_in + 1] if len(refs) > n_in + 1 else None

    seq2d = x_ref[...]                                   # (T*B, D_in)

    h = None
    for layer in range(num_layers):
        wih_ref, whh_ref, bi_ref, bh_ref = p[4 * layer: 4 * layer + 4]
        collect = layer < num_layers - 1                 # last layer: final h only

        # Hoisted input projection for ALL timesteps in ONE matmul:
        # (T*B, D_in) @ (D_in, 3H) + bias.  Gate order r | z | n; b_hh_{r,z}
        # is pre-folded into bi by prepare_params().
        gi = jnp.dot(seq2d, wih_ref[...],
                     preferred_element_type=jnp.float32) + bi_ref[...]

        whh = whh_ref[...]                               # (H, 3H) fused recurrent W
        bh = bh_ref[...]                                 # (1, 3H): [0 | 0 | b_hh_n]

        h = jnp.zeros((B, H), jnp.float32)               # h0 = zeros (as in torch)
        # Serial recurrence, fully unrolled (T small & static): ONE fused
        # (B,H)x(H,3H) matmul per step on the MXU critical path; gate slices
        # are lane-aligned (H is a LANE multiple).
        # TODO(synk): for long T / large H, chunk T with lax.fori_loop(unroll=True)
        # to bound live ranges and keep whh staged via pltpu.matmul_push_rhs.
        for t in range(T):
            gh = jnp.dot(h, whh, preferred_element_type=jnp.float32) + bh
            gi_t = gi[t * B:(t + 1) * B]                 # contiguous time-major slab
            r = jax.nn.sigmoid(gi_t[:, 0:H] + gh[:, 0:H])
            z = jax.nn.sigmoid(gi_t[:, H:2 * H] + gh[:, H:2 * H])
            n = jnp.tanh(gi_t[:, 2 * H:3 * H] + r * gh[:, 2 * H:3 * H])
            h = n + z * (h - n)                          # == (1 - z)*n + z*h
            if collect:
                seq_scratch[pl.ds(t * B, B), :] = h      # sequence stays in VMEM

        if collect:
            seq2d = seq_scratch[...]                     # next layer input (T*B, H)

    # ---- MLP head fused as epilogue: fc2(relu(fc1(relu(h_last)))) ----
    w1_ref, b1_ref, w2_ref, b2_ref = p[4 * num_layers: 4 * num_layers + 4]
    a = jnp.maximum(h, 0.0)
    z1 = jnp.dot(a, w1_ref[...], preferred_element_type=jnp.float32) + b1_ref[...]
    z1 = jnp.maximum(z1, 0.0)
    z2 = jnp.dot(z1, w2_ref[...], preferred_element_type=jnp.float32) + b2_ref[...]
    if classification:
        z2 = jax.nn.sigmoid(z2)
    out_ref[...] = z2.astype(out_ref.dtype)              # lane-dense (B, O_pad) store


# ------------------------------ wrapper --------------------------------------
def gru_forward(x, prepared, classification=False):
    """x: (B, T, D) batch-first, like the PyTorch module."""
    # TODO(synk): torch.nn.GRU inter-layer dropout is train-mode only; the eval
    # forward pass has no dropout, so none is applied here.
    x = x.astype(jnp.float32)
    B, T, D = x.shape
    layers = prepared["gru_layers"]
    num_layers = len(layers)
    H_pad = layers[0]["whh"].shape[0]
    O = prepared["out_dim"]
    O_pad = prepared["w2"].shape[-1]

    # Time-major flatten once in the wrapper (one-time XLA op) so every
    # in-kernel per-step slice / store is a contiguous static row slab.
    x2d = jnp.transpose(x, (1, 0, 2)).reshape(T * B, D)

    args = [x2d]
    for lp in layers:
        args += [lp["wih"], lp["whh"], lp["bi"], lp["bh"]]
    args += [prepared["w1"], prepared["b1"], prepared["w2"], prepared["b2"]]

    scratch_shapes = []
    if num_layers > 1:                                   # unused when L == 1
        scratch_shapes.append(pltpu.VMEM((T * B, H_pad), jnp.float32))

    # Explicit VMEM budget: everything is resident (grid-less call); keep >=
    # default 32 MiB scoped limit, cap at v7x's 64 MiB physical VMEM.
    resident = sum(int(a.size) * a.dtype.itemsize for a in args)
    resident += T * B * H_pad * 4 + T * B * 3 * H_pad * 4 + B * O_pad * 4
    vmem_limit = int(min(64 << 20, max(32 << 20, 4 * resident)))

    kernel = functools.partial(fused_gru_mlp_kernel,
                               num_layers=num_layers, T=T, B=B, H=H_pad,
                               classification=classification)
    out_pad = pl.pallas_call(
        kernel,
        out_shape=jax.ShapeDtypeStruct((B, O_pad), jnp.float32),
        in_specs=[pl.BlockSpec(memory_space=pltpu.MemorySpace.VMEM)
                  for _ in args],
        out_specs=pl.BlockSpec(memory_space=pltpu.MemorySpace.VMEM),
        scratch_shapes=scratch_shapes,
        compiler_params=pltpu.CompilerParams(vmem_limit_bytes=vmem_limit),
    )(*args)
    return out_pad[:, :O]                                # drop zero padding cols


# --------------------------- parameter handling ------------------------------
def init_params(key, input_dim, hidden_dim, output_dim, layers):
    """PyTorch-style init U(-1/sqrt(H), 1/sqrt(H)), raw torch layouts."""
    k = 1.0 / float(hidden_dim) ** 0.5
    params = {"gru_layers": []}
    for layer in range(layers):
        d_in = input_dim if layer == 0 else hidden_dim
        key, k1, k2, k3, k4 = jax.random.split(key, 5)
        params["gru_layers"].append({
            "w_ih": jax.random.uniform(k1, (3 * hidden_dim, d_in), jnp.float32, -k, k),
            "w_hh": jax.random.uniform(k2, (3 * hidden_dim, hidden_dim), jnp.float32, -k, k),
            "b_ih": jax.random.uniform(k3, (3 * hidden_dim,), jnp.float32, -k, k),
            "b_hh": jax.random.uniform(k4, (3 * hidden_dim,), jnp.float32, -k, k),
        })
    key, k1, k2, k3, k4 = jax.random.split(key, 5)
    params["fc1_w"] = jax.random.uniform(k1, (hidden_dim, hidden_dim), jnp.float32, -k, k)
    params["fc1_b"] = jax.random.uniform(k2, (hidden_dim,), jnp.float32, -k, k)
    params["fc2_w"] = jax.random.uniform(k3, (output_dim, hidden_dim), jnp.float32, -k, k)
    params["fc2_b"] = jax.random.uniform(k4, (output_dim,), jnp.float32, -k, k)
    return params


def prepare_params(params):
    """One-time layout transforms (off the per-call hot path).

    Gate weights concatenated along the OUTPUT dim as [r | z | n], each gate
    padded to a LANE (128) multiple, pre-transposed to (in, out) -> one fused
    matmul per projection with free lane-aligned gate slices.  Zero padding
    keeps padded hidden columns exactly zero through the recurrence.
    """
    H = params["gru_layers"][0]["w_hh"].shape[1]
    H_pad = _round_up(H, LANE)

    prep = {"gru_layers": []}
    for layer, lp in enumerate(params["gru_layers"]):
        w_ih, w_hh = lp["w_ih"], lp["w_hh"]
        b_ih, b_hh = lp["b_ih"], lp["b_hh"]
        d_in = w_ih.shape[1]
        d_in_pad = d_in if layer == 0 else H_pad         # later layers eat padded h

        wih = jnp.zeros((d_in_pad, 3 * H_pad), jnp.float32)
        whh = jnp.zeros((H_pad, 3 * H_pad), jnp.float32)
        bi = jnp.zeros((1, 3 * H_pad), jnp.float32)
        bh = jnp.zeros((1, 3 * H_pad), jnp.float32)
        for g in range(3):                               # gate order: r, z, n
            c = g * H_pad
            wih = wih.at[:d_in, c:c + H].set(w_ih[g * H:(g + 1) * H, :].T)
            whh = whh.at[:H, c:c + H].set(w_hh[g * H:(g + 1) * H, :].T)
            bi_g = b_ih[g * H:(g + 1) * H]
            bh_g = b_hh[g * H:(g + 1) * H]
            if g < 2:                                    # fold b_hh_{r,z} into gi bias
                bi = bi.at[0, c:c + H].set(bi_g + bh_g)
            else:                                        # b_hh_n stays recurrent-side
                bi = bi.at[0, c:c + H].set(bi_g)
                bh = bh.at[0, c:c + H].set(bh_g)
        prep["gru_layers"].append({"wih": wih, "whh": whh, "bi": bi, "bh": bh})

    O = params["fc2_w"].shape[0]
    O_pad = _round_up(O, LANE)
    prep["w1"] = jnp.zeros((H_pad, H_pad), jnp.float32).at[:H, :H].set(params["fc1_w"].T)
    prep["b1"] = jnp.zeros((1, H_pad), jnp.float32).at[0, :H].set(params["fc1_b"])
    prep["w2"] = jnp.zeros((H_pad, O_pad), jnp.float32).at[:H, :O].set(params["fc2_w"].T)
    prep["b2"] = jnp.zeros((1, O_pad), jnp.float32).at[0, :O].set(params["fc2_b"])
    prep["out_dim"] = O
    return prep


# --------------------------- pure-JAX reference -------------------------------
def gru_forward_reference(x, params, classification=False):
    seq = jnp.transpose(x, (1, 0, 2)).astype(jnp.float32)   # (T, B, D)
    for lp in params["gru_layers"]:
        w_ih, w_hh, b_ih, b_hh = lp["w_ih"], lp["w_hh"], lp["b_ih"], lp["b_hh"]
        H = w_hh.shape[1]
        h = jnp.zeros((x.shape[0], H), jnp.float32)
        outs = []
        for t in range(seq.shape[0]):
            gi = seq[t] @ w_ih.T + b_ih
            gh = h @ w_hh.T + b_hh
            r = jax.nn.sigmoid(gi[:, :H] + gh[:, :H])
            z = jax.nn.sigmoid(gi[:, H:2 * H] + gh[:, H:2 * H])
            n = jnp.tanh(gi[:, 2 * H:] + r * gh[:, 2 * H:])
            h = (1.0 - z) * n + z * h
            outs.append(h)
        seq = jnp.stack(outs, axis=0)
    h_last = seq[-1]
    z1 = jnp.maximum(h_last, 0.0) @ params["fc1_w"].T + params["fc1_b"]
    z2 = jnp.maximum(z1, 0.0) @ params["fc2_w"].T + params["fc2_b"]
    if classification:
        z2 = jax.nn.sigmoid(z2)
    return z2


# ----------------------------------- main -------------------------------------
if __name__ == "__main__":
    config = {
        "input_dimension": 16,
        "output_dimension": 4,
        "dropout": 0.0,
        "hidden_dimension": 32,
        "layers": 2,
    }
    B, T = 2, 8

    key = jax.random.PRNGKey(0)
    key, xk = jax.random.split(key)
    x = jax.random.normal(xk, (B, T, config["input_dimension"]), jnp.float32)

    raw = init_params(key,
                      config["input_dimension"],
                      config["hidden_dimension"],
                      config["output_dimension"],
                      config["layers"])
    prepared = prepare_params(raw)          # one-time; off the per-call path

    out = gru_forward(x, prepared, classification=False)
    out = jax.block_until_ready(out)
    assert out.shape == (B, config["output_dimension"])

    ref = gru_forward_reference(x, raw, classification=False)
    assert jnp.allclose(out, ref, rtol=1e-3, atol=1e-3), (out, ref)

    print("KERNEL_OK")
</pallas_src>

<mosaic_0001>
module attributes {stable_mosaic.version = 11 : i64} {
  func.func @fused_gru_mlp_kernel(%arg0: memref<16x16xf32, #tpu.memory_space<vmem>>, %arg1: memref<16x384xf32, #tpu.memory_space<vmem>>, %arg2: memref<128x384xf32, #tpu.memory_space<vmem>>, %arg3: memref<1x384xf32, #tpu.memory_space<vmem>>, %arg4: memref<1x384xf32, #tpu.memory_space<vmem>>, %arg5: memref<128x384xf32, #tpu.memory_space<vmem>>, %arg6: memref<128x384xf32, #tpu.memory_space<vmem>>, %arg7: memref<1x384xf32, #tpu.memory_space<vmem>>, %arg8: memref<1x384xf32, #tpu.memory_space<vmem>>, %arg9: memref<128x128xf32, #tpu.memory_space<vmem>>, %arg10: memref<1x128xf32, #tpu.memory_space<vmem>>, %arg11: memref<128x128xf32, #tpu.memory_space<vmem>>, %arg12: memref<1x128xf32, #tpu.memory_space<vmem>>, %arg13: memref<2x128xf32, #tpu.memory_space<vmem>>, %arg14: memref<16x128xf32, #tpu.memory_space<vmem>>) attributes {dimension_semantics = [], scalar_prefetch = 0 : i64, scratch_operands = 1 : i64, tpu.core_type = #tpu.core_type<tc>} {
    %c0 = arith.constant 0 : index
    %c0_0 = arith.constant 0 : index
    %0 = vector.load %arg0[%c0, %c0_0] : memref<16x16xf32, #tpu.memory_space<vmem>>, vector<16x16xf32>
    %c0_1 = arith.constant 0 : index
    %c0_2 = arith.constant 0 : index
    %1 = vector.load %arg1[%c0_1, %c0_2] : memref<16x384xf32, #tpu.memory_space<vmem>>, vector<16x384xf32>
    %cst = arith.constant dense<0.000000e+00> : vector<16x384xf32>
    %2 = tpu.matmul %0, %1, %cst {dimension_numbers = #tpu.dot_dimension_numbers<[1], [0], [0], [1], [0, 0, 1, 1], [], []>} : vector<16x16xf32>, vector<16x384xf32>, vector<16x384xf32> -> vector<16x384xf32>
    %c0_3 = arith.constant 0 : index
    %c0_4 = arith.constant 0 : index
    %3 = vector.load %arg3[%c0_3, %c0_4] : memref<1x384xf32, #tpu.memory_space<vmem>>, vector<1x384xf32>
    %4 = vector.broadcast %3 : vector<1x384xf32> to vector<16x384xf32>
    %5 = arith.addf %2, %4 : vector<16x384xf32>
    %c0_5 = arith.constant 0 : index
    %c0_6 = arith.constant 0 : index
    %6 = vector.load %arg2[%c0_5, %c0_6] : memref<128x384xf32, #tpu.memory_space<vmem>>, vector<128x384xf32>
    %c0_7 = arith.constant 0 : index
    %c0_8 = arith.constant 0 : index
    %7 = vector.load %arg4[%c0_7, %c0_8] : memref<1x384xf32, #tpu.memory_space<vmem>>, vector<1x384xf32>
    %cst_9 = arith.constant 0.000000e+00 : f32
    %8 = vector.broadcast %cst_9 : f32 to vector<2x128xf32>
    %cst_10 = arith.constant dense<0.000000e+00> : vector<2x384xf32>
    %9 = tpu.matmul %8, %6, %cst_10 {dimension_numbers = #tpu.dot_dimension_numbers<[1], [0], [0], [1], [0, 0, 1, 1], [], []>} : vector<2x128xf32>, vector<128x384xf32>, vector<2x384xf32> -> vector<2x384xf32>
    %10 = vector.broadcast %7 : vector<1x384xf32> to vector<2x384xf32>
    %11 = arith.addf %9, %10 : vector<2x384xf32>
    %12 = vector.extract_strided_slice %5 {offsets = [0, 0], sizes = [2, 384], strides = [1, 1]} : vector<16x384xf32> to vector<2x384xf32>
    %13 = vector.extract_strided_slice %12 {offsets = [0, 0], sizes = [2, 128], strides = [1, 1]} : vector<2x384xf32> to vector<2x128xf32>
    %14 = vector.extract_strided_slice %11 {offsets = [0, 0], sizes = [2, 128], strides = [1, 1]} : vector<2x384xf32> to vector<2x128xf32>
    %15 = arith.addf %13, %14 : vector<2x128xf32>
    %16 = arith.negf %15 : vector<2x128xf32>
    %17 = math.exp %16 : vector<2x128xf32>
    %cst_11 = arith.constant 1.000000e+00 : f32
    %18 = vector.broadcast %cst_11 : f32 to vector<2x128xf32>
    %19 = arith.addf %18, %17 : vector<2x128xf32>
    %20 = arith.divf %18, %19 : vector<2x128xf32>
    %21 = vector.extract_strided_slice %12 {offsets = [0, 128], sizes = [2, 128], strides = [1, 1]} : vector<2x384xf32> to vector<2x128xf32>
    %22 = vector.extract_strided_slice %11 {offsets = [0, 128], sizes = [2, 128], strides = [1, 1]} : vector<2x384xf32> to vector<2x128xf32>
    %23 = arith.addf %21, %22 : vector<2x128xf32>
    %24 = arith.negf %23 : vector<2x128xf32>
    %25 = math.exp %24 : vector<2x128xf32>
    %cst_12 = arith.constant 1.000000e+00 : f32
    %26 = vector.broadcast %cst_12 : f32 to vector<2x128xf32>
    %27 = arith.addf %26, %25 : vector<2x128xf32>
    %28 = arith.divf %26, %27 : vector<2x128xf32>
    %29 = vector.extract_strided_slice %12 {offsets = [0, 256], sizes = [2, 128], strides = [1, 1]} : vector<2x384xf32> to vector<2x128xf32>
    %30 = vector.extract_strided_slice %11 {offsets = [0, 256], sizes = [2, 128], strides = [1, 1]} : vector<2x384xf32> to vector<2x128xf32>
    %31 = arith.mulf %20, %30 : vector<2x128xf32>
    %32 = arith.addf %29, %31 : vector<2x128xf32>
    %33 = math.tanh %32 : vector<2x128xf32>
    %34 = arith.subf %8, %33 : vector<2x128xf32>
    %35 = arith.mulf %28, %34 : vector<2x128xf32>
    %36 = arith.addf %33, %35 : vector<2x128xf32>
    %c0_13 = arith.constant 0 : index
    %c0_14 = arith.constant 0 : index
    %37 = vector.load %arg14[%c0_13, %c0_14] : memref<16x128xf32, #tpu.memory_space<vmem>>, vector<2x128xf32>
    tpu.vector_store %arg14[%c0_13, %c0_14], %36 {strides = array<i32>} : memref<16x128xf32, #tpu.memory_space<vmem>>, vector<2x128xf32>,
    %cst_15 = arith.constant dense<0.000000e+00> : vector<2x384xf32>
    %38 = tpu.matmul %36, %6, %cst_15 {dimension_numbers = #tpu.dot_dimension_numbers<[1], [0], [0], [1], [0, 0, 1, 1], [], []>} : vector<2x128xf32>, vector<128x384xf32>, vector<2x384xf32> -> vector<2x384xf32>
    %39 = vector.broadcast %7 : vector<1x384xf32> to vector<2x384xf32>
    %40 = arith.addf %38, %39 : vector<2x384xf32>
    %41 = vector.extract_strided_slice %5 {offsets = [2, 0], sizes = [2, 384], strides = [1, 1]} : vector<16x384xf32> to vector<2x384xf32>
    %42 = vector.extract_strided_slice %41 {offsets = [0, 0], sizes = [2, 128], strides = [1, 1]} : vector<2x384xf32> to vector<2x128xf32>
    %43 = vector.extract_strided_slice %40 {offsets = [0, 0], sizes = [2, 128], strides = [1, 1]} : vector<2x384xf32> to vector<2x128xf32>
    %44 = arith.addf %42, %43 : vector<2x128xf32>
    %45 = arith.negf %44 : vector<2x128xf32>
    %46 = math.exp %45 : vector<2x128xf32>
    %cst_16 = arith.constant 1.000000e+00 : f32
    %47 = vector.broadcast %cst_16 : f32 to vector<2x128xf32>
    %48 = arith.addf %47, %46 : vector<2x128xf32>
    %49 = arith.divf %47, %48 : vector<2x128xf32>
    %50 = vector.extract_strided_slice %41 {offsets = [0, 128], sizes = [2, 128], strides = [1, 1]} : vector<2x384xf32> to vector<2x128xf32>
    %51 = vector.extract_strided_slice %40 {offsets = [0, 128], sizes = [2, 128], strides = [1, 1]} : vector<2x384xf32> to vector<2x128xf32>
    %52 = arith.addf %50, %51 : vector<2x128xf32>
    %53 = arith.negf %52 : vector<2x128xf32>
    %54 = math.exp %53 : vector<2x128xf32>
    %cst_17 = arith.constant 1.000000e+00 : f32
    %55 = vector.broadcast %cst_17 : f32 to vector<2x128xf32>
    %56 = arith.addf %55, %54 : vector<2x128xf32>
    %57 = arith.divf %55, %56 : vector<2x128xf32>
    %58 = vector.extract_strided_slice %41 {offsets = [0, 256], sizes = [2, 128], strides = [1, 1]} : vector<2x384xf32> to vector<2x128xf32>
    %59 = vector.extract_strided_slice %40 {offsets = [0, 256], sizes = [2, 128], strides = [1, 1]} : vector<2x384xf32> to vector<2x128xf32>
    %60 = arith.mulf %49, %59 : vector<2x128xf32>
    %61 = arith.addf %58, %60 : vector<2x128xf32>
    %62 = math.tanh %61 : vector<2x128xf32>
    %63 = arith.subf %36, %62 : vector<2x128xf32>
    %64 = arith.mulf %57, %63 : vector<2x128xf32>
    %65 = arith.addf %62, %64 : vector<2x128xf32>
    %c2 = arith.constant 2 : index
    %c0_18 = arith.constant 0 : index
    %66 = vector.load %arg14[%c2, %c0_18] : memref<16x128xf32, #tpu.memory_space<vmem>>, vector<2x128xf32>
    tpu.vector_store %arg14[%c2, %c0_18], %65 {strides = array<i32>} : memref<16x128xf32, #tpu.memory_space<vmem>>, vector<2x128xf32>,
    %cst_19 = arith.constant dense<0.000000e+00> : vector<2x384xf32>
    %67 = tpu.matmul %65, %6, %cst_19 {dimension_numbers = #tpu.dot_dimension_numbers<[1], [0], [0], [1], [0, 0, 1, 1], [], []>} : vector<2x128xf32>, vector<128x384xf32>, vector<2x384xf32> -> vector<2x384xf32>
    %68 = vector.broadcast %7 : vector<1x384xf32> to vector<2x384xf32>
    %69 = arith.addf %67, %68 : vector<2x384xf32>
    %70 = vector.extract_strided_slice %5 {offsets = [4, 0], sizes = [2, 384], strides = [1, 1]} : vector<16x384xf32> to vector<2x384xf32>
    %71 = vector.extract_strided_slice %70 {offsets = [0, 0], sizes = [2, 128], strides = [1, 1]} : vector<2x384xf32> to vector<2x128xf32>
    %72 = vector.extract_strided_slice %69 {offsets = [0, 0], sizes = [2, 128], strides = [1, 1]} : vector<2x384xf32> to vector<2x128xf32>
    %73 = arith.addf %71, %72 : vector<2x128xf32>
    %74 = arith.negf %73 : vector<2x128xf32>
    %75 = math.exp %74 : vector<2x128xf32>
    %cst_20 = arith.constant 1.000000e+00 : f32
    %76 = vector.broadcast %cst_20 : f32 to vector<2x128xf32>
    %77 = arith.addf %76, %75 : vector<2x128xf32>
    %78 = arith.divf %76, %77 : vector<2x128xf32>
    %79 = vector.extract_strided_slice %70 {offsets = [0, 128], sizes = [2, 128], strides = [1, 1]} : vector<2x384xf32> to vector<2x128xf32>
    %80 = vector.extract_strided_slice %69 {offsets = [0, 128], sizes = [2, 128], strides = [1, 1]} : vector<2x384xf32> to vector<2x128xf32>
    %81 = arith.addf %79, %80 : vector<2x128xf32>
    %82 = arith.negf %81 : vector<2x128xf32>
    %83 = math.exp %82 : vector<2x128xf32>
    %cst_21 = arith.constant 1.000000e+00 : f32
    %84 = vector.broadcast %cst_21 : f32 to vector<2x128xf32>
    %85 = arith.addf %84, %83 : vector<2x128xf32>
    %86 = arith.divf %84, %85 : vector<2x128xf32>
    %87 = vector.extract_strided_slice %70 {offsets = [0, 256], sizes = [2, 128], strides = [1, 1]} : vector<2x384xf32> to vector<2x128xf32>
    %88 = vector.extract_strided_slice %69 {offsets = [0, 256], sizes = [2, 128], strides = [1, 1]} : vector<2x384xf32> to vector<2x128xf32>
    %89 = arith.mulf %78, %88 : vector<2x128xf32>
    %90 = arith.addf %87, %89 : vector<2x128xf32>
    %91 = math.tanh %90 : vector<2x128xf32>
    %92 = arith.subf %65, %91 : vector<2x128xf32>
    %93 = arith.mulf %86, %92 : vector<2x128xf32>
    %94 = arith.addf %91, %93 : vector<2x128xf32>
    %c4 = arith.constant 4 : index
    %c0_22 = arith.constant 0 : index
    %95 = vector.load %arg14[%c4, %c0_22] : memref<16x128xf32, #tpu.memory_space<vmem>>, vector<2x128xf32>
    tpu.vector_store %arg14[%c4, %c0_22], %94 {strides = array<i32>} : memref<16x128xf32, #tpu.memory_space<vmem>>, vector<2x128xf32>,
    %cst_23 = arith.constant dense<0.000000e+00> : vector<2x384xf32>
    %96 = tpu.matmul %94, %6, %cst_23 {dimension_numbers = #tpu.dot_dimension_numbers<[1], [0], [0], [1], [0, 0, 1, 1], [], []>} : vector<2x128xf32>, vector<128x384xf32>, vector<2x384xf32> -> vector<2x384xf32>
    %97 = vector.broadcast %7 : vector<1x384xf32> to vector<2x384xf32>
    %98 = arith.addf %96, %97 : vector<2x384xf32>
    %99 = vector.extract_strided_slice %5 {offsets = [6, 0], sizes = [2, 384], strides = [1, 1]} : vector<16x384xf32> to vector<2x384xf32>
    %100 = vector.extract_strided_slice %99 {offsets = [0, 0], sizes = [2, 128], strides = [1, 1]} : vector<2x384xf32> to vector<2x128xf32>
    %101 = vector.extract_strided_slice %98 {offsets = [0, 0], sizes = [2, 128], strides = [1, 1]} : vector<2x384xf32> to vector<2x128xf32>
    %102 = arith.addf %100, %101 : vector<2x128xf32>
    %103 = arith.negf %102 : vector<2x128xf32>
    %104 = math.exp %103 : vector<2x128xf32>
    %cst_24 = arith.constant 1.000000e+00 : f32
    %105 = vector.broadcast %cst_24 : f32 to vector<2x128xf32>
    %106 = arith.addf %105, %104 : vector<2x128xf32>
    %107 = arith.divf %105, %106 : vector<2x128xf32>
    %108 = vector.extract_strided_slice %99 {offsets = [0, 128], sizes = [2, 128], strides = [1, 1]} : vector<2x384xf32> to vector<2x128xf32>
    %109 = vector.extract_strided_slice %98 {offsets = [0, 128], sizes = [2, 128], strides = [1, 1]} : vector<2x384xf32> to vector<2x128xf32>
    %110 = arith.addf %108, %109 : vector<2x128xf32>
    %111 = arith.negf %110 : vector<2x128xf32>
    %112 = math.exp %111 : vector<2x128xf32>
    %cst_25 = arith.constant 1.000000e+00 : f32
    %113 = vector.broadcast %cst_25 : f32 to vector<2x128xf32>
    %114 = arith.addf %113, %112 : vector<2x128xf32>
    %115 = arith.divf %113, %114 : vector<2x128xf32>
    %116 = vector.extract_strided_slice %99 {offsets = [0, 256], sizes = [2, 128], strides = [1, 1]} : vector<2x384xf32> to vector<2x128xf32>
    %117 = vector.extract_strided_slice %98 {offsets = [0, 256], sizes = [2, 128], strides = [1, 1]} : vector<2x384xf32> to vector<2x128xf32>
    %118 = arith.mulf %107, %117 : vector<2x128xf32>
    %119 = arith.addf %116, %118 : vector<2x128xf32>
    %120 = math.tanh %119 : vector<2x128xf32>
    %121 = arith.subf %94, %120 : vector<2x128xf32>
    %122 = arith.mulf %115, %121 : vector<2x128xf32>
    %123 = arith.addf %120, %122 : vector<2x128xf32>
    %c6 = arith.constant 6 : index
    %c0_26 = arith.constant 0 : index
    %124 = vector.load %arg14[%c6, %c0_26] : memref<16x128xf32, #tpu.memory_space<vmem>>, vector<2x128xf32>
    tpu.vector_store %arg14[%c6, %c0_26], %123 {strides = array<i32>} : memref<16x128xf32, #tpu.memory_space<vmem>>, vector<2x128xf32>,
    %cst_27 = arith.constant dense<0.000000e+00> : vector<2x384xf32>
    %125 = tpu.matmul %123, %6, %cst_27 {dimension_numbers = #tpu.dot_dimension_numbers<[1], [0], [0], [1], [0, 0, 1, 1], [], []>} : vector<2x128xf32>, vector<128x384xf32>, vector<2x384xf32> -> vector<2x384xf32>
    %126 = vector.broadcast %7 : vector<1x384xf32> to vector<2x384xf32>
    %127 = arith.addf %125, %126 : vector<2x384xf32>
    %128 = vector.extract_strided_slice %5 {offsets = [8, 0], sizes = [2, 384], strides = [1, 1]} : vector<16x384xf32> to vector<2x384xf32>
    %129 = vector.extract_strided_slice %128 {offsets = [0, 0], sizes = [2, 128], strides = [1, 1]} : vector<2x384xf32> to vector<2x128xf32>
    %130 = vector.extract_strided_slice %127 {offsets = [0, 0], sizes = [2, 128], strides = [1, 1]} : vector<2x384xf32> to vector<2x128xf32>
    %131 = arith.addf %129, %130 : vector<2x128xf32>
    %132 = arith.negf %131 : vector<2x128xf32>
    %133 = math.exp %132 : vector<2x128xf32>
    %cst_28 = arith.constant 1.000000e+00 : f32
    %134 = vector.broadcast %cst_28 : f32 to vector<2x128xf32>
    %135 = arith.addf %134, %133 : vector<2x128xf32>
    %136 = arith.divf %134, %135 : vector<2x128xf32>
    %137 = vector.extract_strided_slice %128 {offsets = [0, 128], sizes = [2, 128], strides = [1, 1]} : vector<2x384xf32> to vector<2x128xf32>
    %138 = vector.extract_strided_slice %127 {offsets = [0, 128], sizes = [2, 128], strides = [1, 1]} : vector<2x384xf32> to vector<2x128xf32>
    %139 = arith.addf %137, %138 : vector<2x128xf32>
    %140 = arith.negf %139 : vector<2x128xf32>
    %141 = math.exp %140 : vector<2x128xf32>
    %cst_29 = arith.constant 1.000000e+00 : f32
    %142 = vector.broadcast %cst_29 : f32 to vector<2x128xf32>
    %143 = arith.addf %142, %141 : vector<2x128xf32>
    %144 = arith.divf %142, %143 : vector<2x128xf32>
    %145 = vector.extract_strided_slice %128 {offsets = [0, 256], sizes = [2, 128], strides = [1, 1]} : vector<2x384xf32> to vector<2x128xf32>
    %146 = vector.extract_strided_slice %127 {offsets = [0, 256], sizes = [2, 128], strides = [1, 1]} : vector<2x384xf32> to vector<2x128xf32>
    %147 = arith.mulf %136, %146 : vector<2x128xf32>
    %148 = arith.addf %145, %147 : vector<2x128xf32>
    %149 = math.tanh %148 : vector<2x128xf32>
    %150 = arith.subf %123, %149 : vector<2x128xf32>
    %151 = arith.mulf %144, %150 : vector<2x128xf32>
    %152 = arith.addf %149, %151 : vector<2x128xf32>
    %c8 = arith.constant 8 : index
    %c0_30 = arith.constant 0 : index
    %153 = vector.load %arg14[%c8, %c0_30] : memref<16x128xf32, #tpu.memory_space<vmem>>, vector<2x128xf32>
    tpu.vector_store %arg14[%c8, %c0_30], %152 {strides = array<i32>} : memref<16x128xf32, #tpu.memory_space<vmem>>, vector<2x128xf32>,
    %cst_31 = arith.constant dense<0.000000e+00> : vector<2x384xf32>
    %154 = tpu.matmul %152, %6, %cst_31 {dimension_numbers = #tpu.dot_dimension_numbers<[1], [0], [0], [1], [0, 0, 1, 1], [], []>} : vector<2x128xf32>, vector<128x384xf32>, vector<2x384xf32> -> vector<2x384xf32>
    %155 = vector.broadcast %7 : vector<1x384xf32> to vector<2x384xf32>
    %156 = arith.addf %154, %155 : vector<2x384xf32>
    %157 = vector.extract_strided_slice %5 {offsets = [10, 0], sizes = [2, 384], strides = [1, 1]} : vector<16x384xf32> to vector<2x384xf32>
    %158 = vector.extract_strided_slice %157 {offsets = [0, 0], sizes = [2, 128], strides = [1, 1]} : vector<2x384xf32> to vector<2x128xf32>
    %159 = vector.extract_strided_slice %156 {offsets = [0, 0], sizes = [2, 128], strides = [1, 1]} : vector<2x384xf32> to vector<2x128xf32>
    %160 = arith.addf %158, %159 : vector<2x128xf32>
    %161 = arith.negf %160 : vector<2x128xf32>
    %162 = math.exp %161 : vector<2x128xf32>
    %cst_32 = arith.constant 1.000000e+00 : f32
    %163 = vector.broadcast %cst_32 : f32 to vector<2x128xf32>
    %164 = arith.addf %163, %162 : vector<2x128xf32>
    %165 = arith.divf %163, %164 : vector<2x128xf32>
    %166 = vector.extract_strided_slice %157 {offsets = [0, 128], sizes = [2, 128], strides = [1, 1]} : vector<2x384xf32> to vector<2x128xf32>
    %167 = vector.extract_strided_slice %156 {offsets = [0, 128], sizes = [2, 128], strides = [1, 1]} : vector<2x384xf32> to vector<2x128xf32>
    %168 = arith.addf %166, %167 : vector<2x128xf32>
    %169 = arith.negf %168 : vector<2x128xf32>
    %170 = math.exp %169 : vector<2x128xf32>
    %cst_33 = arith.constant 1.000000e+00 : f32
    %171 = vector.broadcast %cst_33 : f32 to vector<2x128xf32>
    %172 = arith.addf %171, %170 : vector<2x128xf32>
    %173 = arith.divf %171, %172 : vector<2x128xf32>
    %174 = vector.extract_strided_slice %157 {offsets = [0, 256], sizes = [2, 128], strides = [1, 1]} : vector<2x384xf32> to vector<2x128xf32>
    %175 = vector.extract_strided_slice %156 {offsets = [0, 256], sizes = [2, 128], strides = [1, 1]} : vector<2x384xf32> to vector<2x128xf32>
    %176 = arith.mulf %165, %175 : vector<2x128xf32>
    %177 = arith.addf %174, %176 : vector<2x128xf32>
    %178 = math.tanh %177 : vector<2x128xf32>
    %179 = arith.subf %152, %178 : vector<2x128xf32>
    %180 = arith.mulf %173, %179 : vector<2x128xf32>
    %181 = arith.addf %178, %180 : vector<2x128xf32>
    %c10 = arith.constant 10 : index
    %c0_34 = arith.constant 0 : index
    %182 = vector.load %arg14[%c10, %c0_34] : memref<16x128xf32, #tpu.memory_space<vmem>>, vector<2x128xf32>
    tpu.vector_store %arg14[%c10, %c0_34], %181 {strides = array<i32>} : memref<16x128xf32, #tpu.memory_space<vmem>>, vector<2x128xf32>,
    %cst_35 = arith.constant dense<0.000000e+00> : vector<2x384xf32>
    %183 = tpu.matmul %181, %6, %cst_35 {dimension_numbers = #tpu.dot_dimension_numbers<[1], [0], [0], [1], [0, 0, 1, 1], [], []>} : vector<2x128xf32>, vector<128x384xf32>, vector<2x384xf32> -> vector<2x384xf32>
    %184 = vector.broadcast %7 : vector<1x384xf32> to vector<2x384xf32>
    %185 = arith.addf %183, %184 : vector<2x384xf32>
    %186 = vector.extract_strided_slice %5 {offsets = [12, 0], sizes = [2, 384], strides = [1, 1]} : vector<16x384xf32> to vector<2x384xf32>
    %187 = vector.extract_strided_slice %186 {offsets = [0, 0], sizes = [2, 128], strides = [1, 1]} : vector<2x384xf32> to vector<2x128xf32>
    %188 = vector.extract_strided_slice %185 {offsets = [0, 0], sizes = [2, 128], strides = [1, 1]} : vector<2x384xf32> to vector<2x128xf32>
    %189 = arith.addf %187, %188 : vector<2x128xf32>
    %190 = arith.negf %189 : vector<2x128xf32>
    %191 = math.exp %190 : vector<2x128xf32>
    %cst_36 = arith.constant 1.000000e+00 : f32
    %192 = vector.broadcast %cst_36 : f32 to vector<2x128xf32>
    %193 = arith.addf %192, %191 : vector<2x128xf32>
    %194 = arith.divf %192, %193 : vector<2x128xf32>
    %195 = vector.extract_strided_slice %186 {offsets = [0, 128], sizes = [2, 128], strides = [1, 1]} : vector<2x384xf32> to vector<2x128xf32>
    %196 = vector.extract_strided_slice %185 {offsets = [0, 128], sizes = [2, 128], strides = [1, 1]} : vector<2x384xf32> to vector<2x128xf32>
    %197 = arith.addf %195, %196 : vector<2x128xf32>
    %198 = arith.negf %197 : vector<2x128xf32>
    %199 = math.exp %198 : vector<2x128xf32>
    %cst_37 = arith.constant 1.000000e+00 : f32
    %200 = vector.broadcast %cst_37 : f32 to vector<2x128xf32>
    %201 = arith.addf %200, %199 : vector<2x128xf32>
    %202 = arith.divf %200, %201 : vector<2x128xf32>
    %203 = vector.extract_strided_slice %186 {offsets = [0, 256], sizes = [2, 128], strides = [1, 1]} : vector<2x384xf32> to vector<2x128xf32>
    %204 = vector.extract_strided_slice %185 {offsets = [0, 256], sizes = [2, 128], strides = [1, 1]} : vector<2x384xf32> to vector<2x128xf32>
    %205 = arith.mulf %194, %204 : vector<2x128xf32>
    %206 = arith.addf %203, %205 : vector<2x128xf32>
    %207 = math.tanh %206 : vector<2x128xf32>
    %208 = arith.subf %181, %207 : vector<2x128xf32>
    %209 = arith.mulf %202, %208 : vector<2x128xf32>
    %210 = arith.addf %207, %209 : vector<2x128xf32>
    %c12 = arith.constant 12 : index
    %c0_38 = arith.constant 0 : index
    %211 = vector.load %arg14[%c12, %c0_38] : memref<16x128xf32, #tpu.memory_space<vmem>>, vector<2x128xf32>
    tpu.vector_store %arg14[%c12, %c0_38], %210 {strides = array<i32>} : memref<16x128xf32, #tpu.memory_space<vmem>>, vector<2x128xf32>,
    %cst_39 = arith.constant dense<0.000000e+00> : vector<2x384xf32>
    %212 = tpu.matmul %210, %6, %cst_39 {dimension_numbers = #tpu.dot_dimension_numbers<[1], [0], [0], [1], [0, 0, 1, 1], [], []>} : vector<2x128xf32>, vector<128x384xf32>, vector<2x384xf32> -> vector<2x384xf32>
    %213 = vector.broadcast %7 : vector<1x384xf32> to vector<2x384xf32>
    %214 = arith.addf %212, %213 : vector<2x384xf32>
    %215 = vector.extract_strided_slice %5 {offsets = [14, 0], sizes = [2, 384], strides = [1, 1]} : vector<16x384xf32> to vector<2x384xf32>
    %216 = vector.extract_strided_slice %215 {offsets = [0, 0], sizes = [2, 128], strides = [1, 1]} : vector<2x384xf32> to vector<2x128xf32>
    %217 = vector.extract_strided_slice %214 {offsets = [0, 0], sizes = [2, 128], strides = [1, 1]} : vector<2x384xf32> to vector<2x128xf32>
    %218 = arith.addf %216, %217 : vector<2x128xf32>
    %219 = arith.negf %218 : vector<2x128xf32>
    %220 = math.exp %219 : vector<2x128xf32>
    %cst_40 = arith.constant 1.000000e+00 : f32
    %221 = vector.broadcast %cst_40 : f32 to vector<2x128xf32>
    %222 = arith.addf %221, %220 : vector<2x128xf32>
    %223 = arith.divf %221, %222 : vector<2x128xf32>
    %224 = vector.extract_strided_slice %215 {offsets = [0, 128], sizes = [2, 128], strides = [1, 1]} : vector<2x384xf32> to vector<2x128xf32>
    %225 = vector.extract_strided_slice %214 {offsets = [0, 128], sizes = [2, 128], strides = [1, 1]} : vector<2x384xf32> to vector<2x128xf32>
    %226 = arith.addf %224, %225 : vector<2x128xf32>
    %227 = arith.negf %226 : vector<2x128xf32>
    %228 = math.exp %227 : vector<2x128xf32>
    %cst_41 = arith.constant 1.000000e+00 : f32
    %229 = vector.broadcast %cst_41 : f32 to vector<2x128xf32>
    %230 = arith.addf %229, %228 : vector<2x128xf32>
    %231 = arith.divf %229, %230 : vector<2x128xf32>
    %232 = vector.extract_strided_slice %215 {offsets = [0, 256], sizes = [2, 128], strides = [1, 1]} : vector<2x384xf32> to vector<2x128xf32>
    %233 = vector.extract_strided_slice %214 {offsets = [0, 256], sizes = [2, 128], strides = [1, 1]} : vector<2x384xf32> to vector<2x128xf32>
    %234 = arith.mulf %223, %233 : vector<2x128xf32>
    %235 = arith.addf %232, %234 : vector<2x128xf32>
    %236 = math.tanh %235 : vector<2x128xf32>
    %237 = arith.subf %210, %236 : vector<2x128xf32>
    %238 = arith.mulf %231, %237 : vector<2x128xf32>
    %239 = arith.addf %236, %238 : vector<2x128xf32>
    %c14 = arith.constant 14 : index
    %c0_42 = arith.constant 0 : index
    %240 = vector.load %arg14[%c14, %c0_42] : memref<16x128xf32, #tpu.memory_space<vmem>>, vector<2x128xf32>
    tpu.vector_store %arg14[%c14, %c0_42], %239 {strides = array<i32>} : memref<16x128xf32, #tpu.memory_space<vmem>>, vector<2x128xf32>,
    %c0_43 = arith.constant 0 : index
    %c0_44 = arith.constant 0 : index
    %241 = vector.load %arg14[%c0_43, %c0_44] : memref<16x128xf32, #tpu.memory_space<vmem>>, vector<16x128xf32>
    %c0_45 = arith.constant 0 : index
    %c0_46 = arith.constant 0 : index
    %242 = vector.load %arg5[%c0_45, %c0_46] : memref<128x384xf32, #tpu.memory_space<vmem>>, vector<128x384xf32>
    %cst_47 = arith.constant dense<0.000000e+00> : vector<16x384xf32>
    %243 = tpu.matmul %241, %242, %cst_47 {dimension_numbers = #tpu.dot_dimension_numbers<[1], [0], [0], [1], [0, 0, 1, 1], [], []>} : vector<16x128xf32>, vector<128x384xf32>, vector<16x384xf32> -> vector<16x384xf32>
    %c0_48 = arith.constant 0 : index
    %c0_49 = arith.constant 0 : index
    %244 = vector.load %arg7[%c0_48, %c0_49] : memref<1x384xf32, #tpu.memory_space<vmem>>, vector<1x384xf32>
    %245 = vector.broadcast %244 : vector<1x384xf32> to vector<16x384xf32>
    %246 = arith.addf %243, %245 : vector<16x384xf32>
    %c0_50 = arith.constant 0 : index
    %c0_51 = arith.constant 0 : index
    %247 = vector.load %arg6[%c0_50, %c0_51] : memref<128x384xf32, #tpu.memory_space<vmem>>, vector<128x384xf32>
    %c0_52 = arith.constant 0 : index
    %c0_53 = arith.constant 0 : index
    %248 = vector.load %arg8[%c0_52, %c0_53] : memref<1x384xf32, #tpu.memory_space<vmem>>, vector<1x384xf32>
    %cst_54 = arith.constant 0.000000e+00 : f32
    %249 = vector.broadcast %cst_54 : f32 to vector<2x128xf32>
    %cst_55 = arith.constant dense<0.000000e+00> : vector<2x384xf32>
    %250 = tpu.matmul %249, %247, %cst_55 {dimension_numbers = #tpu.dot_dimension_numbers<[1], [0], [0], [1], [0, 0, 1, 1], [], []>} : vector<2x128xf32>, vector<128x384xf32>, vector<2x384xf32> -> vector<2x384xf32>
    %251 = vector.broadcast %248 : vector<1x384xf32> to vector<2x384xf32>
    %252 = arith.addf %250, %251 : vector<2x384xf32>
    %253 = vector.extract_strided_slice %246 {offsets = [0, 0], sizes = [2, 384], strides = [1, 1]} : vector<16x384xf32> to vector<2x384xf32>
    %254 = vector.extract_strided_slice %253 {offsets = [0, 0], sizes = [2, 128], strides = [1, 1]} : vector<2x384xf32> to vector<2x128xf32>
    %255 = vector.extract_strided_slice %252 {offsets = [0, 0], sizes = [2, 128], strides = [1, 1]} : vector<2x384xf32> to vector<2x128xf32>
    %256 = arith.addf %254, %255 : vector<2x128xf32>
    %257 = arith.negf %256 : vector<2x128xf32>
    %258 = math.exp %257 : vector<2x128xf32>
    %cst_56 = arith.constant 1.000000e+00 : f32
    %259 = vector.broadcast %cst_56 : f32 to vector<2x128xf32>
    %260 = arith.addf %259, %258 : vector<2x128xf32>
    %261 = arith.divf %259, %260 : vector<2x128xf32>
    %262 = vector.extract_strided_slice %253 {offsets = [0, 128], sizes = [2, 128], strides = [1, 1]} : vector<2x384xf32> to vector<2x128xf32>
    %263 = vector.extract_strided_slice %252 {offsets = [0, 128], sizes = [2, 128], strides = [1, 1]} : vector<2x384xf32> to vector<2x128xf32>
    %264 = arith.addf %262, %263 : vector<2x128xf32>
    %265 = arith.negf %264 : vector<2x128xf32>
    %266 = math.exp %265 : vector<2x128xf32>
    %cst_57 = arith.constant 1.000000e+00 : f32
    %267 = vector.broadcast %cst_57 : f32 to vector<2x128xf32>
    %268 = arith.addf %267, %266 : vector<2x128xf32>
    %269 = arith.divf %267, %268 : vector<2x128xf32>
    %270 = vector.extract_strided_slice %253 {offsets = [0, 256], sizes = [2, 128], strides = [1, 1]} : vector<2x384xf32> to vector<2x128xf32>
    %271 = vector.extract_strided_slice %252 {offsets = [0, 256], sizes = [2, 128], strides = [1, 1]} : vector<2x384xf32> to vector<2x128xf32>
    %272 = arith.mulf %261, %271 : vector<2x128xf32>
    %273 = arith.addf %270, %272 : vector<2x128xf32>
    %274 = math.tanh %273 : vector<2x128xf32>
    %275 = arith.subf %249, %274 : vector<2x128xf32>
    %276 = arith.mulf %269, %275 : vector<2x128xf32>
    %277 = arith.addf %274, %276 : vector<2x128xf32>
    %cst_58 = arith.constant dense<0.000000e+00> : vector<2x384xf32>
    %278 = tpu.matmul %277, %247, %cst_58 {dimension_numbers = #tpu.dot_dimension_numbers<[1], [0], [0], [1], [0, 0, 1, 1], [], []>} : vector<2x128xf32>, vector<128x384xf32>, vector<2x384xf32> -> vector<2x384xf32>
    %279 = vector.broadcast %248 : vector<1x384xf32> to vector<2x384xf32>
    %280 = arith.addf %278, %279 : vector<2x384xf32>
    %281 = vector.extract_strided_slice %246 {offsets = [2, 0], sizes = [2, 384], strides = [1, 1]} : vector<16x384xf32> to vector<2x384xf32>
    %282 = vector.extract_strided_slice %281 {offsets = [0, 0], sizes = [2, 128], strides = [1, 1]} : vector<2x384xf32> to vector<2x128xf32>
    %283 = vector.extract_strided_slice %280 {offsets = [0, 0], sizes = [2, 128], strides = [1, 1]} : vector<2x384xf32> to vector<2x128xf32>
    %284 = arith.addf %282, %283 : vector<2x128xf32>
    %285 = arith.negf %284 : vector<2x128xf32>
    %286 = math.exp %285 : vector<2x128xf32>
    %cst_59 = arith.constant 1.000000e+00 : f32
    %287 = vector.broadcast %cst_59 : f32 to vector<2x128xf32>
    %288 = arith.addf %287, %286 : vector<2x128xf32>
    %289 = arith.divf %287, %288 : vector<2x128xf32>
    %290 = vector.extract_strided_slice %281 {offsets = [0, 128], sizes = [2, 128], strides = [1, 1]} : vector<2x384xf32> to vector<2x128xf32>
    %291 = vector.extract_strided_slice %280 {offsets = [0, 128], sizes = [2, 128], strides = [1, 1]} : vector<2x384xf32> to vector<2x128xf32>
    %292 = arith.addf %290, %291 : vector<2x128xf32>
    %293 = arith.negf %292 : vector<2x128xf32>
    %294 = math.exp %293 : vector<2x128xf32>
    %cst_60 = arith.constant 1.000000e+00 : f32
    %295 = vector.broadcast %cst_60 : f32 to vector<2x128xf32>
    %296 = arith.addf %295, %294 : vector<2x128xf32>
    %297 = arith.divf %295, %296 : vector<2x128xf32>
    %298 = vector.extract_strided_slice %281 {offsets = [0, 256], sizes = [2, 128], strides = [1, 1]} : vector<2x384xf32> to vector<2x128xf32>
    %299 = vector.extract_strided_slice %280 {offsets = [0, 256], sizes = [2, 128], strides = [1, 1]} : vector<2x384xf32> to vector<2x128xf32>
    %300 = arith.mulf %289, %299 : vector<2x128xf32>
    %301 = arith.addf %298, %300 : vector<2x128xf32>
    %302 = math.tanh %301 : vector<2x128xf32>
    %303 = arith.subf %277, %302 : vector<2x128xf32>
    %304 = arith.mulf %297, %303 : vector<2x128xf32>
    %305 = arith.addf %302, %304 : vector<2x128xf32>
    %cst_61 = arith.constant dense<0.000000e+00> : vector<2x384xf32>
    %306 = tpu.matmul %305, %247, %cst_61 {dimension_numbers = #tpu.dot_dimension_numbers<[1], [0], [0], [1], [0, 0, 1, 1], [], []>} : vector<2x128xf32>, vector<128x384xf32>, vector<2x384xf32> -> vector<2x384xf32>
    %307 = vector.broadcast %248 : vector<1x384xf32> to vector<2x384xf32>
    %308 = arith.addf %306, %307 : vector<2x384xf32>
    %309 = vector.extract_strided_slice %246 {offsets = [4, 0], sizes = [2, 384], strides = [1, 1]} : vector<16x384xf32> to vector<2x384xf32>
    %310 = vector.extract_strided_slice %309 {offsets = [0, 0], sizes = [2, 128], strides = [1, 1]} : vector<2x384xf32> to vector<2x128xf32>
    %311 = vector.extract_strided_slice %308 {offsets = [0, 0], sizes = [2, 128], strides = [1, 1]} : vector<2x384xf32> to vector<2x128xf32>
    %312 = arith.addf %310, %311 : vector<2x128xf32>
    %313 = arith.negf %312 : vector<2x128xf32>
    %314 = math.exp %313 : vector<2x128xf32>
    %cst_62 = arith.constant 1.000000e+00 : f32
    %315 = vector.broadcast %cst_62 : f32 to vector<2x128xf32>
    %316 = arith.addf %315, %314 : vector<2x128xf32>
    %317 = arith.divf %315, %316 : vector<2x128xf32>
    %318 = vector.extract_strided_slice %309 {offsets = [0, 128], sizes = [2, 128], strides = [1, 1]} : vector<2x384xf32> to vector<2x128xf32>
    %319 = vector.extract_strided_slice %308 {offsets = [0, 128], sizes = [2, 128], strides = [1, 1]} : vector<2x384xf32> to vector<2x128xf32>
    %320 = arith.addf %318, %319 : vector<2x128xf32>
    %321 = arith.negf %320 : vector<2x128xf32>
    %322 = math.exp %321 : vector<2x128xf32>
    %cst_63 = arith.constant 1.000000e+00 : f32
    %323 = vector.broadcast %cst_63 : f32 to vector<2x128xf32>
    %324 = arith.addf %323, %322 : vector<2x128xf32>
    %325 = arith.divf %323, %324 : vector<2x128xf32>
    %326 = vector.extract_strided_slice %309 {offsets = [0, 256], sizes = [2, 128], strides = [1, 1]} : vector<2x384xf32> to vector<2x128xf32>
    %327 = vector.extract_strided_slice %308 {offsets = [0, 256], sizes = [2, 128], strides = [1, 1]} : vector<2x384xf32> to vector<2x128xf32>
    %328 = arith.mulf %317, %327 : vector<2x128xf32>
    %329 = arith.addf %326, %328 : vector<2x128xf32>
    %330 = math.tanh %329 : vector<2x128xf32>
    %331 = arith.subf %305, %330 : vector<2x128xf32>
    %332 = arith.mulf %325, %331 : vector<2x128xf32>
    %333 = arith.addf %330, %332 : vector<2x128xf32>
    %cst_64 = arith.constant dense<0.000000e+00> : vector<2x384xf32>
    %334 = tpu.matmul %333, %247, %cst_64 {dimension_numbers = #tpu.dot_dimension_numbers<[1], [0], [0], [1], [0, 0, 1, 1], [], []>} : vector<2x128xf32>, vector<128x384xf32>, vector<2x384xf32> -> vector<2x384xf32>
    %335 = vector.broadcast %248 : vector<1x384xf32> to vector<2x384xf32>
    %336 = arith.addf %334, %335 : vector<2x384xf32>
    %337 = vector.extract_strided_slice %246 {offsets = [6, 0], sizes = [2, 384], strides = [1, 1]} : vector<16x384xf32> to vector<2x384xf32>
    %338 = vector.extract_strided_slice %337 {offsets = [0, 0], sizes = [2, 128], strides = [1, 1]} : vector<2x384xf32> to vector<2x128xf32>
    %339 = vector.extract_strided_slice %336 {offsets = [0, 0], sizes = [2, 128], strides = [1, 1]} : vector<2x384xf32> to vector<2x128xf32>
    %340 = arith.addf %338, %339 : vector<2x128xf32>
    %341 = arith.negf %340 : vector<2x128xf32>
    %342 = math.exp %341 : vector<2x128xf32>
    %cst_65 = arith.constant 1.000000e+00 : f32
    %343 = vector.broadcast %cst_65 : f32 to vector<2x128xf32>
    %344 = arith.addf %343, %342 : vector<2x128xf32>
    %345 = arith.divf %343, %344 : vector<2x128xf32>
    %346 = vector.extract_strided_slice %337 {offsets = [0, 128], sizes = [2, 128], strides = [1, 1]} : vector<2x384xf32> to vector<2x128xf32>
    %347 = vector.extract_strided_slice %336 {offsets = [0, 128], sizes = [2, 128], strides = [1, 1]} : vector<2x384xf32> to vector<2x128xf32>
    %348 = arith.addf %346, %347 : vector<2x128xf32>
    %349 = arith.negf %348 : vector<2x128xf32>
    %350 = math.exp %349 : vector<2x128xf32>
    %cst_66 = arith.constant 1.000000e+00 : f32
    %351 = vector.broadcast %cst_66 : f32 to vector<2x128xf32>
    %352 = arith.addf %351, %350 : vector<2x128xf32>
    %353 = arith.divf %351, %352 : vector<2x128xf32>
    %354 = vector.extract_strided_slice %337 {offsets = [0, 256], sizes = [2, 128], strides = [1, 1]} : vector<2x384xf32> to vector<2x128xf32>
    %355 = vector.extract_strided_slice %336 {offsets = [0, 256], sizes = [2, 128], strides = [1, 1]} : vector<2x384xf32> to vector<2x128xf32>
    %356 = arith.mulf %345, %355 : vector<2x128xf32>
    %357 = arith.addf %354, %356 : vector<2x128xf32>
    %358 = math.tanh %357 : vector<2x128xf32>
    %359 = arith.subf %333, %358 : vector<2x128xf32>
    %360 = arith.mulf %353, %359 : vector<2x128xf32>
    %361 = arith.addf %358, %360 : vector<2x128xf32>
    %cst_67 = arith.constant dense<0.000000e+00> : vector<2x384xf32>
    %362 = tpu.matmul %361, %247, %cst_67 {dimension_numbers = #tpu.dot_dimension_numbers<[1], [0], [0], [1], [0, 0, 1, 1], [], []>} : vector<2x128xf32>, vector<128x384xf32>, vector<2x384xf32> -> vector<2x384xf32>
    %363 = vector.broadcast %248 : vector<1x384xf32> to vector<2x384xf32>
    %364 = arith.addf %362, %363 : vector<2x384xf32>
    %365 = vector.extract_strided_slice %246 {offsets = [8, 0], sizes = [2, 384], strides = [1, 1]} : vector<16x384xf32> to vector<2x384xf32>
    %366 = vector.extract_strided_slice %365 {offsets = [0, 0], sizes = [2, 128], strides = [1, 1]} : vector<2x384xf32> to vector<2x128xf32>
    %367 = vector.extract_strided_slice %364 {offsets = [0, 0], sizes = [2, 128], strides = [1, 1]} : vector<2x384xf32> to vector<2x128xf32>
    %368 = arith.addf %366, %367 : vector<2x128xf32>
    %369 = arith.negf %368 : vector<2x128xf32>
    %370 = math.exp %369 : vector<2x128xf32>
    %cst_68 = arith.constant 1.000000e+00 : f32
    %371 = vector.broadcast %cst_68 : f32 to vector<2x128xf32>
    %372 = arith.addf %371, %370 : vector<2x128xf32>
    %373 = arith.divf %371, %372 : vector<2x128xf32>
    %374 = vector.extract_strided_slice %365 {offsets = [0, 128], sizes = [2, 128], strides = [1, 1]} : vector<2x384xf32> to vector<2x128xf32>
    %375 = vector.extract_strided_slice %364 {offsets = [0, 128], sizes = [2, 128], strides = [1, 1]} : vector<2x384xf32> to vector<2x128xf32>
    %376 = arith.addf %374, %375 : vector<2x128xf32>
    %377 = arith.negf %376 : vector<2x128xf32>
    %378 = math.exp %377 : vector<2x128xf32>
    %cst_69 = arith.constant 1.000000e+00 : f32
    %379 = vector.broadcast %cst_69 : f32 to vector<2x128xf32>
    %380 = arith.addf %379, %378 : vector<2x128xf32>
    %381 = arith.divf %379, %380 : vector<2x128xf32>
    %382 = vector.extract_strided_slice %365 {offsets = [0, 256], sizes = [2, 128], strides = [1, 1]} : vector<2x384xf32> to vector<2x128xf32>
    %383 = vector.extract_strided_slice %364 {offsets = [0, 256], sizes = [2, 128], strides = [1, 1]} : vector<2x384xf32> to vector<2x128xf32>
    %384 = arith.mulf %373, %383 : vector<2x128xf32>
    %385 = arith.addf %382, %384 : vector<2x128xf32>
    %386 = math.tanh %385 : vector<2x128xf32>
    %387 = arith.subf %361, %386 : vector<2x128xf32>
    %388 = arith.mulf %381, %387 : vector<2x128xf32>
    %389 = arith.addf %386, %388 : vector<2x128xf32>
    %cst_70 = arith.constant dense<0.000000e+00> : vector<2x384xf32>
    %390 = tpu.matmul %389, %247, %cst_70 {dimension_numbers = #tpu.dot_dimension_numbers<[1], [0], [0], [1], [0, 0, 1, 1], [], []>} : vector<2x128xf32>, vector<128x384xf32>, vector<2x384xf32> -> vector<2x384xf32>
    %391 = vector.broadcast %248 : vector<1x384xf32> to vector<2x384xf32>
    %392 = arith.addf %390, %391 : vector<2x384xf32>
    %393 = vector.extract_strided_slice %246 {offsets = [10, 0], sizes = [2, 384], strides = [1, 1]} : vector<16x384xf32> to vector<2x384xf32>
    %394 = vector.extract_strided_slice %393 {offsets = [0, 0], sizes = [2, 128], strides = [1, 1]} : vector<2x384xf32> to vector<2x128xf32>
    %395 = vector.extract_strided_slice %392 {offsets = [0, 0], sizes = [2, 128], strides = [1, 1]} : vector<2x384xf32> to vector<2x128xf32>
    %396 = arith.addf %394, %395 : vector<2x128xf32>
    %397 = arith.negf %396 : vector<2x128xf32>
    %398 = math.exp %397 : vector<2x128xf32>
    %cst_71 = arith.constant 1.000000e+00 : f32
    %399 = vector.broadcast %cst_71 : f32 to vector<2x128xf32>
    %400 = arith.addf %399, %398 : vector<2x128xf32>
    %401 = arith.divf %399, %400 : vector<2x128xf32>
    %402 = vector.extract_strided_slice %393 {offsets = [0, 128], sizes = [2, 128], strides = [1, 1]} : vector<2x384xf32> to vector<2x128xf32>
    %403 = vector.extract_strided_slice %392 {offsets = [0, 128], sizes = [2, 128], strides = [1, 1]} : vector<2x384xf32> to vector<2x128xf32>
    %404 = arith.addf %402, %403 : vector<2x128xf32>
    %405 = arith.negf %404 : vector<2x128xf32>
    %406 = math.exp %405 : vector<2x128xf32>
    %cst_72 = arith.constant 1.000000e+00 : f32
    %407 = vector.broadcast %cst_72 : f32 to vector<2x128xf32>
    %408 = arith.addf %407, %406 : vector<2x128xf32>
    %409 = arith.divf %407, %408 : vector<2x128xf32>
    %410 = vector.extract_strided_slice %393 {offsets = [0, 256], sizes = [2, 128], strides = [1, 1]} : vector<2x384xf32> to vector<2x128xf32>
    %411 = vector.extract_strided_slice %392 {offsets = [0, 256], sizes = [2, 128], strides = [1, 1]} : vector<2x384xf32> to vector<2x128xf32>
    %412 = arith.mulf %401, %411 : vector<2x128xf32>
    %413 = arith.addf %410, %412 : vector<2x128xf32>
    %414 = math.tanh %413 : vector<2x128xf32>
    %415 = arith.subf %389, %414 : vector<2x128xf32>
    %416 = arith.mulf %409, %415 : vector<2x128xf32>
    %417 = arith.addf %414, %416 : vector<2x128xf32>
    %cst_73 = arith.constant dense<0.000000e+00> : vector<2x384xf32>
    %418 = tpu.matmul %417, %247, %cst_73 {dimension_numbers = #tpu.dot_dimension_numbers<[1], [0], [0], [1], [0, 0, 1, 1], [], []>} : vector<2x128xf32>, vector<128x384xf32>, vector<2x384xf32> -> vector<2x384xf32>
    %419 = vector.broadcast %248 : vector<1x384xf32> to vector<2x384xf32>
    %420 = arith.addf %418, %419 : vector<2x384xf32>
    %421 = vector.extract_strided_slice %246 {offsets = [12, 0], sizes = [2, 384], strides = [1, 1]} : vector<16x384xf32> to vector<2x384xf32>
    %422 = vector.extract_strided_slice %421 {offsets = [0, 0], sizes = [2, 128], strides = [1, 1]} : vector<2x384xf32> to vector<2x128xf32>
    %423 = vector.extract_strided_slice %420 {offsets = [0, 0], sizes = [2, 128], strides = [1, 1]} : vector<2x384xf32> to vector<2x128xf32>
    %424 = arith.addf %422, %423 : vector<2x128xf32>
    %425 = arith.negf %424 : vector<2x128xf32>
    %426 = math.exp %425 : vector<2x128xf32>
    %cst_74 = arith.constant 1.000000e+00 : f32
    %427 = vector.broadcast %cst_74 : f32 to vector<2x128xf32>
    %428 = arith.addf %427, %426 : vector<2x128xf32>
    %429 = arith.divf %427, %428 : vector<2x128xf32>
    %430 = vector.extract_strided_slice %421 {offsets = [0, 128], sizes = [2, 128], strides = [1, 1]} : vector<2x384xf32> to vector<2x128xf32>
    %431 = vector.extract_strided_slice %420 {offsets = [0, 128], sizes = [2, 128], strides = [1, 1]} : vector<2x384xf32> to vector<2x128xf32>
    %432 = arith.addf %430, %431 : vector<2x128xf32>
    %433 = arith.negf %432 : vector<2x128xf32>
    %434 = math.exp %433 : vector<2x128xf32>
    %cst_75 = arith.constant 1.000000e+00 : f32
    %435 = vector.broadcast %cst_75 : f32 to vector<2x128xf32>
    %436 = arith.addf %435, %434 : vector<2x128xf32>
    %437 = arith.divf %435, %436 : vector<2x128xf32>
    %438 = vector.extract_strided_slice %421 {offsets = [0, 256], sizes = [2, 128], strides = [1, 1]} : vector<2x384xf32> to vector<2x128xf32>
    %439 = vector.extract_strided_slice %420 {offsets = [0, 256], sizes = [2, 128], strides = [1, 1]} : vector<2x384xf32> to vector<2x128xf32>
    %440 = arith.mulf %429, %439 : vector<2x128xf32>
    %441 = arith.addf %438, %440 : vector<2x128xf32>
    %442 = math.tanh %441 : vector<2x128xf32>
    %443 = arith.subf %417, %442 : vector<2x128xf32>
    %444 = arith.mulf %437, %443 : vector<2x128xf32>
    %445 = arith.addf %442, %444 : vector<2x128xf32>
    %cst_76 = arith.constant dense<0.000000e+00> : vector<2x384xf32>
    %446 = tpu.matmul %445, %247, %cst_76 {dimension_numbers = #tpu.dot_dimension_numbers<[1], [0], [0], [1], [0, 0, 1, 1], [], []>} : vector<2x128xf32>, vector<128x384xf32>, vector<2x384xf32> -> vector<2x384xf32>
    %447 = vector.broadcast %248 : vector<1x384xf32> to vector<2x384xf32>
    %448 = arith.addf %446, %447 : vector<2x384xf32>
    %449 = vector.extract_strided_slice %246 {offsets = [14, 0], sizes = [2, 384], strides = [1, 1]} : vector<16x384xf32> to vector<2x384xf32>
    %450 = vector.extract_strided_slice %449 {offsets = [0, 0], sizes = [2, 128], strides = [1, 1]} : vector<2x384xf32> to vector<2x128xf32>
    %451 = vector.extract_strided_slice %448 {offsets = [0, 0], sizes = [2, 128], strides = [1, 1]} : vector<2x384xf32> to vector<2x128xf32>
    %452 = arith.addf %450, %451 : vector<2x128xf32>
    %453 = arith.negf %452 : vector<2x128xf32>
    %454 = math.exp %453 : vector<2x128xf32>
    %cst_77 = arith.constant 1.000000e+00 : f32
    %455 = vector.broadcast %cst_77 : f32 to vector<2x128xf32>
    %456 = arith.addf %455, %454 : vector<2x128xf32>
    %457 = arith.divf %455, %456 : vector<2x128xf32>
    %458 = vector.extract_strided_slice %449 {offsets = [0, 128], sizes = [2, 128], strides = [1, 1]} : vector<2x384xf32> to vector<2x128xf32>
    %459 = vector.extract_strided_slice %448 {offsets = [0, 128], sizes = [2, 128], strides = [1, 1]} : vector<2x384xf32> to vector<2x128xf32>
    %460 = arith.addf %458, %459 : vector<2x128xf32>
    %461 = arith.negf %460 : vector<2x128xf32>
    %462 = math.exp %461 : vector<2x128xf32>
    %cst_78 = arith.constant 1.000000e+00 : f32
    %463 = vector.broadcast %cst_78 : f32 to vector<2x128xf32>
    %464 = arith.addf %463, %462 : vector<2x128xf32>
    %465 = arith.divf %463, %464 : vector<2x128xf32>
    %466 = vector.extract_strided_slice %449 {offsets = [0, 256], sizes = [2, 128], strides = [1, 1]} : vector<2x384xf32> to vector<2x128xf32>
    %467 = vector.extract_strided_slice %448 {offsets = [0, 256], sizes = [2, 128], strides = [1, 1]} : vector<2x384xf32> to vector<2x128xf32>
    %468 = arith.mulf %457, %467 : vector<2x128xf32>
    %469 = arith.addf %466, %468 : vector<2x128xf32>
    %470 = math.tanh %469 : vector<2x128xf32>
    %471 = arith.subf %445, %470 : vector<2x128xf32>
    %472 = arith.mulf %465, %471 : vector<2x128xf32>
    %473 = arith.addf %470, %472 : vector<2x128xf32>
    %cst_79 = arith.constant 0.000000e+00 : f32
    %474 = vector.broadcast %cst_79 : f32 to vector<2x128xf32>
    %475 = arith.maximumf %473, %474 : vector<2x128xf32>
    %c0_80 = arith.constant 0 : index
    %c0_81 = arith.constant 0 : index
    %476 = vector.load %arg9[%c0_80, %c0_81] : memref<128x128xf32, #tpu.memory_space<vmem>>, vector<128x128xf32>
    %cst_82 = arith.constant dense<0.000000e+00> : vector<2x128xf32>
    %477 = tpu.matmul %475, %476, %cst_82 {dimension_numbers = #tpu.dot_dimension_numbers<[1], [0], [0], [1], [0, 0, 1, 1], [], []>} : vector<2x128xf32>, vector<128x128xf32>, vector<2x128xf32> -> vector<2x128xf32>
    %c0_83 = arith.constant 0 : index
    %c0_84 = arith.constant 0 : index
    %478 = vector.load %arg10[%c0_83, %c0_84] : memref<1x128xf32, #tpu.memory_space<vmem>>, vector<1x128xf32>
    %479 = vector.broadcast %478 : vector<1x128xf32> to vector<2x128xf32>
    %480 = arith.addf %477, %479 : vector<2x128xf32>
    %cst_85 = arith.constant 0.000000e+00 : f32
    %481 = vector.broadcast %cst_85 : f32 to vector<2x128xf32>
    %482 = arith.maximumf %480, %481 : vector<2x128xf32>
    %c0_86 = arith.constant 0 : index
    %c0_87 = arith.constant 0 : index
    %483 = vector.load %arg11[%c0_86, %c0_87] : memref<128x128xf32, #tpu.memory_space<vmem>>, vector<128x128xf32>
    %cst_88 = arith.constant dense<0.000000e+00> : vector<2x128xf32>
    %484 = tpu.matmul %482, %483, %cst_88 {dimension_numbers = #tpu.dot_dimension_numbers<[1], [0], [0], [1], [0, 0, 1, 1], [], []>} : vector<2x128xf32>, vector<128x128xf32>, vector<2x128xf32> -> vector<2x128xf32>
    %c0_89 = arith.constant 0 : index
    %c0_90 = arith.constant 0 : index
    %485 = vector.load %arg12[%c0_89, %c0_90] : memref<1x128xf32, #tpu.memory_space<vmem>>, vector<1x128xf32>
    %486 = vector.broadcast %485 : vector<1x128xf32> to vector<2x128xf32>
    %487 = arith.addf %484, %486 : vector<2x128xf32>
    %c0_91 = arith.constant 0 : index
    %c0_92 = arith.constant 0 : index
    %488 = vector.load %arg13[%c0_91, %c0_92] : memref<2x128xf32, #tpu.memory_space<vmem>>, vector<2x128xf32>
    tpu.vector_store %arg13[%c0_91, %c0_92], %487 {strides = array<i32>} : memref<2x128xf32, #tpu.memory_space<vmem>>, vector<2x128xf32>,
    return
  }
}

</mosaic_0001>

<llo_original>
// kernel: tpu_custom_call.1
$region0: #{tpu_custom_call.1}
  #allocation0 [shape = 'u32[]', space=smem, size = 0x4, offset = 0x4, fixed_abs, tag = 'smem constant byte address 0x4 - core index']
  #allocation1 [shape = 'u32[144,128]{1,0:T(1,128)}', space=vmem, size = 0x12000, scoped, tag = 'internal scratch']
  #allocation2 [shape = 'f32[16,128]{1,0:T(8,128)}', space=vmem, size = 0x2000, scoped, tag = 'scratch operand']
  %s0 = inlined_call_operand.hbm [shape: f32[16,16], index: 0, kind: input, shape index: {}]
  %s1 = inlined_call_operand.hbm [shape: f32[16,384], index: 1, kind: input, shape index: {}]
  %s2 = inlined_call_operand.hbm [shape: f32[128,384], index: 2, kind: input, shape index: {}]
  %s3 = inlined_call_operand.vmem [shape: f32[1,384], index: 3, kind: input, shape index: {}]
  %s4 = inlined_call_operand.vmem [shape: f32[1,384], index: 4, kind: input, shape index: {}]
  %s5 = inlined_call_operand.hbm [shape: f32[128,384], index: 5, kind: input, shape index: {}]
  %s6 = inlined_call_operand.hbm [shape: f32[128,384], index: 6, kind: input, shape index: {}]
  %s7 = inlined_call_operand.vmem [shape: f32[1,384], index: 7, kind: input, shape index: {}]
  %s8 = inlined_call_operand.vmem [shape: f32[1,384], index: 8, kind: input, shape index: {}]
  %s9 = inlined_call_operand.hbm [shape: f32[128,128], index: 9, kind: input, shape index: {}]
  %s10 = inlined_call_operand.vmem [shape: f32[1,128], index: 10, kind: input, shape index: {}]
  %s11 = inlined_call_operand.hbm [shape: f32[128,128], index: 11, kind: input, shape index: {}]
  %s12 = inlined_call_operand.vmem [shape: f32[1,128], index: 12, kind: input, shape index: {}]
  %s13 = inlined_call_operand.hbm [shape: f32[2,128], index: 13, kind: output, shape index: {}]
  %s14 = sld [smem:[#allocation0]]
  $region90: #{tpu_custom_call.1} parent=0
    _
  %s16 = ssub.s32 1, %s14
  %s17 = scalar_select 0, %s16, %s14
  $region1: #{tpu_custom_call.1} parent=0
    #allocation3 [shape = 'u8[8192]{0}', space=vmem, size = 0x2000, scoped, tag = 'input window, operand 0, single buffered']
    #allocation4 [shape = 's32[1]{0}', space=sflag, size = 0x4, scoped, tag = 'scoped memory for tpu_custom_call.1']
    #allocation5 [shape = 's32[1]{0}', space=sflag, size = 0x4, scoped, tag = 'scoped memory for tpu_custom_call.1']
    #allocation6 [shape = 'u8[24576]{0}', space=vmem, size = 0x6000, scoped, tag = 'input window, operand 1, single buffered']
    #allocation7 [shape = 's32[1]{0}', space=sflag, size = 0x4, scoped, tag = 'scoped memory for tpu_custom_call.1']
    #allocation8 [shape = 'u8[196608]{0}', space=vmem, size = 0x30000, scoped, tag = 'input window, operand 2, single buffered']
    #allocation9 [shape = 'u8[196608]{0}', space=vmem, size = 0x30000, scoped, tag = 'input window, operand 5, single buffered']
    #allocation10 [shape = 's32[1]{0}', space=sflag, size = 0x4, scoped, tag = 'scoped memory for tpu_custom_call.1']
    #allocation11 [shape = 'u8[196608]{0}', space=vmem, size = 0x30000, scoped, tag = 'input window, operand 6, single buffered']
    #allocation12 [shape = 'u8[65536]{0}', space=vmem, size = 0x10000, scoped, tag = 'input window, operand 9, single buffered']
    #allocation13 [shape = 's32[1]{0}', space=sflag, size = 0x4, scoped, tag = 'scoped memory for tpu_custom_call.1']
    #allocation14 [shape = 'u8[65536]{0}', space=vmem, size = 0x10000, scoped, tag = 'input window, operand 11, single buffered']
    #allocation15 [shape = 'u8[1024]{0}', space=vmem, size = 0x400, scoped, tag = 'output window, operand 0, single buffered']
    %18 = vsyncpa [#allocation4], 0
    %19 = vsyncpa [#allocation7], 0
    %20 = vsyncpa [#allocation10], 0
    %21 = vsyncpa [#allocation13], 0
    %22 = vsyncpa [#allocation5], 0
    // Predicated region
    $region2: #{tpu_custom_call.1} parent=1 // pred_check
      _
    $region3: #{tpu_custom_call.1} parent=1 // pred_check_branch
      %24 = sbr.rel (0) target = $region5
    $region4: #{tpu_custom_call.1} parent=1 // pred_region
      %s26 = ssub.s32 256, 256
      %27 = vsyncadd [#allocation4], %s26
      %s28 = sshll.u32 [#allocation3], 4
      %s29 = int_to_ptr.vmem [resolvable:$true] %s28
      %34 = dma.hbm_to_vmem [thread:$0]  %s0, 256, %s29, [#allocation4], 128, 128, 8
    $region5: #{tpu_custom_call.1} parent=1 // pred_fallthru
      _
    // Predicated region
    $region6: #{tpu_custom_call.1} parent=1 // pred_check
      _
    $region7: #{tpu_custom_call.1} parent=1 // pred_check_branch
      %36 = sbr.rel (0) target = $region9
    $region8: #{tpu_custom_call.1} parent=1 // pred_region
      %s38 = ssub.s32 768, 768
      %39 = vsyncadd [#allocation7], %s38
      %s40 = sshll.u32 [#allocation6], 4
      %s41 = int_to_ptr.vmem [resolvable:$true] %s40
      %46 = dma.hbm_to_vmem [thread:$0]  %s1, 768, %s41, [#allocation7], 384, 384, 24
    $region9: #{tpu_custom_call.1} parent=1 // pred_fallthru
      _
    // Predicated region
    $region10: #{tpu_custom_call.1} parent=1 // pred_check
      _
    $region11: #{tpu_custom_call.1} parent=1 // pred_check_branch
      %48 = sbr.rel (0) target = $region13
    $region12: #{tpu_custom_call.1} parent=1 // pred_region
      %s50 = ssub.s32 6144, 6144
      %51 = vsyncadd [#allocation7], %s50
      %s52 = sshll.u32 [#allocation8], 4
      %s53 = int_to_ptr.vmem [resolvable:$true] %s52
      %58 = dma.hbm_to_vmem [thread:$0]  %s2, 6144, %s53, [#allocation7], 384, 384, 24
    $region13: #{tpu_custom_call.1} parent=1 // pred_fallthru
      _
    // Predicated region
    $region14: #{tpu_custom_call.1} parent=1 // pred_check
      _
    $region15: #{tpu_custom_call.1} parent=1 // pred_check_branch
      %60 = sbr.rel (0) target = $region17
    $region16: #{tpu_custom_call.1} parent=1 // pred_region
      _
    $region17: #{tpu_custom_call.1} parent=1 // pred_fallthru
      _
    // Predicated region
    $region18: #{tpu_custom_call.1} parent=1 // pred_check
      _
    $region19: #{tpu_custom_call.1} parent=1 // pred_check_branch
      %62 = sbr.rel (0) target = $region21
    $region20: #{tpu_custom_call.1} parent=1 // pred_region
      _
    $region21: #{tpu_custom_call.1} parent=1 // pred_fallthru
      _
    // Predicated region
    $region22: #{tpu_custom_call.1} parent=1 // pred_check
      _
    $region23: #{tpu_custom_call.1} parent=1 // pred_check_branch
      %64 = sbr.rel (0) target = $region25
    $region24: #{tpu_custom_call.1} parent=1 // pred_region
      %s66 = ssub.s32 6144, 6144
      %67 = vsyncadd [#allocation10], %s66
      %s68 = sshll.u32 [#allocation9], 4
      %s69 = int_to_ptr.vmem [resolvable:$true] %s68
      %74 = dma.hbm_to_vmem [thread:$0]  %s5, 6144, %s69, [#allocation10], 384, 384, 24
    $region25: #{tpu_custom_call.1} parent=1 // pred_fallthru
      _
    // Predicated region
    $region26: #{tpu_custom_call.1} parent=1 // pred_check
      _
    $region27: #{tpu_custom_call.1} parent=1 // pred_check_branch
      %76 = sbr.rel (0) target = $region29
    $region28: #{tpu_custom_call.1} parent=1 // pred_region
      %s78 = ssub.s32 6144, 6144
      %79 = vsyncadd [#allocation10], %s78
      %s80 = sshll.u32 [#allocation11], 4
      %s81 = int_to_ptr.vmem [resolvable:$true] %s80
      %86 = dma.hbm_to_vmem [thread:$0]  %s6, 6144, %s81, [#allocation10], 384, 384, 24
    $region29: #{tpu_custom_call.1} parent=1 // pred_fallthru
      _
    // Predicated region
    $region30: #{tpu_custom_call.1} parent=1 // pred_check
      _
    $region31: #{tpu_custom_call.1} parent=1 // pred_check_branch
      %88 = sbr.rel (0) target = $region33
    $region32: #{tpu_custom_call.1} parent=1 // pred_region
      _
    $region33: #{tpu_custom_call.1} parent=1 // pred_fallthru
      _
    // Predicated region
    $region34: #{tpu_custom_call.1} parent=1 // pred_check
      _
    $region35: #{tpu_custom_call.1} parent=1 // pred_check_branch
      %90 = sbr.rel (0) target = $region37
    $region36: #{tpu_custom_call.1} parent=1 // pred_region
      _
    $region37: #{tpu_custom_call.1} parent=1 // pred_fallthru
      _
    // Predicated region
    $region38: #{tpu_custom_call.1} parent=1 // pred_check
      _
    $region39: #{tpu_custom_call.1} parent=1 // pred_check_branch
      %92 = sbr.rel (0) target = $region41
    $region40: #{tpu_custom_call.1} parent=1 // pred_region
      %s94 = ssub.s32 2048, 2048
      %95 = vsyncadd [#allocation13], %s94
      %s96 = sshll.u32 [#allocation12], 4
      %s97 = int_to_ptr.vmem [resolvable:$true] %s96
      %102 = dma.hbm_to_vmem [thread:$0]  %s9, 2048, %s97, [#allocation13], 128, 128, 8
    $region41: #{tpu_custom_call.1} parent=1 // pred_fallthru
      _
    // Predicated region
    $region42: #{tpu_custom_call.1} parent=1 // pred_check
      _
    $region43: #{tpu_custom_call.1} parent=1 // pred_check_branch
      %104 = sbr.rel (0) target = $region45
    $region44: #{tpu_custom_call.1} parent=1 // pred_region
      _
    $region45: #{tpu_custom_call.1} parent=1 // pred_fallthru
      _
    // Predicated region
    $region46: #{tpu_custom_call.1} parent=1 // pred_check
      _
    $region47: #{tpu_custom_call.1} parent=1 // pred_check_branch
      %106 = sbr.rel (0) target = $region49
    $region48: #{tpu_custom_call.1} parent=1 // pred_region
      %s108 = ssub.s32 2048, 2048
      %109 = vsyncadd [#allocation13], %s108
      %s110 = sshll.u32 [#allocation14], 4
      %s111 = int_to_ptr.vmem [resolvable:$true] %s110
      %116 = dma.hbm_to_vmem [thread:$0]  %s11, 2048, %s111, [#allocation13], 128, 128, 8
    $region49: #{tpu_custom_call.1} parent=1 // pred_fallthru
      _
    // Predicated region
    $region50: #{tpu_custom_call.1} parent=1 // pred_check
      _
    $region51: #{tpu_custom_call.1} parent=1 // pred_check_branch
      %118 = sbr.rel (0) target = $region53
    $region52: #{tpu_custom_call.1} parent=1 // pred_region
      _
    $region53: #{tpu_custom_call.1} parent=1 // pred_fallthru
      _
    // Predicated region
    $region54: #{tpu_custom_call.1} parent=1 // pred_check
      _
    $region55: #{tpu_custom_call.1} parent=1 // pred_check_branch
      %120 = sbr.rel (0) target = $region57
    $region56: #{tpu_custom_call.1} parent=1 // pred_region
      %121 = dma.done [#allocation4], 256
    $region57: #{tpu_custom_call.1} parent=1 // pred_fallthru
      _
    // Predicated region
    $region58: #{tpu_custom_call.1} parent=1 // pred_check
      _
    $region59: #{tpu_custom_call.1} parent=1 // pred_check_branch
      %123 = sbr.rel (0) target = $region61
    $region60: #{tpu_custom_call.1} parent=1 // pred_region
      %124 = dma.done [#allocation7], 768
    $region61: #{tpu_custom_call.1} parent=1 // pred_fallthru
      _
    // Predicated region
    $region62: #{tpu_custom_call.1} parent=1 // pred_check
      _
    $region63: #{tpu_custom_call.1} parent=1 // pred_check_branch
      %126 = sbr.rel (0) target = $region65
    $region64: #{tpu_custom_call.1} parent=1 // pred_region
      %127 = dma.done [#allocation7], 6144
    $region65: #{tpu_custom_call.1} parent=1 // pred_fallthru
      _
    // Predicated region
    $region66: #{tpu_custom_call.1} parent=1 // pred_check
      _
    $region67: #{tpu_custom_call.1} parent=1 // pred_check_branch
      %129 = sbr.rel (0) target = $region69
    $region68: #{tpu_custom_call.1} parent=1 // pred_region
      %130 = dma.done [#allocation10], 6144
    $region69: #{tpu_custom_call.1} parent=1 // pred_fallthru
      _
    // Predicated region
    $region70: #{tpu_custom_call.1} parent=1 // pred_check
      _
    $region71: #{tpu_custom_call.1} parent=1 // pred_check_branch
      %132 = sbr.rel (0) target = $region73
    $region72: #{tpu_custom_call.1} parent=1 // pred_region
      %133 = dma.done [#allocation10], 6144
    $region73: #{tpu_custom_call.1} parent=1 // pred_fallthru
      _
    // Predicated region
    $region74: #{tpu_custom_call.1} parent=1 // pred_check
      _
    $region75: #{tpu_custom_call.1} parent=1 // pred_check_branch
      %135 = sbr.rel (0) target = $region77
    $region76: #{tpu_custom_call.1} parent=1 // pred_region
      %136 = dma.done [#allocation13], 2048
    $region77: #{tpu_custom_call.1} parent=1 // pred_fallthru
      _
    // Predicated region
    $region78: #{tpu_custom_call.1} parent=1 // pred_check
      _
    $region79: #{tpu_custom_call.1} parent=1 // pred_check_branch
      %138 = sbr.rel (0) target = $region81
    $region80: #{tpu_custom_call.1} parent=1 // pred_region
      %139 = dma.done [#allocation13], 2048
    $region81: #{tpu_custom_call.1} parent=1 // pred_fallthru
      _
    %v140 = vld [vmem:[#allocation3] sm:$0xff]
    %v141 = vld [vmem:[#allocation3 + $0x8] sm:$0xff]
    %v142 = vld [vmem:[#allocation6] sm:$0xff]
    %v143 = vld [vmem:[#allocation6 + $0x8] sm:$0xff]
    %v144 = vld [vmem:[#allocation6 + $0x10] sm:$0xff]
    %v145 = vld [vmem:[#allocation6 + $0x18] sm:$0xff]
    %v146 = vld [vmem:[#allocation6 + $0x20] sm:$0xff]
    %v147 = vld [vmem:[#allocation6 + $0x28] sm:$0xff]
    %v148 = vld [vmem:[%s3] sm:$0x7]
    %v150 = vlaneseq
    %v151 = vshrl.u32 %v150, 7
    %v152 = vsub.s32 0, %v151
    %v153 = vrot.slane %v148, %v152
    %v154 = vlaneseq
    %v155 = vshrl.u32 %v154, 7
    %v156 = vsub.s32 1, %v155
    %v157 = vrot.slane %v148, %v156
    %v158 = vlaneseq
    %v159 = vshrl.u32 %v158, 7
    %v160 = vsub.s32 2, %v159
    %v161 = vrot.slane %v148, %v160
    %vm165 = vcmask 130048
    %v167 = vsel %vm165, %v140, 0
    %v170 = vsel %vm165, %v141, 0
    %172 = vmatprep.subr.mxu0 %v143
    %173 = vmatpush1.msra.mxu0 %v142
    %174 = vmatprep.subr.mxu0 %v146
    %175 = vmatpush1.msra.mxu0 %v145
    %176 = vmatprep.subr.mxu0 0.0
    %177 = vmatpush1.msra.mxu0 0.0
    %178 = vmatprep.subr.mxu0 0.0
    %179 = vmatpush1.msra.mxu0 0.0
    %180 = vmatprep.subr.mxu0 0.0
    %181 = vmatpush1.msra.mxu0 0.0
    %182 = vmatprep.subr.mxu0 0.0
    %183 = vmatpush1.msra.mxu0 0.0
    %184 = vmatprep.subr.mxu0 0.0
    %185 = vmatpush1.msra.mxu0 0.0
    %186 = vmatprep.subr.mxu0 0.0
    %187 = vmatpush1.msra.mxu0 0.0
    %188 = vmatprep.subr.mxu0 0.0
    %189 = vmatpush1.msra.mxu0 0.0
    %190 = vmatprep.subr.mxu0 0.0
    %191 = vmatpush1.msra.mxu0 0.0
    %192 = vmatprep.subr.mxu0 0.0
    %193 = vmatpush1.msra.mxu0 0.0
    %194 = vmatprep.subr.mxu0 0.0
    %195 = vmatpush1.msra.mxu0 0.0
    %196 = vmatprep.subr.mxu0 0.0
    %197 = vmatpush1.msra.mxu0 0.0
    %198 = vmatprep.subr.mxu0 0.0
    %199 = vmatpush1.msra.mxu0 0.0
    %200 = vmatprep.subr.mxu0 0.0
    %201 = vmatpush1.msra.mxu0 0.0
    %202 = vmatprep.subr.mxu0 0.0
    %203 = vmatpush1.msra.mxu0 0.0
    %204 = vmatprep.subr.mxu0 0.0
    %205 = vmatpush1.msra.mxu0 0.0
    %206 = vmatprep.subr.mxu0 0.0
    %207 = vmatpush1.msra.mxu0 0.0
    %208 = vmatprep.subr.mxu0 0.0
    %209 = vmatpush1.msra.mxu0 0.0
    %210 = vmatprep.subr.mxu0 0.0
    %211 = vmatpush1.msra.mxu0 0.0
    %212 = vmatprep.subr.mxu0 0.0
    %213 = vmatpush1.msra.mxu0 0.0
    %214 = vmatprep.subr.mxu0 0.0
    %215 = vmatpush1.msra.mxu0 0.0
    %216 = vmatprep.subr.mxu0 0.0
    %217 = vmatpush1.msra.mxu0 0.0
    %218 = vmatprep.subr.mxu0 0.0
    %219 = vmatpush1.msra.mxu0 0.0
    %220 = vmatprep.subr.mxu0 0.0
    %221 = vmatpush1.msra.mxu0 0.0
    %222 = vmatprep.subr.mxu0 0.0
    %223 = vmatpush1.msra.mxu0 0.0
    %224 = vmatprep.subr.mxu0 0.0
    %225 = vmatpush1.msra.mxu0 0.0
    %226 = vmatprep.subr.mxu0 0.0
    %227 = vmatpush1.msra.mxu0 0.0
    %228 = vmatprep.subr.mxu0 0.0
    %229 = vmatpush1.msra.mxu0 0.0
    %230 = vmatprep.subr.mxu0 0.0
    %231 = vmatpush1.msra.mxu0 0.0
    %232 = vmatprep.subr.mxu0 0.0
    %233 = vmatpush1.msra.mxu0 0.0
    %234 = vmatprep.subr.mxu0 0.0
    %235 = vmatpush1.msra.mxu0 0.0
    %236 = vmatprep.mubr.f32.mxu0 0.0
    %237 = vmatmul.mubr.f32.gmra.mrb[0].mxu0 %v167
    %v238 = vpop.f32.mrb[0].mxu0
    %v239 = vadd.f32 %v153, %v238
    %v240 = vpop.f32.mrb[0].mxu0
    %v241 = vadd.f32 %v157, %v240
    %242 = vmatprep.mubr.f32.mxu0 0.0
    %243 = vmatmul.mubr.f32.gmra.mrb[0].mxu0 %v170
    %v244 = vpop.f32.mrb[0].mxu0
    %v245 = vadd.f32 %v153, %v244
    %v246 = vpop.f32.mrb[0].mxu0
    %v247 = vadd.f32 %v157, %v246
    %248 = vdwg.mxu0
    %249 = vmatprep.subr.mxu0 0.0
    %250 = vmatpush1.msra.mxu0 %v144
    %251 = vmatprep.subr.mxu0 0.0
    %252 = vmatpush1.msra.mxu0 %v147
    %253 = vmatprep.subr.mxu0 0.0
    %254 = vmatpush1.msra.mxu0 0.0
    %255 = vmatprep.subr.mxu0 0.0
    %256 = vmatpush1.msra.mxu0 0.0
    %257 = vmatprep.subr.mxu0 0.0
    %258 = vmatpush1.msra.mxu0 0.0
    %259 = vmatprep.subr.mxu0 0.0
    %260 = vmatpush1.msra.mxu0 0.0
    %261 = vmatprep.subr.mxu0 0.0
    %262 = vmatpush1.msra.mxu0 0.0
    %263 = vmatprep.subr.mxu0 0.0
    %264 = vmatpush1.msra.mxu0 0.0
    %265 = vmatprep.subr.mxu0 0.0
    %266 = vmatpush1.msra.mxu0 0.0
    %267 = vmatprep.subr.mxu0 0.0
    %268 = vmatpush1.msra.mxu0 0.0
    %269 = vmatprep.subr.mxu0 0.0
    %270 = vmatpush1.msra.mxu0 0.0
    %271 = vmatprep.subr.mxu0 0.0
    %272 = vmatpush1.msra.mxu0 0.0
    %273 = vmatprep.subr.mxu0 0.0
    %274 = vmatpush1.msra.mxu0 0.0
    %275 = vmatprep.subr.mxu0 0.0
    %276 = vmatpush1.msra.mxu0 0.0
    %277 = vmatprep.subr.mxu0 0.0
    %278 = vmatpush1.msra.mxu0 0.0
    %279 = vmatprep.subr.mxu0 0.0
    %280 = vmatpush1.msra.mxu0 0.0
    %281 = vmatprep.subr.mxu0 0.0
    %282 = vmatpush1.msra.mxu0 0.0
    %283 = vmatprep.subr.mxu0 0.0
    %284 = vmatpush1.msra.mxu0 0.0
    %285 = vmatprep.subr.mxu0 0.0
    %286 = vmatpush1.msra.mxu0 0.0
    %287 = vmatprep.subr.mxu0 0.0
    %288 = vmatpush1.msra.mxu0 0.0
    %289 = vmatprep.subr.mxu0 0.0
    %290 = vmatpush1.msra.mxu0 0.0
    %291 = vmatprep.subr.mxu0 0.0
    %292 = vmatpush1.msra.mxu0 0.0
    %293 = vmatprep.subr.mxu0 0.0
    %294 = vmatpush1.msra.mxu0 0.0
    %295 = vmatprep.subr.mxu0 0.0
    %296 = vmatpush1.msra.mxu0 0.0
    %297 = vmatprep.subr.mxu0 0.0
    %298 = vmatpush1.msra.mxu0 0.0
    %299 = vmatprep.subr.mxu0 0.0
    %300 = vmatpush1.msra.mxu0 0.0
    %301 = vmatprep.subr.mxu0 0.0
    %302 = vmatpush1.msra.mxu0 0.0
    %303 = vmatprep.subr.mxu0 0.0
    %304 = vmatpush1.msra.mxu0 0.0
    %305 = vmatprep.subr.mxu0 0.0
    %306 = vmatpush1.msra.mxu0 0.0
    %307 = vmatprep.subr.mxu0 0.0
    %308 = vmatpush1.msra.mxu0 0.0
    %309 = vmatprep.subr.mxu0 0.0
    %310 = vmatpush1.msra.mxu0 0.0
    %311 = vmatprep.subr.mxu0 0.0
    %312 = vmatpush1.msra.mxu0 0.0
    %313 = vmatprep.mubr.f32.mxu0 0.0
    %314 = vmatmul.mubr.f32.gmra.mrb[0].mxu0 %v167
    %v315 = vpop.f32.mrb[0].mxu0
    %v316 = vadd.f32 %v161, %v315
    %v317 = vpop.f32.mrb[0].mxu0
    %318 = vmatprep.mubr.f32.mxu0 0.0
    %319 = vmatmul.mubr.f32.gmra.mrb[0].mxu0 %v170
    %v320 = vpop.f32.mrb[0].mxu0
    %v321 = vadd.f32 %v161, %v320
    %v322 = vpop.f32.mrb[0].mxu0
    %323 = vdwg.mxu0
    %v324 = vld [vmem:[#allocation8] sm:$0xff]
    %v325 = vld [vmem:[#allocation8 + $0x8] sm:$0xff]
    %v326 = vld [vmem:[#allocation8 + $0x10] sm:$0xff]
    %v327 = vld [vmem:[#allocation8 + $0x18] sm:$0xff]
    %v328 = vld [vmem:[#allocation8 + $0x20] sm:$0xff]
    %v329 = vld [vmem:[#allocation8 + $0x28] sm:$0xff]
    %v330 = vld [vmem:[#allocation8 + $0x30] sm:$0xff]
    %v331 = vld [vmem:[#allocation8 + $0x38] sm:$0xff]
    %v332 = vld [vmem:[#allocation8 + $0x40] sm:$0xff]
    %v333 = vld [vmem:[#allocation8 + $0x48] sm:$0xff]
    %v334 = vld [vmem:[#allocation8 + $0x50] sm:$0xff]
    %v335 = vld [vmem:[#allocation8 + $0x58] sm:$0xff]
    %v336 = vld [vmem:[#allocation8 + $0x60] sm:$0xff]
    %v337 = vld [vmem:[#allocation8 + $0x68] sm:$0xff]
    %v338 = vld [vmem:[#allocation8 + $0x70] sm:$0xff]
    %v339 = vld [vmem:[#allocation8 + $0x78] sm:$0xff]
    %v340 = vld [vmem:[#allocation8 + $0x80] sm:$0xff]
    %v341 = vld [vmem:[#allocation8 + $0x88] sm:$0xff]
    %v342 = vld [vmem:[#allocation8 + $0x90] sm:$0xff]
    %v343 = vld [vmem:[#allocation8 + $0x98] sm:$0xff]
    %v344 = vld [vmem:[#allocation8 + $0xa0] sm:$0xff]
    %v345 = vld [vmem:[#allocation8 + $0xa8] sm:$0xff]
    %v346 = vld [vmem:[#allocation8 + $0xb0] sm:$0xff]
    %v347 = vld [vmem:[#allocation8 + $0xb8] sm:$0xff]
    %v348 = vld [vmem:[#allocation8 + $0xc0] sm:$0xff]
    %v349 = vld [vmem:[#allocation8 + $0xc8] sm:$0xff]
    %v350 = vld [vmem:[#allocation8 + $0xd0] sm:$0xff]
    %v351 = vld [vmem:[#allocation8 + $0xd8] sm:$0xff]
    %v352 = vld [vmem:[#allocation8 + $0xe0] sm:$0xff]
    %v353 = vld [vmem:[#allocation8 + $0xe8] sm:$0xff]
    %v354 = vld [vmem:[#allocation8 + $0xf0] sm:$0xff]
    %v355 = vld [vmem:[#allocation8 + $0xf8] sm:$0xff]
    %v356 = vld [vmem:[#allocation8 + $0x100] sm:$0xff]
    %v357 = vld [vmem:[#allocation8 + $0x108] sm:$0xff]
    %v358 = vld [vmem:[#allocation8 + $0x110] sm:$0xff]
    %v359 = vld [vmem:[#allocation8 + $0x118] sm:$0xff]
    %v360 = vld [vmem:[#allocation8 + $0x120] sm:$0xff]
    %v361 = vld [vmem:[#allocation8 + $0x128] sm:$0xff]
    %v362 = vld [vmem:[#allocation8 + $0x130] sm:$0xff]
    %v363 = vld [vmem:[#allocation8 + $0x138] sm:$0xff]
    %v364 = vld [vmem:[#allocation8 + $0x140] sm:$0xff]
    %v365 = vld [vmem:[#allocation8 + $0x148] sm:$0xff]
    %v366 = vld [vmem:[#allocation8 + $0x150] sm:$0xff]
    %v367 = vld [vmem:[#allocation8 + $0x158] sm:$0xff]
    %v368 = vld [vmem:[#allocation8 + $0x160] sm:$0xff]
    %v369 = vld [vmem:[#allocation8 + $0x168] sm:$0xff]
    %v370 = vld [vmem:[#allocation8 + $0x170] sm:$0xff]
    %v371 = vld [vmem:[#allocation8 + $0x178] sm:$0xff]
    %v372 = vld [vmem:[%s4] sm:$0x7]
    %v374 = vlaneseq
    %v375 = vshrl.u32 %v374, 7
    %v376 = vsub.s32 0, %v375
    %v377 = vrot.slane %v372, %v376
    %v378 = vlaneseq
    %v379 = vshrl.u32 %v378, 7
    %v380 = vsub.s32 1, %v379
    %v381 = vrot.slane %v372, %v380
    %v382 = vlaneseq
    %v383 = vshrl.u32 %v382, 7
    %v384 = vsub.s32 2, %v383
    %v385 = vrot.slane %v372, %v384
    %389 = vmatprep.subr.mxu0 %v325
    %390 = vmatpush1.msra.mxu0 %v324
    %391 = vmatprep.subr.mxu0 %v328
    %392 = vmatpush1.msra.mxu0 %v327
    %393 = vmatprep.subr.mxu0 %v331
    %394 = vmatpush1.msra.mxu0 %v330
    %395 = vmatprep.subr.mxu0 %v334
    %396 = vmatpush1.msra.mxu0 %v333
    %397 = vmatprep.subr.mxu0 %v337
    %398 = vmatpush1.msra.mxu0 %v336
    %399 = vmatprep.subr.mxu0 %v340
    %400 = vmatpush1.msra.mxu0 %v339
    %401 = vmatprep.subr.mxu0 %v343
    %402 = vmatpush1.msra.mxu0 %v342
    %403 = vmatprep.subr.mxu0 %v346
    %404 = vmatpush1.msra.mxu0 %v345
    %405 = vmatprep.subr.mxu0 %v349
    %406 = vmatpush1.msra.mxu0 %v348
    %407 = vmatprep.subr.mxu0 %v352
    %408 = vmatpush1.msra.mxu0 %v351
    %409 = vmatprep.subr.mxu0 %v355
    %410 = vmatpush1.msra.mxu0 %v354
    %411 = vmatprep.subr.mxu0 %v358
    %412 = vmatpush1.msra.mxu0 %v357
    %413 = vmatprep.subr.mxu0 %v361
    %414 = vmatpush1.msra.mxu0 %v360
    %415 = vmatprep.subr.mxu0 %v364
    %416 = vmatpush1.msra.mxu0 %v363
    %417 = vmatprep.subr.mxu0 %v367
    %418 = vmatpush1.msra.mxu0 %v366
    %419 = vmatprep.subr.mxu0 %v370
    %420 = vmatpush1.msra.mxu0 %v369
    %421 = vmatprep.subr.mxu0 0.0
    %422 = vmatpush1.msra.mxu0 0.0
    %423 = vmatprep.subr.mxu0 0.0
    %424 = vmatpush1.msra.mxu0 0.0
    %425 = vmatprep.subr.mxu0 0.0
    %426 = vmatpush1.msra.mxu0 0.0
    %427 = vmatprep.subr.mxu0 0.0
    %428 = vmatpush1.msra.mxu0 0.0
    %429 = vmatprep.subr.mxu0 0.0
    %430 = vmatpush1.msra.mxu0 0.0
    %431 = vmatprep.subr.mxu0 0.0
    %432 = vmatpush1.msra.mxu0 0.0
    %433 = vmatprep.subr.mxu0 0.0
    %434 = vmatpush1.msra.mxu0 0.0
    %435 = vmatprep.subr.mxu0 0.0
    %436 = vmatpush1.msra.mxu0 0.0
    %437 = vmatprep.subr.mxu0 0.0
    %438 = vmatpush1.msra.mxu0 0.0
    %439 = vmatprep.subr.mxu0 0.0
    %440 = vmatpush1.msra.mxu0 0.0
    %441 = vmatprep.subr.mxu0 0.0
    %442 = vmatpush1.msra.mxu0 0.0
    %443 = vmatprep.subr.mxu0 0.0
    %444 = vmatpush1.msra.mxu0 0.0
    %445 = vmatprep.subr.mxu0 0.0
    %446 = vmatpush1.msra.mxu0 0.0
    %447 = vmatprep.subr.mxu0 0.0
    %448 = vmatpush1.msra.mxu0 0.0
    %449 = vmatprep.subr.mxu0 0.0
    %450 = vmatpush1.msra.mxu0 0.0
    %451 = vmatprep.subr.mxu0 0.0
    %452 = vmatpush1.msra.mxu0 0.0
    %453 = vmatprep.mubr.f32.mxu0 0.0
    %454 = vmatmul.mubr.f32.gmra.mrb[0].mxu0 0.0
    %v455 = vpop.f32.mrb[0].mxu0
    %v456 = vadd.f32 %v377, %v455
    %v457 = vpop.f32.mrb[0].mxu0
    %v458 = vadd.f32 %v381, %v457
    %459 = vdwg.mxu0
    %460 = vmatprep.subr.mxu0 0.0
    %461 = vmatpush1.msra.mxu0 %v326
    %462 = vmatprep.subr.mxu0 0.0
    %463 = vmatpush1.msra.mxu0 %v329
    %464 = vmatprep.subr.mxu0 0.0
    %465 = vmatpush1.msra.mxu0 %v332
    %466 = vmatprep.subr.mxu0 0.0
    %467 = vmatpush1.msra.mxu0 %v335
    %468 = vmatprep.subr.mxu0 0.0
    %469 = vmatpush1.msra.mxu0 %v338
    %470 = vmatprep.subr.mxu0 0.0
    %471 = vmatpush1.msra.mxu0 %v341
    %472 = vmatprep.subr.mxu0 0.0
    %473 = vmatpush1.msra.mxu0 %v344
    %474 = vmatprep.subr.mxu0 0.0
    %475 = vmatpush1.msra.mxu0 %v347
    %476 = vmatprep.subr.mxu0 0.0
    %477 = vmatpush1.msra.mxu0 %v350
    %478 = vmatprep.subr.mxu0 0.0
    %479 = vmatpush1.msra.mxu0 %v353
    %480 = vmatprep.subr.mxu0 0.0
    %481 = vmatpush1.msra.mxu0 %v356
    %482 = vmatprep.subr.mxu0 0.0
    %483 = vmatpush1.msra.mxu0 %v359
    %484 = vmatprep.subr.mxu0 0.0
    %485 = vmatpush1.msra.mxu0 %v362
    %486 = vmatprep.subr.mxu0 0.0
    %487 = vmatpush1.msra.mxu0 %v365
    %488 = vmatprep.subr.mxu0 0.0
    %489 = vmatpush1.msra.mxu0 %v368
    %490 = vmatprep.subr.mxu0 0.0
    %491 = vmatpush1.msra.mxu0 %v371
    %492 = vmatprep.subr.mxu0 0.0
    %493 = vmatpush1.msra.mxu0 0.0
    %494 = vmatprep.subr.mxu0 0.0
    %495 = vmatpush1.msra.mxu0 0.0
    %496 = vmatprep.subr.mxu0 0.0
    %497 = vmatpush1.msra.mxu0 0.0
    %498 = vmatprep.subr.mxu0 0.0
    %499 = vmatpush1.msra.mxu0 0.0
    %500 = vmatprep.subr.mxu0 0.0
    %501 = vmatpush1.msra.mxu0 0.0
    %502 = vmatprep.subr.mxu0 0.0
    %503 = vmatpush1.msra.mxu0 0.0
    %504 = vmatprep.subr.mxu0 0.0
    %505 = vmatpush1.msra.mxu0 0.0
    %506 = vmatprep.subr.mxu0 0.0
    %507 = vmatpush1.msra.mxu0 0.0
    %508 = vmatprep.subr.mxu0 0.0
    %509 = vmatpush1.msra.mxu0 0.0
    %510 = vmatprep.subr.mxu0 0.0
    %511 = vmatpush1.msra.mxu0 0.0
    %512 = vmatprep.subr.mxu0 0.0
    %513 = vmatpush1.msra.mxu0 0.0
    %514 = vmatprep.subr.mxu0 0.0
    %515 = vmatpush1.msra.mxu0 0.0
    %516 = vmatprep.subr.mxu0 0.0
    %517 = vmatpush1.msra.mxu0 0.0
    %518 = vmatprep.subr.mxu0 0.0
    %519 = vmatpush1.msra.mxu0 0.0
    %520 = vmatprep.subr.mxu0 0.0
    %521 = vmatpush1.msra.mxu0 0.0
    %522 = vmatprep.subr.mxu0 0.0
    %523 = vmatpush1.msra.mxu0 0.0
    %524 = vmatprep.mubr.f32.mxu0 0.0
    %525 = vmatmul.mubr.f32.gmra.mrb[0].mxu0 0.0
    %v526 = vpop.f32.mrb[0].mxu0
    %v527 = vadd.f32 %v385, %v526
    %v528 = vpop.f32.mrb[0].mxu0
    %529 = vdwg.mxu0
    %v530 = vadd.f32 %v239, %v456
    %v531 = vxor.u32 %v530, 2147483648
    %v532 = vmul.f32 %v531, 1.442695
    %v533 = vpow.pop %v532
    %v534 = vadd.f32 %v533, 1.0
    %v535 = vrcp.pop %v534
    %v536 = vmul.f32 1.0, %v535
    %v537 = vadd.f32 %v241, %v458
    %v538 = vxor.u32 %v537, 2147483648
    %v539 = vmul.f32 %v538, 1.442695
    %v540 = vpow.pop %v539
    %v541 = vadd.f32 %v540, 1.0
    %v542 = vrcp.pop %v541
    %v543 = vmul.f32 1.0, %v542
    %v544 = vmul.f32 %v536, %v527
    %v545 = vadd.f32 %v316, %v544
    %v546 = vtanh.pop %v545
    %v547 = vsub.f32 0.0, %v546
    %v548 = vmul.f32 %v543, %v547
    %v549 = vadd.f32 %v546, %v548
    %550 = vst [vmem:[#allocation2] sm:$0x3] %v549
    %551 = vmatprep.subr.mxu0 %v325
    %552 = vmatpush1.msra.mxu0 %v324
    %553 = vmatprep.subr.mxu0 %v328
    %554 = vmatpush1.msra.mxu0 %v327
    %555 = vmatprep.subr.mxu0 %v331
    %556 = vmatpush1.msra.mxu0 %v330
    %557 = vmatprep.subr.mxu0 %v334
    %558 = vmatpush1.msra.mxu0 %v333
    %559 = vmatprep.subr.mxu0 %v337
    %560 = vmatpush1.msra.mxu0 %v336
    %561 = vmatprep.subr.mxu0 %v340
    %562 = vmatpush1.msra.mxu0 %v339
    %563 = vmatprep.subr.mxu0 %v343
    %564 = vmatpush1.msra.mxu0 %v342
    %565 = vmatprep.subr.mxu0 %v346
    %566 = vmatpush1.msra.mxu0 %v345
    %567 = vmatprep.subr.mxu0 %v349
    %568 = vmatpush1.msra.mxu0 %v348
    %569 = vmatprep.subr.mxu0 %v352
    %570 = vmatpush1.msra.mxu0 %v351
    %571 = vmatprep.subr.mxu0 %v355
    %572 = vmatpush1.msra.mxu0 %v354
    %573 = vmatprep.subr.mxu0 %v358
    %574 = vmatpush1.msra.mxu0 %v357
    %575 = vmatprep.subr.mxu0 %v361
    %576 = vmatpush1.msra.mxu0 %v360
    %577 = vmatprep.subr.mxu0 %v364
    %578 = vmatpush1.msra.mxu0 %v363
    %579 = vmatprep.subr.mxu0 %v367
    %580 = vmatpush1.msra.mxu0 %v366
    %581 = vmatprep.subr.mxu0 %v370
    %582 = vmatpush1.msra.mxu0 %v369
    %583 = vmatprep.subr.mxu0 0.0
    %584 = vmatpush1.msra.mxu0 0.0
    %585 = vmatprep.subr.mxu0 0.0
    %586 = vmatpush1.msra.mxu0 0.0
    %587 = vmatprep.subr.mxu0 0.0
    %588 = vmatpush1.msra.mxu0 0.0
    %589 = vmatprep.subr.mxu0 0.0
    %590 = vmatpush1.msra.mxu0 0.0
    %591 = vmatprep.subr.mxu0 0.0
    %592 = vmatpush1.msra.mxu0 0.0
    %593 = vmatprep.subr.mxu0 0.0
    %594 = vmatpush1.msra.mxu0 0.0
    %595 = vmatprep.subr.mxu0 0.0
    %596 = vmatpush1.msra.mxu0 0.0
    %597 = vmatprep.subr.mxu0 0.0
    %598 = vmatpush1.msra.mxu0 0.0
    %599 = vmatprep.subr.mxu0 0.0
    %600 = vmatpush1.msra.mxu0 0.0
    %601 = vmatprep.subr.mxu0 0.0
    %602 = vmatpush1.msra.mxu0 0.0
    %603 = vmatprep.subr.mxu0 0.0
    %604 = vmatpush1.msra.mxu0 0.0
    %605 = vmatprep.subr.mxu0 0.0
    %606 = vmatpush1.msra.mxu0 0.0
    %607 = vmatprep.subr.mxu0 0.0
    %608 = vmatpush1.msra.mxu0 0.0
    %609 = vmatprep.subr.mxu0 0.0
    %610 = vmatpush1.msra.mxu0 0.0
    %611 = vmatprep.subr.mxu0 0.0
    %612 = vmatpush1.msra.mxu0 0.0
    %613 = vmatprep.subr.mxu0 0.0
    %614 = vmatpush1.msra.mxu0 0.0
    %615 = vmatprep.mubr.f32.mxu0 0.0
    %616 = vmatmul.mubr.f32.gmra.mrb[0].mxu0 %v549
    %v617 = vpop.f32.mrb[0].mxu0
    %v618 = vadd.f32 %v377, %v617
    %v619 = vpop.f32.mrb[0].mxu0
    %v620 = vadd.f32 %v381, %v619
    %621 = vdwg.mxu0
    %622 = vmatprep.subr.mxu0 0.0
    %623 = vmatpush1.msra.mxu0 %v326
    %624 = vmatprep.subr.mxu0 0.0
    %625 = vmatpush1.msra.mxu0 %v329
    %626 = vmatprep.subr.mxu0 0.0
    %627 = vmatpush1.msra.mxu0 %v332
    %628 = vmatprep.subr.mxu0 0.0
    %629 = vmatpush1.msra.mxu0 %v335
    %630 = vmatprep.subr.mxu0 0.0
    %631 = vmatpush1.msra.mxu0 %v338
    %632 = vmatprep.subr.mxu0 0.0
    %633 = vmatpush1.msra.mxu0 %v341
    %634 = vmatprep.subr.mxu0 0.0
    %635 = vmatpush1.msra.mxu0 %v344
    %636 = vmatprep.subr.mxu0 0.0
    %637 = vmatpush1.msra.mxu0 %v347
    %638 = vmatprep.subr.mxu0 0.0
    %639 = vmatpush1.msra.mxu0 %v350
    %640 = vmatprep.subr.mxu0 0.0
    %641 = vmatpush1.msra.mxu0 %v353
    %642 = vmatprep.subr.mxu0 0.0
    %643 = vmatpush1.msra.mxu0 %v356
    %644 = vmatprep.subr.mxu0 0.0
    %645 = vmatpush1.msra.mxu0 %v359
    %646 = vmatprep.subr.mxu0 0.0
    %647 = vmatpush1.msra.mxu0 %v362
    %648 = vmatprep.subr.mxu0 0.0
    %649 = vmatpush1.msra.mxu0 %v365
    %650 = vmatprep.subr.mxu0 0.0
    %651 = vmatpush1.msra.mxu0 %v368
    %652 = vmatprep.subr.mxu0 0.0
    %653 = vmatpush1.msra.mxu0 %v371
    %654 = vmatprep.subr.mxu0 0.0
    %655 = vmatpush1.msra.mxu0 0.0
    %656 = vmatprep.subr.mxu0 0.0
    %657 = vmatpush1.msra.mxu0 0.0
    %658 = vmatprep.subr.mxu0 0.0
    %659 = vmatpush1.msra.mxu0 0.0
    %660 = vmatprep.subr.mxu0 0.0
    %661 = vmatpush1.msra.mxu0 0.0
    %662 = vmatprep.subr.mxu0 0.0
    %663 = vmatpush1.msra.mxu0 0.0
    %664 = vmatprep.subr.mxu0 0.0
    %665 = vmatpush1.msra.mxu0 0.0
    %666 = vmatprep.subr.mxu0 0.0
    %667 = vmatpush1.msra.mxu0 0.0
    %668 = vmatprep.subr.mxu0 0.0
    %669 = vmatpush1.msra.mxu0 0.0
    %670 = vmatprep.subr.mxu0 0.0
    %671 = vmatpush1.msra.mxu0 0.0
    %672 = vmatprep.subr.mxu0 0.0
    %673 = vmatpush1.msra.mxu0 0.0
    %674 = vmatprep.subr.mxu0 0.0
    %675 = vmatpush1.msra.mxu0 0.0
    %676 = vmatprep.subr.mxu0 0.0
    %677 = vmatpush1.msra.mxu0 0.0
    %678 = vmatprep.subr.mxu0 0.0
    %679 = vmatpush1.msra.mxu0 0.0
    %680 = vmatprep.subr.mxu0 0.0
    %681 = vmatpush1.msra.mxu0 0.0
    %682 = vmatprep.subr.mxu0 0.0
    %683 = vmatpush1.msra.mxu0 0.0
    %684 = vmatprep.subr.mxu0 0.0
    %685 = vmatpush1.msra.mxu0 0.0
    %686 = vmatprep.mubr.f32.mxu0 0.0
    %687 = vmatmul.mubr.f32.gmra.mrb[0].mxu0 %v549
    %v688 = vpop.f32.mrb[0].mxu0
    %v689 = vadd.f32 %v385, %v688
    %v690 = vpop.f32.mrb[0].mxu0
    %691 = vdwg.mxu0
    %v693 = vrot.slane %v618, 6
    %v695 = vadd.f32 %v239, %v693
    %v696 = vxor.u32 %v695, 2147483648
    %v697 = vmul.f32 %v696, 1.442695
    %v698 = vpow.pop %v697
    %v699 = vadd.f32 %v698, 1.0
    %v700 = vrcp.pop %v699
    %v701 = vmul.f32 1.0, %v700
    %v703 = vrot.slane %v620, 6
    %v705 = vadd.f32 %v241, %v703
    %v706 = vxor.u32 %v705, 2147483648
    %v707 = vmul.f32 %v706, 1.442695
    %v708 = vpow.pop %v707
    %v709 = vadd.f32 %v708, 1.0
    %v710 = vrcp.pop %v709
    %v711 = vmul.f32 1.0, %v710
    %v713 = vrot.slane %v689, 6
    %v715 = vmul.f32 %v701, %v713
    %v716 = vadd.f32 %v316, %v715
    %v717 = vtanh.pop %v716
    %v719 = vrot.slane %v717, 2
    %v721 = vsub.f32 %v549, %v719
    %v723 = vrot.slane %v721, 6
    %v725 = vmul.f32 %v711, %v723
    %v726 = vadd.f32 %v717, %v725
    %727 = vst [vmem:[#allocation2] sm:$0xc] %v726
    %v729 = vrot.slane %v726, 2
    %731 = vmatprep.subr.mxu0 %v325
    %732 = vmatpush1.msra.mxu0 %v324
    %733 = vmatprep.subr.mxu0 %v328
    %734 = vmatpush1.msra.mxu0 %v327
    %735 = vmatprep.subr.mxu0 %v331
    %736 = vmatpush1.msra.mxu0 %v330
    %737 = vmatprep.subr.mxu0 %v334
    %738 = vmatpush1.msra.mxu0 %v333
    %739 = vmatprep.subr.mxu0 %v337
    %740 = vmatpush1.msra.mxu0 %v336
    %741 = vmatprep.subr.mxu0 %v340
    %742 = vmatpush1.msra.mxu0 %v339
    %743 = vmatprep.subr.mxu0 %v343
    %744 = vmatpush1.msra.mxu0 %v342
    %745 = vmatprep.subr.mxu0 %v346
    %746 = vmatpush1.msra.mxu0 %v345
    %747 = vmatprep.subr.mxu0 %v349
    %748 = vmatpush1.msra.mxu0 %v348
    %749 = vmatprep.subr.mxu0 %v352
    %750 = vmatpush1.msra.mxu0 %v351
    %751 = vmatprep.subr.mxu0 %v355
    %752 = vmatpush1.msra.mxu0 %v354
    %753 = vmatprep.subr.mxu0 %v358
    %754 = vmatpush1.msra.mxu0 %v357
    %755 = vmatprep.subr.mxu0 %v361
    %756 = vmatpush1.msra.mxu0 %v360
    %757 = vmatprep.subr.mxu0 %v364
    %758 = vmatpush1.msra.mxu0 %v363
    %759 = vmatprep.subr.mxu0 %v367
    %760 = vmatpush1.msra.mxu0 %v366
    %761 = vmatprep.subr.mxu0 %v370
    %762 = vmatpush1.msra.mxu0 %v369
    %763 = vmatprep.subr.mxu0 0.0
    %764 = vmatpush1.msra.mxu0 0.0
    %765 = vmatprep.subr.mxu0 0.0
    %766 = vmatpush1.msra.mxu0 0.0
    %767 = vmatprep.subr.mxu0 0.0
    %768 = vmatpush1.msra.mxu0 0.0
    %769 = vmatprep.subr.mxu0 0.0
    %770 = vmatpush1.msra.mxu0 0.0
    %771 = vmatprep.subr.mxu0 0.0
    %772 = vmatpush1.msra.mxu0 0.0
    %773 = vmatprep.subr.mxu0 0.0
    %774 = vmatpush1.msra.mxu0 0.0
    %775 = vmatprep.subr.mxu0 0.0
    %776 = vmatpush1.msra.mxu0 0.0
    %777 = vmatprep.subr.mxu0 0.0
    %778 = vmatpush1.msra.mxu0 0.0
    %779 = vmatprep.subr.mxu0 0.0
    %780 = vmatpush1.msra.mxu0 0.0
    %781 = vmatprep.subr.mxu0 0.0
    %782 = vmatpush1.msra.mxu0 0.0
    %783 = vmatprep.subr.mxu0 0.0
    %784 = vmatpush1.msra.mxu0 0.0
    %785 = vmatprep.subr.mxu0 0.0
    %786 = vmatpush1.msra.mxu0 0.0
    %787 = vmatprep.subr.mxu0 0.0
    %788 = vmatpush1.msra.mxu0 0.0
    %789 = vmatprep.subr.mxu0 0.0
    %790 = vmatpush1.msra.mxu0 0.0
    %791 = vmatprep.subr.mxu0 0.0
    %792 = vmatpush1.msra.mxu0 0.0
    %793 = vmatprep.subr.mxu0 0.0
    %794 = vmatpush1.msra.mxu0 0.0
    %795 = vmatprep.mubr.f32.mxu0 0.0
    %796 = vmatmul.mubr.f32.gmra.mrb[0].mxu0 %v729
    %v797 = vpop.f32.mrb[0].mxu0
    %v798 = vadd.f32 %v377, %v797
    %v799 = vpop.f32.mrb[0].mxu0
    %v800 = vadd.f32 %v381, %v799
    %801 = vdwg.mxu0
    %802 = vmatprep.subr.mxu0 0.0
    %803 = vmatpush1.msra.mxu0 %v326
    %804 = vmatprep.subr.mxu0 0.0
    %805 = vmatpush1.msra.mxu0 %v329
    %806 = vmatprep.subr.mxu0 0.0
    %807 = vmatpush1.msra.mxu0 %v332
    %808 = vmatprep.subr.mxu0 0.0
    %809 = vmatpush1.msra.mxu0 %v335
    %810 = vmatprep.subr.mxu0 0.0
    %811 = vmatpush1.msra.mxu0 %v338
    %812 = vmatprep.subr.mxu0 0.0
    %813 = vmatpush1.msra.mxu0 %v341
    %814 = vmatprep.subr.mxu0 0.0
    %815 = vmatpush1.msra.mxu0 %v344
    %816 = vmatprep.subr.mxu0 0.0
    %817 = vmatpush1.msra.mxu0 %v347
    %818 = vmatprep.subr.mxu0 0.0
    %819 = vmatpush1.msra.mxu0 %v350
    %820 = vmatprep.subr.mxu0 0.0
    %821 = vmatpush1.msra.mxu0 %v353
    %822 = vmatprep.subr.mxu0 0.0
    %823 = vmatpush1.msra.mxu0 %v356
    %824 = vmatprep.subr.mxu0 0.0
    %825 = vmatpush1.msra.mxu0 %v359
    %826 = vmatprep.subr.mxu0 0.0
    %827 = vmatpush1.msra.mxu0 %v362
    %828 = vmatprep.subr.mxu0 0.0
    %829 = vmatpush1.msra.mxu0 %v365
    %830 = vmatprep.subr.mxu0 0.0
    %831 = vmatpush1.msra.mxu0 %v368
    %832 = vmatprep.subr.mxu0 0.0
    %833 = vmatpush1.msra.mxu0 %v371
    %834 = vmatprep.subr.mxu0 0.0
    %835 = vmatpush1.msra.mxu0 0.0
    %836 = vmatprep.subr.mxu0 0.0
    %837 = vmatpush1.msra.mxu0 0.0
    %838 = vmatprep.subr.mxu0 0.0
    %839 = vmatpush1.msra.mxu0 0.0
    %840 = vmatprep.subr.mxu0 0.0
    %841 = vmatpush1.msra.mxu0 0.0
    %842 = vmatprep.subr.mxu0 0.0
    %843 = vmatpush1.msra.mxu0 0.0
    %844 = vmatprep.subr.mxu0 0.0
    %845 = vmatpush1.msra.mxu0 0.0
    %846 = vmatprep.subr.mxu0 0.0
    %847 = vmatpush1.msra.mxu0 0.0
    %848 = vmatprep.subr.mxu0 0.0
    %849 = vmatpush1.msra.mxu0 0.0
    %850 = vmatprep.subr.mxu0 0.0
    %851 = vmatpush1.msra.mxu0 0.0
    %852 = vmatprep.subr.mxu0 0.0
    %853 = vmatpush1.msra.mxu0 0.0
    %854 = vmatprep.subr.mxu0 0.0
    %855 = vmatpush1.msra.mxu0 0.0
    %856 = vmatprep.subr.mxu0 0.0
    %857 = vmatpush1.msra.mxu0 0.0
    %858 = vmatprep.subr.mxu0 0.0
    %859 = vmatpush1.msra.mxu0 0.0
    %860 = vmatprep.subr.mxu0 0.0
    %861 = vmatpush1.msra.mxu0 0.0
    %862 = vmatprep.subr.mxu0 0.0
    %863 = vmatpush1.msra.mxu0 0.0
    %864 = vmatprep.subr.mxu0 0.0
    %865 = vmatpush1.msra.mxu0 0.0
    %866 = vmatprep.mubr.f32.mxu0 0.0
    %867 = vmatmul.mubr.f32.gmra.mrb[0].mxu0 %v729
    %v868 = vpop.f32.mrb[0].mxu0
    %v869 = vadd.f32 %v385, %v868
    %v870 = vpop.f32.mrb[0].mxu0
    %871 = vdwg.mxu0
    %v873 = vrot.slane %v798, 4
    %v875 = vadd.f32 %v239, %v873
    %v876 = vxor.u32 %v875, 2147483648
    %v877 = vmul.f32 %v876, 1.442695
    %v878 = vpow.pop %v877
    %v879 = vadd.f32 %v878, 1.0
    %v880 = vrcp.pop %v879
    %v881 = vmul.f32 1.0, %v880
    %v883 = vrot.slane %v800, 4
    %v885 = vadd.f32 %v241, %v883
    %v886 = vxor.u32 %v885, 2147483648
    %v887 = vmul.f32 %v886, 1.442695
    %v888 = vpow.pop %v887
    %v889 = vadd.f32 %v888, 1.0
    %v890 = vrcp.pop %v889
    %v891 = vmul.f32 1.0, %v890
    %v893 = vrot.slane %v869, 4
    %v895 = vmul.f32 %v881, %v893
    %v896 = vadd.f32 %v316, %v895
    %v897 = vtanh.pop %v896
    %v899 = vrot.slane %v897, 2
    %v901 = vsub.f32 %v726, %v899
    %v903 = vrot.slane %v901, 6
    %v905 = vmul.f32 %v891, %v903
    %v906 = vadd.f32 %v897, %v905
    %907 = vst [vmem:[#allocation2] sm:$0x30] %v906
    %v909 = vrot.slane %v906, 4
    %911 = vmatprep.subr.mxu0 %v325
    %912 = vmatpush1.msra.mxu0 %v324
    %913 = vmatprep.subr.mxu0 %v328
    %914 = vmatpush1.msra.mxu0 %v327
    %915 = vmatprep.subr.mxu0 %v331
    %916 = vmatpush1.msra.mxu0 %v330
    %917 = vmatprep.subr.mxu0 %v334
    %918 = vmatpush1.msra.mxu0 %v333
    %919 = vmatprep.subr.mxu0 %v337
    %920 = vmatpush1.msra.mxu0 %v336
    %921 = vmatprep.subr.mxu0 %v340
    %922 = vmatpush1.msra.mxu0 %v339
    %923 = vmatprep.subr.mxu0 %v343
    %924 = vmatpush1.msra.mxu0 %v342
    %925 = vmatprep.subr.mxu0 %v346
    %926 = vmatpush1.msra.mxu0 %v345
    %927 = vmatprep.subr.mxu0 %v349
    %928 = vmatpush1.msra.mxu0 %v348
    %929 = vmatprep.subr.mxu0 %v352
    %930 = vmatpush1.msra.mxu0 %v351
    %931 = vmatprep.subr.mxu0 %v355
    %932 = vmatpush1.msra.mxu0 %v354
    %933 = vmatprep.subr.mxu0 %v358
    %934 = vmatpush1.msra.mxu0 %v357
    %935 = vmatprep.subr.mxu0 %v361
    %936 = vmatpush1.msra.mxu0 %v360
    %937 = vmatprep.subr.mxu0 %v364
    %938 = vmatpush1.msra.mxu0 %v363
    %939 = vmatprep.subr.mxu0 %v367
    %940 = vmatpush1.msra.mxu0 %v366
    %941 = vmatprep.subr.mxu0 %v370
    %942 = vmatpush1.msra.mxu0 %v369
    %943 = vmatprep.subr.mxu0 0.0
    %944 = vmatpush1.msra.mxu0 0.0
    %945 = vmatprep.subr.mxu0 0.0
    %946 = vmatpush1.msra.mxu0 0.0
    %947 = vmatprep.subr.mxu0 0.0
    %948 = vmatpush1.msra.mxu0 0.0
    %949 = vmatprep.subr.mxu0 0.0
    %950 = vmatpush1.msra.mxu0 0.0
    %951 = vmatprep.subr.mxu0 0.0
    %952 = vmatpush1.msra.mxu0 0.0
    %953 = vmatprep.subr.mxu0 0.0
    %954 = vmatpush1.msra.mxu0 0.0
    %955 = vmatprep.subr.mxu0 0.0
    %956 = vmatpush1.msra.mxu0 0.0
    %957 = vmatprep.subr.mxu0 0.0
    %958 = vmatpush1.msra.mxu0 0.0
    %959 = vmatprep.subr.mxu0 0.0
    %960 = vmatpush1.msra.mxu0 0.0
    %961 = vmatprep.subr.mxu0 0.0
    %962 = vmatpush1.msra.mxu0 0.0
    %963 = vmatprep.subr.mxu0 0.0
    %964 = vmatpush1.msra.mxu0 0.0
    %965 = vmatprep.subr.mxu0 0.0
    %966 = vmatpush1.msra.mxu0 0.0
    %967 = vmatprep.subr.mxu0 0.0
    %968 = vmatpush1.msra.mxu0 0.0
    %969 = vmatprep.subr.mxu0 0.0
    %970 = vmatpush1.msra.mxu0 0.0
    %971 = vmatprep.subr.mxu0 0.0
    %972 = vmatpush1.msra.mxu0 0.0
    %973 = vmatprep.subr.mxu0 0.0
    %974 = vmatpush1.msra.mxu0 0.0
    %975 = vmatprep.mubr.f32.mxu0 0.0
    %976 = vmatmul.mubr.f32.gmra.mrb[0].mxu0 %v909
    %v977 = vpop.f32.mrb[0].mxu0
    %v978 = vadd.f32 %v377, %v977
    %v979 = vpop.f32.mrb[0].mxu0
    %v980 = vadd.f32 %v381, %v979
    %981 = vdwg.mxu0
    %982 = vmatprep.subr.mxu0 0.0
    %983 = vmatpush1.msra.mxu0 %v326
    %984 = vmatprep.subr.mxu0 0.0
    %985 = vmatpush1.msra.mxu0 %v329
    %986 = vmatprep.subr.mxu0 0.0
    %987 = vmatpush1.msra.mxu0 %v332
    %988 = vmatprep.subr.mxu0 0.0
    %989 = vmatpush1.msra.mxu0 %v335
    %990 = vmatprep.subr.mxu0 0.0
    %991 = vmatpush1.msra.mxu0 %v338
    %992 = vmatprep.subr.mxu0 0.0
    %993 = vmatpush1.msra.mxu0 %v341
    %994 = vmatprep.subr.mxu0 0.0
    %995 = vmatpush1.msra.mxu0 %v344
    %996 = vmatprep.subr.mxu0 0.0
    %997 = vmatpush1.msra.mxu0 %v347
    %998 = vmatprep.subr.mxu0 0.0
    %999 = vmatpush1.msra.mxu0 %v350
    %1000 = vmatprep.subr.mxu0 0.0
    %1001 = vmatpush1.msra.mxu0 %v353
    %1002 = vmatprep.subr.mxu0 0.0
    %1003 = vmatpush1.msra.mxu0 %v356
    %1004 = vmatprep.subr.mxu0 0.0
    %1005 = vmatpush1.msra.mxu0 %v359
    %1006 = vmatprep.subr.mxu0 0.0
    %1007 = vmatpush1.msra.mxu0 %v362
    %1008 = vmatprep.subr.mxu0 0.0
    %1009 = vmatpush1.msra.mxu0 %v365
    %1010 = vmatprep.subr.mxu0 0.0
    %1011 = vmatpush1.msra.mxu0 %v368
    %1012 = vmatprep.subr.mxu0 0.0
    %1013 = vmatpush1.msra.mxu0 %v371
    %1014 = vmatprep.subr.mxu0 0.0
    %1015 = vmatpush1.msra.mxu0 0.0
    %1016 = vmatprep.subr.mxu0 0.0
    %1017 = vmatpush1.msra.mxu0 0.0
    %1018 = vmatprep.subr.mxu0 0.0
    %1019 = vmatpush1.msra.mxu0 0.0
    %1020 = vmatprep.subr.mxu0 0.0
    %1021 = vmatpush1.msra.mxu0 0.0
    %1022 = vmatprep.subr.mxu0 0.0
    %1023 = vmatpush1.msra.mxu0 0.0
    %1024 = vmatprep.subr.mxu0 0.0
    %1025 = vmatpush1.msra.mxu0 0.0
    %1026 = vmatprep.subr.mxu0 0.0
    %1027 = vmatpush1.msra.mxu0 0.0
    %1028 = vmatprep.subr.mxu0 0.0
    %1029 = vmatpush1.msra.mxu0 0.0
    %1030 = vmatprep.subr.mxu0 0.0
    %1031 = vmatpush1.msra.mxu0 0.0
    %1032 = vmatprep.subr.mxu0 0.0
    %1033 = vmatpush1.msra.mxu0 0.0
    %1034 = vmatprep.subr.mxu0 0.0
    %1035 = vmatpush1.msra.mxu0 0.0
    %1036 = vmatprep.subr.mxu0 0.0
    %1037 = vmatpush1.msra.mxu0 0.0
    %1038 = vmatprep.subr.mxu0 0.0
    %1039 = vmatpush1.msra.mxu0 0.0
    %1040 = vmatprep.subr.mxu0 0.0
    %1041 = vmatpush1.msra.mxu0 0.0
    %1042 = vmatprep.subr.mxu0 0.0
    %1043 = vmatpush1.msra.mxu0 0.0
    %1044 = vmatprep.subr.mxu0 0.0
    %1045 = vmatpush1.msra.mxu0 0.0
    %1046 = vmatprep.mubr.f32.mxu0 0.0
    %1047 = vmatmul.mubr.f32.gmra.mrb[0].mxu0 %v909
    %v1048 = vpop.f32.mrb[0].mxu0
    %v1049 = vadd.f32 %v385, %v1048
    %v1050 = vpop.f32.mrb[0].mxu0
    %1051 = vdwg.mxu0
    %v1053 = vrot.slane %v978, 2
    %v1055 = vadd.f32 %v239, %v1053
    %v1056 = vxor.u32 %v1055, 2147483648
    %v1057 = vmul.f32 %v1056, 1.442695
    %v1058 = vpow.pop %v1057
    %v1059 = vadd.f32 %v1058, 1.0
    %v1060 = vrcp.pop %v1059
    %v1061 = vmul.f32 1.0, %v1060
    %v1063 = vrot.slane %v980, 2
    %v1065 = vadd.f32 %v241, %v1063
    %v1066 = vxor.u32 %v1065, 2147483648
    %v1067 = vmul.f32 %v1066, 1.442695
    %v1068 = vpow.pop %v1067
    %v1069 = vadd.f32 %v1068, 1.0
    %v1070 = vrcp.pop %v1069
    %v1071 = vmul.f32 1.0, %v1070
    %v1073 = vrot.slane %v1049, 2
    %v1075 = vmul.f32 %v1061, %v1073
    %v1076 = vadd.f32 %v316, %v1075
    %v1077 = vtanh.pop %v1076
    %v1079 = vrot.slane %v1077, 2
    %v1081 = vsub.f32 %v906, %v1079
    %v1083 = vrot.slane %v1081, 6
    %v1085 = vmul.f32 %v1071, %v1083
    %v1086 = vadd.f32 %v1077, %v1085
    %1087 = vst [vmem:[#allocation2] sm:$0xc0] %v1086
    %v1089 = vrot.slane %v1086, 6
    %1091 = vmatprep.subr.mxu0 %v325
    %1092 = vmatpush1.msra.mxu0 %v324
    %1093 = vmatprep.subr.mxu0 %v328
    %1094 = vmatpush1.msra.mxu0 %v327
    %1095 = vmatprep.subr.mxu0 %v331
    %1096 = vmatpush1.msra.mxu0 %v330
    %1097 = vmatprep.subr.mxu0 %v334
    %1098 = vmatpush1.msra.mxu0 %v333
    %1099 = vmatprep.subr.mxu0 %v337
    %1100 = vmatpush1.msra.mxu0 %v336
    %1101 = vmatprep.subr.mxu0 %v340
    %1102 = vmatpush1.msra.mxu0 %v339
    %1103 = vmatprep.subr.mxu0 %v343
    %1104 = vmatpush1.msra.mxu0 %v342
    %1105 = vmatprep.subr.mxu0 %v346
    %1106 = vmatpush1.msra.mxu0 %v345
    %1107 = vmatprep.subr.mxu0 %v349
    %1108 = vmatpush1.msra.mxu0 %v348
    %1109 = vmatprep.subr.mxu0 %v352
    %1110 = vmatpush1.msra.mxu0 %v351
    %1111 = vmatprep.subr.mxu0 %v355
    %1112 = vmatpush1.msra.mxu0 %v354
    %1113 = vmatprep.subr.mxu0 %v358
    %1114 = vmatpush1.msra.mxu0 %v357
    %1115 = vmatprep.subr.mxu0 %v361
    %1116 = vmatpush1.msra.mxu0 %v360
    %1117 = vmatprep.subr.mxu0 %v364
    %1118 = vmatpush1.msra.mxu0 %v363
    %1119 = vmatprep.subr.mxu0 %v367
    %1120 = vmatpush1.msra.mxu0 %v366
    %1121 = vmatprep.subr.mxu0 %v370
    %1122 = vmatpush1.msra.mxu0 %v369
    %1123 = vmatprep.subr.mxu0 0.0
    %1124 = vmatpush1.msra.mxu0 0.0
    %1125 = vmatprep.subr.mxu0 0.0
    %1126 = vmatpush1.msra.mxu0 0.0
    %1127 = vmatprep.subr.mxu0 0.0
    %1128 = vmatpush1.msra.mxu0 0.0
    %1129 = vmatprep.subr.mxu0 0.0
    %1130 = vmatpush1.msra.mxu0 0.0
    %1131 = vmatprep.subr.mxu0 0.0
    %1132 = vmatpush1.msra.mxu0 0.0
    %1133 = vmatprep.subr.mxu0 0.0
    %1134 = vmatpush1.msra.mxu0 0.0
    %1135 = vmatprep.subr.mxu0 0.0
    %1136 = vmatpush1.msra.mxu0 0.0
    %1137 = vmatprep.subr.mxu0 0.0
    %1138 = vmatpush1.msra.mxu0 0.0
    %1139 = vmatprep.subr.mxu0 0.0
    %1140 = vmatpush1.msra.mxu0 0.0
    %1141 = vmatprep.subr.mxu0 0.0
    %1142 = vmatpush1.msra.mxu0 0.0
    %1143 = vmatprep.subr.mxu0 0.0
    %1144 = vmatpush1.msra.mxu0 0.0
    %1145 = vmatprep.subr.mxu0 0.0
    %1146 = vmatpush1.msra.mxu0 0.0
    %1147 = vmatprep.subr.mxu0 0.0
    %1148 = vmatpush1.msra.mxu0 0.0
    %1149 = vmatprep.subr.mxu0 0.0
    %1150 = vmatpush1.msra.mxu0 0.0
    %1151 = vmatprep.subr.mxu0 0.0
    %1152 = vmatpush1.msra.mxu0 0.0
    %1153 = vmatprep.subr.mxu0 0.0
    %1154 = vmatpush1.msra.mxu0 0.0
    %1155 = vmatprep.mubr.f32.mxu0 0.0
    %1156 = vmatmul.mubr.f32.gmra.mrb[0].mxu0 %v1089
    %v1157 = vpop.f32.mrb[0].mxu0
    %v1158 = vadd.f32 %v377, %v1157
    %v1159 = vpop.f32.mrb[0].mxu0
    %v1160 = vadd.f32 %v381, %v1159
    %1161 = vdwg.mxu0
    %1162 = vmatprep.subr.mxu0 0.0
    %1163 = vmatpush1.msra.mxu0 %v326
    %1164 = vmatprep.subr.mxu0 0.0
    %1165 = vmatpush1.msra.mxu0 %v329
    %1166 = vmatprep.subr.mxu0 0.0
    %1167 = vmatpush1.msra.mxu0 %v332
    %1168 = vmatprep.subr.mxu0 0.0
    %1169 = vmatpush1.msra.mxu0 %v335
    %1170 = vmatprep.subr.mxu0 0.0
    %1171 = vmatpush1.msra.mxu0 %v338
    %1172 = vmatprep.subr.mxu0 0.0
    %1173 = vmatpush1.msra.mxu0 %v341
    %1174 = vmatprep.subr.mxu0 0.0
    %1175 = vmatpush1.msra.mxu0 %v344
    %1176 = vmatprep.subr.mxu0 0.0
    %1177 = vmatpush1.msra.mxu0 %v347
    %1178 = vmatprep.subr.mxu0 0.0
    %1179 = vmatpush1.msra.mxu0 %v350
    %1180 = vmatprep.subr.mxu0 0.0
    %1181 = vmatpush1.msra.mxu0 %v353
    %1182 = vmatprep.subr.mxu0 0.0
    %1183 = vmatpush1.msra.mxu0 %v356
    %1184 = vmatprep.subr.mxu0 0.0
    %1185 = vmatpush1.msra.mxu0 %v359
    %1186 = vmatprep.subr.mxu0 0.0
    %1187 = vmatpush1.msra.mxu0 %v362
    %1188 = vmatprep.subr.mxu0 0.0
    %1189 = vmatpush1.msra.mxu0 %v365
    %1190 = vmatprep.subr.mxu0 0.0
    %1191 = vmatpush1.msra.mxu0 %v368
    %1192 = vmatprep.subr.mxu0 0.0
    %1193 = vmatpush1.msra.mxu0 %v371
    %1194 = vmatprep.subr.mxu0 0.0
    %1195 = vmatpush1.msra.mxu0 0.0
    %1196 = vmatprep.subr.mxu0 0.0
    %1197 = vmatpush1.msra.mxu0 0.0
    %1198 = vmatprep.subr.mxu0 0.0
    %1199 = vmatpush1.msra.mxu0 0.0
    %1200 = vmatprep.subr.mxu0 0.0
    %1201 = vmatpush1.msra.mxu0 0.0
    %1202 = vmatprep.subr.mxu0 0.0
    %1203 = vmatpush1.msra.mxu0 0.0
    %1204 = vmatprep.subr.mxu0 0.0
    %1205 = vmatpush1.msra.mxu0 0.0
    %1206 = vmatprep.subr.mxu0 0.0
    %1207 = vmatpush1.msra.mxu0 0.0
    %1208 = vmatprep.subr.mxu0 0.0
    %1209 = vmatpush1.msra.mxu0 0.0
    %1210 = vmatprep.subr.mxu0 0.0
    %1211 = vmatpush1.msra.mxu0 0.0
    %1212 = vmatprep.subr.mxu0 0.0
    %1213 = vmatpush1.msra.mxu0 0.0
    %1214 = vmatprep.subr.mxu0 0.0
    %1215 = vmatpush1.msra.mxu0 0.0
    %1216 = vmatprep.subr.mxu0 0.0
    %1217 = vmatpush1.msra.mxu0 0.0
    %1218 = vmatprep.subr.mxu0 0.0
    %1219 = vmatpush1.msra.mxu0 0.0
    %1220 = vmatprep.subr.mxu0 0.0
    %1221 = vmatpush1.msra.mxu0 0.0
    %1222 = vmatprep.subr.mxu0 0.0
    %1223 = vmatpush1.msra.mxu0 0.0
    %1224 = vmatprep.subr.mxu0 0.0
    %1225 = vmatpush1.msra.mxu0 0.0
    %1226 = vmatprep.mubr.f32.mxu0 0.0
    %1227 = vmatmul.mubr.f32.gmra.mrb[0].mxu0 %v1089
    %v1228 = vpop.f32.mrb[0].mxu0
    %v1229 = vadd.f32 %v385, %v1228
    %v1230 = vpop.f32.mrb[0].mxu0
    %1231 = vdwg.mxu0
    %v1232 = vadd.f32 %v245, %v1158
    %v1233 = vxor.u32 %v1232, 2147483648
    %v1234 = vmul.f32 %v1233, 1.442695
    %v1235 = vpow.pop %v1234
    %v1236 = vadd.f32 %v1235, 1.0
    %v1237 = vrcp.pop %v1236
    %v1238 = vmul.f32 1.0, %v1237
    %v1239 = vadd.f32 %v247, %v1160
    %v1240 = vxor.u32 %v1239, 2147483648
    %v1241 = vmul.f32 %v1240, 1.442695
    %v1242 = vpow.pop %v1241
    %v1243 = vadd.f32 %v1242, 1.0
    %v1244 = vrcp.pop %v1243
    %v1245 = vmul.f32 1.0, %v1244
    %v1246 = vmul.f32 %v1238, %v1229
    %v1247 = vadd.f32 %v321, %v1246
    %v1248 = vtanh.pop %v1247
    %v1250 = vrot.slane %v1248, 2
    %v1252 = vsub.f32 %v1086, %v1250
    %v1254 = vrot.slane %v1252, 6
    %v1256 = vmul.f32 %v1245, %v1254
    %v1257 = vadd.f32 %v1248, %v1256
    %1258 = vst [vmem:[#allocation2 + $0x8] sm:$0x3] %v1257
    %1259 = vmatprep.subr.mxu0 %v325
    %1260 = vmatpush1.msra.mxu0 %v324
    %1261 = vmatprep.subr.mxu0 %v328
    %1262 = vmatpush1.msra.mxu0 %v327
    %1263 = vmatprep.subr.mxu0 %v331
    %1264 = vmatpush1.msra.mxu0 %v330
    %1265 = vmatprep.subr.mxu0 %v334
    %1266 = vmatpush1.msra.mxu0 %v333
    %1267 = vmatprep.subr.mxu0 %v337
    %1268 = vmatpush1.msra.mxu0 %v336
    %1269 = vmatprep.subr.mxu0 %v340
    %1270 = vmatpush1.msra.mxu0 %v339
    %1271 = vmatprep.subr.mxu0 %v343
    %1272 = vmatpush1.msra.mxu0 %v342
    %1273 = vmatprep.subr.mxu0 %v346
    %1274 = vmatpush1.msra.mxu0 %v345
    %1275 = vmatprep.subr.mxu0 %v349
    %1276 = vmatpush1.msra.mxu0 %v348
    %1277 = vmatprep.subr.mxu0 %v352
    %1278 = vmatpush1.msra.mxu0 %v351
    %1279 = vmatprep.subr.mxu0 %v355
    %1280 = vmatpush1.msra.mxu0 %v354
    %1281 = vmatprep.subr.mxu0 %v358
    %1282 = vmatpush1.msra.mxu0 %v357
    %1283 = vmatprep.subr.mxu0 %v361
    %1284 = vmatpush1.msra.mxu0 %v360
    %1285 = vmatprep.subr.mxu0 %v364
    %1286 = vmatpush1.msra.mxu0 %v363
    %1287 = vmatprep.subr.mxu0 %v367
    %1288 = vmatpush1.msra.mxu0 %v366
    %1289 = vmatprep.subr.mxu0 %v370
    %1290 = vmatpush1.msra.mxu0 %v369
    %1291 = vmatprep.subr.mxu0 0.0
    %1292 = vmatpush1.msra.mxu0 0.0
    %1293 = vmatprep.subr.mxu0 0.0
    %1294 = vmatpush1.msra.mxu0 0.0
    %1295 = vmatprep.subr.mxu0 0.0
    %1296 = vmatpush1.msra.mxu0 0.0
    %1297 = vmatprep.subr.mxu0 0.0
    %1298 = vmatpush1.msra.mxu0 0.0
    %1299 = vmatprep.subr.mxu0 0.0
    %1300 = vmatpush1.msra.mxu0 0.0
    %1301 = vmatprep.subr.mxu0 0.0
    %1302 = vmatpush1.msra.mxu0 0.0
    %1303 = vmatprep.subr.mxu0 0.0
    %1304 = vmatpush1.msra.mxu0 0.0
    %1305 = vmatprep.subr.mxu0 0.0
    %1306 = vmatpush1.msra.mxu0 0.0
    %1307 = vmatprep.subr.mxu0 0.0
    %1308 = vmatpush1.msra.mxu0 0.0
    %1309 = vmatprep.subr.mxu0 0.0
    %1310 = vmatpush1.msra.mxu0 0.0
    %1311 = vmatprep.subr.mxu0 0.0
    %1312 = vmatpush1.msra.mxu0 0.0
    %1313 = vmatprep.subr.mxu0 0.0
    %1314 = vmatpush1.msra.mxu0 0.0
    %1315 = vmatprep.subr.mxu0 0.0
    %1316 = vmatpush1.msra.mxu0 0.0
    %1317 = vmatprep.subr.mxu0 0.0
    %1318 = vmatpush1.msra.mxu0 0.0
    %1319 = vmatprep.subr.mxu0 0.0
    %1320 = vmatpush1.msra.mxu0 0.0
    %1321 = vmatprep.subr.mxu0 0.0
    %1322 = vmatpush1.msra.mxu0 0.0
    %1323 = vmatprep.mubr.f32.mxu0 0.0
    %1324 = vmatmul.mubr.f32.gmra.mrb[0].mxu0 %v1257
    %v1325 = vpop.f32.mrb[0].mxu0
    %v1326 = vadd.f32 %v377, %v1325
    %v1327 = vpop.f32.mrb[0].mxu0
    %v1328 = vadd.f32 %v381, %v1327
    %1329 = vdwg.mxu0
    %1330 = vmatprep.subr.mxu0 0.0
    %1331 = vmatpush1.msra.mxu0 %v326
    %1332 = vmatprep.subr.mxu0 0.0
    %1333 = vmatpush1.msra.mxu0 %v329
    %1334 = vmatprep.subr.mxu0 0.0
    %1335 = vmatpush1.msra.mxu0 %v332
    %1336 = vmatprep.subr.mxu0 0.0
    %1337 = vmatpush1.msra.mxu0 %v335
    %1338 = vmatprep.subr.mxu0 0.0
    %1339 = vmatpush1.msra.mxu0 %v338
    %1340 = vmatprep.subr.mxu0 0.0
    %1341 = vmatpush1.msra.mxu0 %v341
    %1342 = vmatprep.subr.mxu0 0.0
    %1343 = vmatpush1.msra.mxu0 %v344
    %1344 = vmatprep.subr.mxu0 0.0
    %1345 = vmatpush1.msra.mxu0 %v347
    %1346 = vmatprep.subr.mxu0 0.0
    %1347 = vmatpush1.msra.mxu0 %v350
    %1348 = vmatprep.subr.mxu0 0.0
    %1349 = vmatpush1.msra.mxu0 %v353
    %1350 = vmatprep.subr.mxu0 0.0
    %1351 = vmatpush1.msra.mxu0 %v356
    %1352 = vmatprep.subr.mxu0 0.0
    %1353 = vmatpush1.msra.mxu0 %v359
    %1354 = vmatprep.subr.mxu0 0.0
    %1355 = vmatpush1.msra.mxu0 %v362
    %1356 = vmatprep.subr.mxu0 0.0
    %1357 = vmatpush1.msra.mxu0 %v365
    %1358 = vmatprep.subr.mxu0 0.0
    %1359 = vmatpush1.msra.mxu0 %v368
    %1360 = vmatprep.subr.mxu0 0.0
    %1361 = vmatpush1.msra.mxu0 %v371
    %1362 = vmatprep.subr.mxu0 0.0
    %1363 = vmatpush1.msra.mxu0 0.0
    %1364 = vmatprep.subr.mxu0 0.0
    %1365 = vmatpush1.msra.mxu0 0.0
    %1366 = vmatprep.subr.mxu0 0.0
    %1367 = vmatpush1.msra.mxu0 0.0
    %1368 = vmatprep.subr.mxu0 0.0
    %1369 = vmatpush1.msra.mxu0 0.0
    %1370 = vmatprep.subr.mxu0 0.0
    %1371 = vmatpush1.msra.mxu0 0.0
    %1372 = vmatprep.subr.mxu0 0.0
    %1373 = vmatpush1.msra.mxu0 0.0
    %1374 = vmatprep.subr.mxu0 0.0
    %1375 = vmatpush1.msra.mxu0 0.0
    %1376 = vmatprep.subr.mxu0 0.0
    %1377 = vmatpush1.msra.mxu0 0.0
    %1378 = vmatprep.subr.mxu0 0.0
    %1379 = vmatpush1.msra.mxu0 0.0
    %1380 = vmatprep.subr.mxu0 0.0
    %1381 = vmatpush1.msra.mxu0 0.0
    %1382 = vmatprep.subr.mxu0 0.0
    %1383 = vmatpush1.msra.mxu0 0.0
    %1384 = vmatprep.subr.mxu0 0.0
    %1385 = vmatpush1.msra.mxu0 0.0
    %1386 = vmatprep.subr.mxu0 0.0
    %1387 = vmatpush1.msra.mxu0 0.0
    %1388 = vmatprep.subr.mxu0 0.0
    %1389 = vmatpush1.msra.mxu0 0.0
    %1390 = vmatprep.subr.mxu0 0.0
    %1391 = vmatpush1.msra.mxu0 0.0
    %1392 = vmatprep.subr.mxu0 0.0
    %1393 = vmatpush1.msra.mxu0 0.0
    %1394 = vmatprep.mubr.f32.mxu0 0.0
    %1395 = vmatmul.mubr.f32.gmra.mrb[0].mxu0 %v1257
    %v1396 = vpop.f32.mrb[0].mxu0
    %v1397 = vadd.f32 %v385, %v1396
    %v1398 = vpop.f32.mrb[0].mxu0
    %1399 = vdwg.mxu0
    %v1401 = vrot.slane %v1326, 6
    %v1403 = vadd.f32 %v245, %v1401
    %v1404 = vxor.u32 %v1403, 2147483648
    %v1405 = vmul.f32 %v1404, 1.442695
    %v1406 = vpow.pop %v1405
    %v1407 = vadd.f32 %v1406, 1.0
    %v1408 = vrcp.pop %v1407
    %v1409 = vmul.f32 1.0, %v1408
    %v1411 = vrot.slane %v1328, 6
    %v1413 = vadd.f32 %v247, %v1411
    %v1414 = vxor.u32 %v1413, 2147483648
    %v1415 = vmul.f32 %v1414, 1.442695
    %v1416 = vpow.pop %v1415
    %v1417 = vadd.f32 %v1416, 1.0
    %v1418 = vrcp.pop %v1417
    %v1419 = vmul.f32 1.0, %v1418
    %v1421 = vrot.slane %v1397, 6
    %v1423 = vmul.f32 %v1409, %v1421
    %v1424 = vadd.f32 %v321, %v1423
    %v1425 = vtanh.pop %v1424
    %v1427 = vrot.slane %v1425, 2
    %v1429 = vsub.f32 %v1257, %v1427
    %v1431 = vrot.slane %v1429, 6
    %v1433 = vmul.f32 %v1419, %v1431
    %v1434 = vadd.f32 %v1425, %v1433
    %1435 = vst [vmem:[#allocation2 + $0x8] sm:$0xc] %v1434
    %v1437 = vrot.slane %v1434, 2
    %1439 = vmatprep.subr.mxu0 %v325
    %1440 = vmatpush1.msra.mxu0 %v324
    %1441 = vmatprep.subr.mxu0 %v328
    %1442 = vmatpush1.msra.mxu0 %v327
    %1443 = vmatprep.subr.mxu0 %v331
    %1444 = vmatpush1.msra.mxu0 %v330
    %1445 = vmatprep.subr.mxu0 %v334
    %1446 = vmatpush1.msra.mxu0 %v333
    %1447 = vmatprep.subr.mxu0 %v337
    %1448 = vmatpush1.msra.mxu0 %v336
    %1449 = vmatprep.subr.mxu0 %v340
    %1450 = vmatpush1.msra.mxu0 %v339
    %1451 = vmatprep.subr.mxu0 %v343
    %1452 = vmatpush1.msra.mxu0 %v342
    %1453 = vmatprep.subr.mxu0 %v346
    %1454 = vmatpush1.msra.mxu0 %v345
    %1455 = vmatprep.subr.mxu0 %v349
    %1456 = vmatpush1.msra.mxu0 %v348
    %1457 = vmatprep.subr.mxu0 %v352
    %1458 = vmatpush1.msra.mxu0 %v351
    %1459 = vmatprep.subr.mxu0 %v355
    %1460 = vmatpush1.msra.mxu0 %v354
    %1461 = vmatprep.subr.mxu0 %v358
    %1462 = vmatpush1.msra.mxu0 %v357
    %1463 = vmatprep.subr.mxu0 %v361
    %1464 = vmatpush1.msra.mxu0 %v360
    %1465 = vmatprep.subr.mxu0 %v364
    %1466 = vmatpush1.msra.mxu0 %v363
    %1467 = vmatprep.subr.mxu0 %v367
    %1468 = vmatpush1.msra.mxu0 %v366
    %1469 = vmatprep.subr.mxu0 %v370
    %1470 = vmatpush1.msra.mxu0 %v369
    %1471 = vmatprep.subr.mxu0 0.0
    %1472 = vmatpush1.msra.mxu0 0.0
    %1473 = vmatprep.subr.mxu0 0.0
    %1474 = vmatpush1.msra.mxu0 0.0
    %1475 = vmatprep.subr.mxu0 0.0
    %1476 = vmatpush1.msra.mxu0 0.0
    %1477 = vmatprep.subr.mxu0 0.0
    %1478 = vmatpush1.msra.mxu0 0.0
    %1479 = vmatprep.subr.mxu0 0.0
    %1480 = vmatpush1.msra.mxu0 0.0
    %1481 = vmatprep.subr.mxu0 0.0
    %1482 = vmatpush1.msra.mxu0 0.0
    %1483 = vmatprep.subr.mxu0 0.0
    %1484 = vmatpush1.msra.mxu0 0.0
    %1485 = vmatprep.subr.mxu0 0.0
    %1486 = vmatpush1.msra.mxu0 0.0
    %1487 = vmatprep.subr.mxu0 0.0
    %1488 = vmatpush1.msra.mxu0 0.0
    %1489 = vmatprep.subr.mxu0 0.0
    %1490 = vmatpush1.msra.mxu0 0.0
    %1491 = vmatprep.subr.mxu0 0.0
    %1492 = vmatpush1.msra.mxu0 0.0
    %1493 = vmatprep.subr.mxu0 0.0
    %1494 = vmatpush1.msra.mxu0 0.0
    %1495 = vmatprep.subr.mxu0 0.0
    %1496 = vmatpush1.msra.mxu0 0.0
    %1497 = vmatprep.subr.mxu0 0.0
    %1498 = vmatpush1.msra.mxu0 0.0
    %1499 = vmatprep.subr.mxu0 0.0
    %1500 = vmatpush1.msra.mxu0 0.0
    %1501 = vmatprep.subr.mxu0 0.0
    %1502 = vmatpush1.msra.mxu0 0.0
    %1503 = vmatprep.mubr.f32.mxu0 0.0
    %1504 = vmatmul.mubr.f32.gmra.mrb[0].mxu0 %v1437
    %v1505 = vpop.f32.mrb[0].mxu0
    %v1506 = vadd.f32 %v377, %v1505
    %v1507 = vpop.f32.mrb[0].mxu0
    %v1508 = vadd.f32 %v381, %v1507
    %1509 = vdwg.mxu0
    %1510 = vmatprep.subr.mxu0 0.0
    %1511 = vmatpush1.msra.mxu0 %v326
    %1512 = vmatprep.subr.mxu0 0.0
    %1513 = vmatpush1.msra.mxu0 %v329
    %1514 = vmatprep.subr.mxu0 0.0
    %1515 = vmatpush1.msra.mxu0 %v332
    %1516 = vmatprep.subr.mxu0 0.0
    %1517 = vmatpush1.msra.mxu0 %v335
    %1518 = vmatprep.subr.mxu0 0.0
    %1519 = vmatpush1.msra.mxu0 %v338
    %1520 = vmatprep.subr.mxu0 0.0
    %1521 = vmatpush1.msra.mxu0 %v341
    %1522 = vmatprep.subr.mxu0 0.0
    %1523 = vmatpush1.msra.mxu0 %v344
    %1524 = vmatprep.subr.mxu0 0.0
    %1525 = vmatpush1.msra.mxu0 %v347
    %1526 = vmatprep.subr.mxu0 0.0
    %1527 = vmatpush1.msra.mxu0 %v350
    %1528 = vmatprep.subr.mxu0 0.0
    %1529 = vmatpush1.msra.mxu0 %v353
    %1530 = vmatprep.subr.mxu0 0.0
    %1531 = vmatpush1.msra.mxu0 %v356
    %1532 = vmatprep.subr.mxu0 0.0
    %1533 = vmatpush1.msra.mxu0 %v359
    %1534 = vmatprep.subr.mxu0 0.0
    %1535 = vmatpush1.msra.mxu0 %v362
    %1536 = vmatprep.subr.mxu0 0.0
    %1537 = vmatpush1.msra.mxu0 %v365
    %1538 = vmatprep.subr.mxu0 0.0
    %1539 = vmatpush1.msra.mxu0 %v368
    %1540 = vmatprep.subr.mxu0 0.0
    %1541 = vmatpush1.msra.mxu0 %v371
    %1542 = vmatprep.subr.mxu0 0.0
    %1543 = vmatpush1.msra.mxu0 0.0
    %1544 = vmatprep.subr.mxu0 0.0
    %1545 = vmatpush1.msra.mxu0 0.0
    %1546 = vmatprep.subr.mxu0 0.0
    %1547 = vmatpush1.msra.mxu0 0.0
    %1548 = vmatprep.subr.mxu0 0.0
    %1549 = vmatpush1.msra.mxu0 0.0
    %1550 = vmatprep.subr.mxu0 0.0
    %1551 = vmatpush1.msra.mxu0 0.0
    %1552 = vmatprep.subr.mxu0 0.0
    %1553 = vmatpush1.msra.mxu0 0.0
    %1554 = vmatprep.subr.mxu0 0.0
    %1555 = vmatpush1.msra.mxu0 0.0
    %1556 = vmatprep.subr.mxu0 0.0
    %1557 = vmatpush1.msra.mxu0 0.0
    %1558 = vmatprep.subr.mxu0 0.0
    %1559 = vmatpush1.msra.mxu0 0.0
    %1560 = vmatprep.subr.mxu0 0.0
    %1561 = vmatpush1.msra.mxu0 0.0
    %1562 = vmatprep.subr.mxu0 0.0
    %1563 = vmatpush1.msra.mxu0 0.0
    %1564 = vmatprep.subr.mxu0 0.0
    %1565 = vmatpush1.msra.mxu0 0.0
    %1566 = vmatprep.subr.mxu0 0.0
    %1567 = vmatpush1.msra.mxu0 0.0
    %1568 = vmatprep.subr.mxu0 0.0
    %1569 = vmatpush1.msra.mxu0 0.0
    %1570 = vmatprep.subr.mxu0 0.0
    %1571 = vmatpush1.msra.mxu0 0.0
    %1572 = vmatprep.subr.mxu0 0.0
    %1573 = vmatpush1.msra.mxu0 0.0
    %1574 = vmatprep.mubr.f32.mxu0 0.0
    %1575 = vmatmul.mubr.f32.gmra.mrb[0].mxu0 %v1437
    %v1576 = vpop.f32.mrb[0].mxu0
    %v1577 = vadd.f32 %v385, %v1576
    %v1578 = vpop.f32.mrb[0].mxu0
    %1579 = vdwg.mxu0
    %v1581 = vrot.slane %v1506, 4
    %v1583 = vadd.f32 %v245, %v1581
    %v1584 = vxor.u32 %v1583, 2147483648
    %v1585 = vmul.f32 %v1584, 1.442695
    %v1586 = vpow.pop %v1585
    %v1587 = vadd.f32 %v1586, 1.0
    %v1588 = vrcp.pop %v1587
    %v1589 = vmul.f32 1.0, %v1588
    %v1591 = vrot.slane %v1508, 4
    %v1593 = vadd.f32 %v247, %v1591
    %v1594 = vxor.u32 %v1593, 2147483648
    %v1595 = vmul.f32 %v1594, 1.442695
    %v1596 = vpow.pop %v1595
    %v1597 = vadd.f32 %v1596, 1.0
    %v1598 = vrcp.pop %v1597
    %v1599 = vmul.f32 1.0, %v1598
    %v1601 = vrot.slane %v1577, 4
    %v1603 = vmul.f32 %v1589, %v1601
    %v1604 = vadd.f32 %v321, %v1603
    %v1605 = vtanh.pop %v1604
    %v1607 = vrot.slane %v1605, 2
    %v1609 = vsub.f32 %v1434, %v1607
    %v1611 = vrot.slane %v1609, 6
    %v1613 = vmul.f32 %v1599, %v1611
    %v1614 = vadd.f32 %v1605, %v1613
    %1615 = vst [vmem:[#allocation2 + $0x8] sm:$0x30] %v1614
    %v1617 = vrot.slane %v1614, 4
    %1619 = vmatprep.subr.mxu0 %v325
    %1620 = vmatpush1.msra.mxu0 %v324
    %1621 = vmatprep.subr.mxu0 %v328
    %1622 = vmatpush1.msra.mxu0 %v327
    %1623 = vmatprep.subr.mxu0 %v331
    %1624 = vmatpush1.msra.mxu0 %v330
    %1625 = vmatprep.subr.mxu0 %v334
    %1626 = vmatpush1.msra.mxu0 %v333
    %1627 = vmatprep.subr.mxu0 %v337
    %1628 = vmatpush1.msra.mxu0 %v336
    %1629 = vmatprep.subr.mxu0 %v340
    %1630 = vmatpush1.msra.mxu0 %v339
    %1631 = vmatprep.subr.mxu0 %v343
    %1632 = vmatpush1.msra.mxu0 %v342
    %1633 = vmatprep.subr.mxu0 %v346
    %1634 = vmatpush1.msra.mxu0 %v345
    %1635 = vmatprep.subr.mxu0 %v349
    %1636 = vmatpush1.msra.mxu0 %v348
    %1637 = vmatprep.subr.mxu0 %v352
    %1638 = vmatpush1.msra.mxu0 %v351
    %1639 = vmatprep.subr.mxu0 %v355
    %1640 = vmatpush1.msra.mxu0 %v354
    %1641 = vmatprep.subr.mxu0 %v358
    %1642 = vmatpush1.msra.mxu0 %v357
    %1643 = vmatprep.subr.mxu0 %v361
    %1644 = vmatpush1.msra.mxu0 %v360
    %1645 = vmatprep.subr.mxu0 %v364
    %1646 = vmatpush1.msra.mxu0 %v363
    %1647 = vmatprep.subr.mxu0 %v367
    %1648 = vmatpush1.msra.mxu0 %v366
    %1649 = vmatprep.subr.mxu0 %v370
    %1650 = vmatpush1.msra.mxu0 %v369
    %1651 = vmatprep.subr.mxu0 0.0
    %1652 = vmatpush1.msra.mxu0 0.0
    %1653 = vmatprep.subr.mxu0 0.0
    %1654 = vmatpush1.msra.mxu0 0.0
    %1655 = vmatprep.subr.mxu0 0.0
    %1656 = vmatpush1.msra.mxu0 0.0
    %1657 = vmatprep.subr.mxu0 0.0
    %1658 = vmatpush1.msra.mxu0 0.0
    %1659 = vmatprep.subr.mxu0 0.0
    %1660 = vmatpush1.msra.mxu0 0.0
    %1661 = vmatprep.subr.mxu0 0.0
    %1662 = vmatpush1.msra.mxu0 0.0
    %1663 = vmatprep.subr.mxu0 0.0
    %1664 = vmatpush1.msra.mxu0 0.0
    %1665 = vmatprep.subr.mxu0 0.0
    %1666 = vmatpush1.msra.mxu0 0.0
    %1667 = vmatprep.subr.mxu0 0.0
    %1668 = vmatpush1.msra.mxu0 0.0
    %1669 = vmatprep.subr.mxu0 0.0
    %1670 = vmatpush1.msra.mxu0 0.0
    %1671 = vmatprep.subr.mxu0 0.0
    %1672 = vmatpush1.msra.mxu0 0.0
    %1673 = vmatprep.subr.mxu0 0.0
    %1674 = vmatpush1.msra.mxu0 0.0
    %1675 = vmatprep.subr.mxu0 0.0
    %1676 = vmatpush1.msra.mxu0 0.0
    %1677 = vmatprep.subr.mxu0 0.0
    %1678 = vmatpush1.msra.mxu0 0.0
    %1679 = vmatprep.subr.mxu0 0.0
    %1680 = vmatpush1.msra.mxu0 0.0
    %1681 = vmatprep.subr.mxu0 0.0
    %1682 = vmatpush1.msra.mxu0 0.0
    %1683 = vmatprep.mubr.f32.mxu0 0.0
    %1684 = vmatmul.mubr.f32.gmra.mrb[0].mxu0 %v1617
    %v1685 = vpop.f32.mrb[0].mxu0
    %v1686 = vadd.f32 %v377, %v1685
    %v1687 = vpop.f32.mrb[0].mxu0
    %v1688 = vadd.f32 %v381, %v1687
    %1689 = vdwg.mxu0
    %1690 = vmatprep.subr.mxu0 0.0
    %1691 = vmatpush1.msra.mxu0 %v326
    %1692 = vmatprep.subr.mxu0 0.0
    %1693 = vmatpush1.msra.mxu0 %v329
    %1694 = vmatprep.subr.mxu0 0.0
    %1695 = vmatpush1.msra.mxu0 %v332
    %1696 = vmatprep.subr.mxu0 0.0
    %1697 = vmatpush1.msra.mxu0 %v335
    %1698 = vmatprep.subr.mxu0 0.0
    %1699 = vmatpush1.msra.mxu0 %v338
    %1700 = vmatprep.subr.mxu0 0.0
    %1701 = vmatpush1.msra.mxu0 %v341
    %1702 = vmatprep.subr.mxu0 0.0
    %1703 = vmatpush1.msra.mxu0 %v344
    %1704 = vmatprep.subr.mxu0 0.0
    %1705 = vmatpush1.msra.mxu0 %v347
    %1706 = vmatprep.subr.mxu0 0.0
    %1707 = vmatpush1.msra.mxu0 %v350
    %1708 = vmatprep.subr.mxu0 0.0
    %1709 = vmatpush1.msra.mxu0 %v353
    %1710 = vmatprep.subr.mxu0 0.0
    %1711 = vmatpush1.msra.mxu0 %v356
    %1712 = vmatprep.subr.mxu0 0.0
    %1713 = vmatpush1.msra.mxu0 %v359
    %1714 = vmatprep.subr.mxu0 0.0
    %1715 = vmatpush1.msra.mxu0 %v362
    %1716 = vmatprep.subr.mxu0 0.0
    %1717 = vmatpush1.msra.mxu0 %v365
    %1718 = vmatprep.subr.mxu0 0.0
    %1719 = vmatpush1.msra.mxu0 %v368
    %1720 = vmatprep.subr.mxu0 0.0
    %1721 = vmatpush1.msra.mxu0 %v371
    %1722 = vmatprep.subr.mxu0 0.0
    %1723 = vmatpush1.msra.mxu0 0.0
    %1724 = vmatprep.subr.mxu0 0.0
    %1725 = vmatpush1.msra.mxu0 0.0
    %1726 = vmatprep.subr.mxu0 0.0
    %1727 = vmatpush1.msra.mxu0 0.0
    %1728 = vmatprep.subr.mxu0 0.0
    %1729 = vmatpush1.msra.mxu0 0.0
    %1730 = vmatprep.subr.mxu0 0.0
    %1731 = vmatpush1.msra.mxu0 0.0
    %1732 = vmatprep.subr.mxu0 0.0
    %1733 = vmatpush1.msra.mxu0 0.0
    %1734 = vmatprep.subr.mxu0 0.0
    %1735 = vmatpush1.msra.mxu0 0.0
    %1736 = vmatprep.subr.mxu0 0.0
    %1737 = vmatpush1.msra.mxu0 0.0
    %1738 = vmatprep.subr.mxu0 0.0
    %1739 = vmatpush1.msra.mxu0 0.0
    %1740 = vmatprep.subr.mxu0 0.0
    %1741 = vmatpush1.msra.mxu0 0.0
    %1742 = vmatprep.subr.mxu0 0.0
    %1743 = vmatpush1.msra.mxu0 0.0
    %1744 = vmatprep.subr.mxu0 0.0
    %1745 = vmatpush1.msra.mxu0 0.0
    %1746 = vmatprep.subr.mxu0 0.0
    %1747 = vmatpush1.msra.mxu0 0.0
    %1748 = vmatprep.subr.mxu0 0.0
    %1749 = vmatpush1.msra.mxu0 0.0
    %1750 = vmatprep.subr.mxu0 0.0
    %1751 = vmatpush1.msra.mxu0 0.0
    %1752 = vmatprep.subr.mxu0 0.0
    %1753 = vmatpush1.msra.mxu0 0.0
    %1754 = vmatprep.mubr.f32.mxu0 0.0
    %1755 = vmatmul.mubr.f32.gmra.mrb[0].mxu0 %v1617
    %v1756 = vpop.f32.mrb[0].mxu0
    %v1757 = vadd.f32 %v385, %v1756
    %v1758 = vpop.f32.mrb[0].mxu0
    %1759 = vdwg.mxu0
    %v1761 = vrot.slane %v1686, 2
    %v1763 = vadd.f32 %v245, %v1761
    %v1764 = vxor.u32 %v1763, 2147483648
    %v1765 = vmul.f32 %v1764, 1.442695
    %v1766 = vpow.pop %v1765
    %v1767 = vadd.f32 %v1766, 1.0
    %v1768 = vrcp.pop %v1767
    %v1769 = vmul.f32 1.0, %v1768
    %v1771 = vrot.slane %v1688, 2
    %v1773 = vadd.f32 %v247, %v1771
    %v1774 = vxor.u32 %v1773, 2147483648
    %v1775 = vmul.f32 %v1774, 1.442695
    %v1776 = vpow.pop %v1775
    %v1777 = vadd.f32 %v1776, 1.0
    %v1778 = vrcp.pop %v1777
    %v1779 = vmul.f32 1.0, %v1778
    %v1781 = vrot.slane %v1757, 2
    %v1783 = vmul.f32 %v1769, %v1781
    %v1784 = vadd.f32 %v321, %v1783
    %v1785 = vtanh.pop %v1784
    %v1787 = vrot.slane %v1785, 2
    %v1789 = vsub.f32 %v1614, %v1787
    %v1791 = vrot.slane %v1789, 6
    %v1793 = vmul.f32 %v1779, %v1791
    %v1794 = vadd.f32 %v1785, %v1793
    %1795 = vst [vmem:[#allocation2 + $0x8] sm:$0xc0] %v1794
    %v1796 = vld [vmem:[#allocation2] sm:$0xff]
    %v1797 = vld [vmem:[#allocation2 + $0x8] sm:$0xff]
    %v1798 = vld [vmem:[#allocation9] sm:$0xff]
    %v1799 = vld [vmem:[#allocation9 + $0x8] sm:$0xff]
    %v1800 = vld [vmem:[#allocation9 + $0x10] sm:$0xff]
    %v1801 = vld [vmem:[#allocation9 + $0x18] sm:$0xff]
    %v1802 = vld [vmem:[#allocation9 + $0x20] sm:$0xff]
    %v1803 = vld [vmem:[#allocation9 + $0x28] sm:$0xff]
    %v1804 = vld [vmem:[#allocation9 + $0x30] sm:$0xff]
    %v1805 = vld [vmem:[#allocation9 + $0x38] sm:$0xff]
    %v1806 = vld [vmem:[#allocation9 + $0x40] sm:$0xff]
    %v1807 = vld [vmem:[#allocation9 + $0x48] sm:$0xff]
    %v1808 = vld [vmem:[#allocation9 + $0x50] sm:$0xff]
    %v1809 = vld [vmem:[#allocation9 + $0x58] sm:$0xff]
    %v1810 = vld [vmem:[#allocation9 + $0x60] sm:$0xff]
    %v1811 = vld [vmem:[#allocation9 + $0x68] sm:$0xff]
    %v1812 = vld [vmem:[#allocation9 + $0x70] sm:$0xff]
    %v1813 = vld [vmem:[#allocation9 + $0x78] sm:$0xff]
    %v1814 = vld [vmem:[#allocation9 + $0x80] sm:$0xff]
    %v1815 = vld [vmem:[#allocation9 + $0x88] sm:$0xff]
    %v1816 = vld [vmem:[#allocation9 + $0x90] sm:$0xff]
    %v1817 = vld [vmem:[#allocation9 + $0x98] sm:$0xff]
    %v1818 = vld [vmem:[#allocation9 + $0xa0] sm:$0xff]
    %v1819 = vld [vmem:[#allocation9 + $0xa8] sm:$0xff]
    %v1820 = vld [vmem:[#allocation9 + $0xb0] sm:$0xff]
    %v1821 = vld [vmem:[#allocation9 + $0xb8] sm:$0xff]
    %v1822 = vld [vmem:[#allocation9 + $0xc0] sm:$0xff]
    %v1823 = vld [vmem:[#allocation9 + $0xc8] sm:$0xff]
    %v1824 = vld [vmem:[#allocation9 + $0xd0] sm:$0xff]
    %v1825 = vld [vmem:[#allocation9 + $0xd8] sm:$0xff]
    %v1826 = vld [vmem:[#allocation9 + $0xe0] sm:$0xff]
    %v1827 = vld [vmem:[#allocation9 + $0xe8] sm:$0xff]
    %v1828 = vld [vmem:[#allocation9 + $0xf0] sm:$0xff]
    %v1829 = vld [vmem:[#allocation9 + $0xf8] sm:$0xff]
    %v1830 = vld [vmem:[#allocation9 + $0x100] sm:$0xff]
    %v1831 = vld [vmem:[#allocation9 + $0x108] sm:$0xff]
    %v1832 = vld [vmem:[#allocation9 + $0x110] sm:$0xff]
    %v1833 = vld [vmem:[#allocation9 + $0x118] sm:$0xff]
    %v1834 = vld [vmem:[#allocation9 + $0x120] sm:$0xff]
    %v1835 = vld [vmem:[#allocation9 + $0x128] sm:$0xff]
    %v1836 = vld [vmem:[#allocation9 + $0x130] sm:$0xff]
    %v1837 = vld [vmem:[#allocation9 + $0x138] sm:$0xff]
    %v1838 = vld [vmem:[#allocation9 + $0x140] sm:$0xff]
    %v1839 = vld [vmem:[#allocation9 + $0x148] sm:$0xff]
    %v1840 = vld [vmem:[#allocation9 + $0x150] sm:$0xff]
    %v1841 = vld [vmem:[#allocation9 + $0x158] sm:$0xff]
    %v1842 = vld [vmem:[#allocation9 + $0x160] sm:$0xff]
    %v1843 = vld [vmem:[#allocation9 + $0x168] sm:$0xff]
    %v1844 = vld [vmem:[#allocation9 + $0x170] sm:$0xff]
    %v1845 = vld [vmem:[#allocation9 + $0x178] sm:$0xff]
    %v1846 = vld [vmem:[%s7] sm:$0x7]
    %v1848 = vlaneseq
    %v1849 = vshrl.u32 %v1848, 7
    %v1850 = vsub.s32 0, %v1849
    %v1851 = vrot.slane %v1846, %v1850
    %v1852 = vlaneseq
    %v1853 = vshrl.u32 %v1852, 7
    %v1854 = vsub.s32 1, %v1853
    %v1855 = vrot.slane %v1846, %v1854
    %v1856 = vlaneseq
    %v1857 = vshrl.u32 %v1856, 7
    %v1858 = vsub.s32 2, %v1857
    %v1859 = vrot.slane %v1846, %v1858
    %1863 = vmatprep.subr.mxu0 %v1799
    %1864 = vmatpush1.msra.mxu0 %v1798
    %1865 = vmatprep.subr.mxu0 %v1802
    %1866 = vmatpush1.msra.mxu0 %v1801
    %1867 = vmatprep.subr.mxu0 %v1805
    %1868 = vmatpush1.msra.mxu0 %v1804
    %1869 = vmatprep.subr.mxu0 %v1808
    %1870 = vmatpush1.msra.mxu0 %v1807
    %1871 = vmatprep.subr.mxu0 %v1811
    %1872 = vmatpush1.msra.mxu0 %v1810
    %1873 = vmatprep.subr.mxu0 %v1814
    %1874 = vmatpush1.msra.mxu0 %v1813
    %1875 = vmatprep.subr.mxu0 %v1817
    %1876 = vmatpush1.msra.mxu0 %v1816
    %1877 = vmatprep.subr.mxu0 %v1820
    %1878 = vmatpush1.msra.mxu0 %v1819
    %1879 = vmatprep.subr.mxu0 %v1823
    %1880 = vmatpush1.msra.mxu0 %v1822
    %1881 = vmatprep.subr.mxu0 %v1826
    %1882 = vmatpush1.msra.mxu0 %v1825
    %1883 = vmatprep.subr.mxu0 %v1829
    %1884 = vmatpush1.msra.mxu0 %v1828
    %1885 = vmatprep.subr.mxu0 %v1832
    %1886 = vmatpush1.msra.mxu0 %v1831
    %1887 = vmatprep.subr.mxu0 %v1835
    %1888 = vmatpush1.msra.mxu0 %v1834
    %1889 = vmatprep.subr.mxu0 %v1838
    %1890 = vmatpush1.msra.mxu0 %v1837
    %1891 = vmatprep.subr.mxu0 %v1841
    %1892 = vmatpush1.msra.mxu0 %v1840
    %1893 = vmatprep.subr.mxu0 %v1844
    %1894 = vmatpush1.msra.mxu0 %v1843
    %1895 = vmatprep.subr.mxu0 0.0
    %1896 = vmatpush1.msra.mxu0 0.0
    %1897 = vmatprep.subr.mxu0 0.0
    %1898 = vmatpush1.msra.mxu0 0.0
    %1899 = vmatprep.subr.mxu0 0.0
    %1900 = vmatpush1.msra.mxu0 0.0
    %1901 = vmatprep.subr.mxu0 0.0
    %1902 = vmatpush1.msra.mxu0 0.0
    %1903 = vmatprep.subr.mxu0 0.0
    %1904 = vmatpush1.msra.mxu0 0.0
    %1905 = vmatprep.subr.mxu0 0.0
    %1906 = vmatpush1.msra.mxu0 0.0
    %1907 = vmatprep.subr.mxu0 0.0
    %1908 = vmatpush1.msra.mxu0 0.0
    %1909 = vmatprep.subr.mxu0 0.0
    %1910 = vmatpush1.msra.mxu0 0.0
    %1911 = vmatprep.subr.mxu0 0.0
    %1912 = vmatpush1.msra.mxu0 0.0
    %1913 = vmatprep.subr.mxu0 0.0
    %1914 = vmatpush1.msra.mxu0 0.0
    %1915 = vmatprep.subr.mxu0 0.0
    %1916 = vmatpush1.msra.mxu0 0.0
    %1917 = vmatprep.subr.mxu0 0.0
    %1918 = vmatpush1.msra.mxu0 0.0
    %1919 = vmatprep.subr.mxu0 0.0
    %1920 = vmatpush1.msra.mxu0 0.0
    %1921 = vmatprep.subr.mxu0 0.0
    %1922 = vmatpush1.msra.mxu0 0.0
    %1923 = vmatprep.subr.mxu0 0.0
    %1924 = vmatpush1.msra.mxu0 0.0
    %1925 = vmatprep.subr.mxu0 0.0
    %1926 = vmatpush1.msra.mxu0 0.0
    %1927 = vmatprep.mubr.f32.mxu0 0.0
    %1928 = vmatmul.mubr.f32.gmra.mrb[0].mxu0 %v1796
    %v1929 = vpop.f32.mrb[0].mxu0
    %v1930 = vadd.f32 %v1851, %v1929
    %v1931 = vpop.f32.mrb[0].mxu0
    %v1932 = vadd.f32 %v1855, %v1931
    %1933 = vmatprep.mubr.f32.mxu0 0.0
    %1934 = vmatmul.mubr.f32.gmra.mrb[0].mxu0 %v1797
    %v1935 = vpop.f32.mrb[0].mxu0
    %v1936 = vadd.f32 %v1851, %v1935
    %v1937 = vpop.f32.mrb[0].mxu0
    %v1938 = vadd.f32 %v1855, %v1937
    %1939 = vdwg.mxu0
    %1940 = vmatprep.subr.mxu0 0.0
    %1941 = vmatpush1.msra.mxu0 %v1800
    %1942 = vmatprep.subr.mxu0 0.0
    %1943 = vmatpush1.msra.mxu0 %v1803
    %1944 = vmatprep.subr.mxu0 0.0
    %1945 = vmatpush1.msra.mxu0 %v1806
    %1946 = vmatprep.subr.mxu0 0.0
    %1947 = vmatpush1.msra.mxu0 %v1809
    %1948 = vmatprep.subr.mxu0 0.0
    %1949 = vmatpush1.msra.mxu0 %v1812
    %1950 = vmatprep.subr.mxu0 0.0
    %1951 = vmatpush1.msra.mxu0 %v1815
    %1952 = vmatprep.subr.mxu0 0.0
    %1953 = vmatpush1.msra.mxu0 %v1818
    %1954 = vmatprep.subr.mxu0 0.0
    %1955 = vmatpush1.msra.mxu0 %v1821
    %1956 = vmatprep.subr.mxu0 0.0
    %1957 = vmatpush1.msra.mxu0 %v1824
    %1958 = vmatprep.subr.mxu0 0.0
    %1959 = vmatpush1.msra.mxu0 %v1827
    %1960 = vmatprep.subr.mxu0 0.0
    %1961 = vmatpush1.msra.mxu0 %v1830
    %1962 = vmatprep.subr.mxu0 0.0
    %1963 = vmatpush1.msra.mxu0 %v1833
    %1964 = vmatprep.subr.mxu0 0.0
    %1965 = vmatpush1.msra.mxu0 %v1836
    %1966 = vmatprep.subr.mxu0 0.0
    %1967 = vmatpush1.msra.mxu0 %v1839
    %1968 = vmatprep.subr.mxu0 0.0
    %1969 = vmatpush1.msra.mxu0 %v1842
    %1970 = vmatprep.subr.mxu0 0.0
    %1971 = vmatpush1.msra.mxu0 %v1845
    %1972 = vmatprep.subr.mxu0 0.0
    %1973 = vmatpush1.msra.mxu0 0.0
    %1974 = vmatprep.subr.mxu0 0.0
    %1975 = vmatpush1.msra.mxu0 0.0
    %1976 = vmatprep.subr.mxu0 0.0
    %1977 = vmatpush1.msra.mxu0 0.0
    %1978 = vmatprep.subr.mxu0 0.0
    %1979 = vmatpush1.msra.mxu0 0.0
    %1980 = vmatprep.subr.mxu0 0.0
    %1981 = vmatpush1.msra.mxu0 0.0
    %1982 = vmatprep.subr.mxu0 0.0
    %1983 = vmatpush1.msra.mxu0 0.0
    %1984 = vmatprep.subr.mxu0 0.0
    %1985 = vmatpush1.msra.mxu0 0.0
    %1986 = vmatprep.subr.mxu0 0.0
    %1987 = vmatpush1.msra.mxu0 0.0
    %1988 = vmatprep.subr.mxu0 0.0
    %1989 = vmatpush1.msra.mxu0 0.0
    %1990 = vmatprep.subr.mxu0 0.0
    %1991 = vmatpush1.msra.mxu0 0.0
    %1992 = vmatprep.subr.mxu0 0.0
    %1993 = vmatpush1.msra.mxu0 0.0
    %1994 = vmatprep.subr.mxu0 0.0
    %1995 = vmatpush1.msra.mxu0 0.0
    %1996 = vmatprep.subr.mxu0 0.0
    %1997 = vmatpush1.msra.mxu0 0.0
    %1998 = vmatprep.subr.mxu0 0.0
    %1999 = vmatpush1.msra.mxu0 0.0
    %2000 = vmatprep.subr.mxu0 0.0
    %2001 = vmatpush1.msra.mxu0 0.0
    %2002 = vmatprep.subr.mxu0 0.0
    %2003 = vmatpush1.msra.mxu0 0.0
    %2004 = vmatprep.mubr.f32.mxu0 0.0
    %2005 = vmatmul.mubr.f32.gmra.mrb[0].mxu0 %v1796
    %v2006 = vpop.f32.mrb[0].mxu0
    %v2007 = vadd.f32 %v1859, %v2006
    %v2008 = vpop.f32.mrb[0].mxu0
    %2009 = vmatprep.mubr.f32.mxu0 0.0
    %2010 = vmatmul.mubr.f32.gmra.mrb[0].mxu0 %v1797
    %v2011 = vpop.f32.mrb[0].mxu0
    %v2012 = vadd.f32 %v1859, %v2011
    %v2013 = vpop.f32.mrb[0].mxu0
    %2014 = vdwg.mxu0
    %v2015 = vld [vmem:[#allocation11] sm:$0xff]
    %v2016 = vld [vmem:[#allocation11 + $0x8] sm:$0xff]
    %v2017 = vld [vmem:[#allocation11 + $0x10] sm:$0xff]
    %v2018 = vld [vmem:[#allocation11 + $0x18] sm:$0xff]
    %v2019 = vld [vmem:[#allocation11 + $0x20] sm:$0xff]
    %v2020 = vld [vmem:[#allocation11 + $0x28] sm:$0xff]
    %v2021 = vld [vmem:[#allocation11 + $0x30] sm:$0xff]
    %v2022 = vld [vmem:[#allocation11 + $0x38] sm:$0xff]
    %v2023 = vld [vmem:[#allocation11 + $0x40] sm:$0xff]
    %v2024 = vld [vmem:[#allocation11 + $0x48] sm:$0xff]
    %v2025 = vld [vmem:[#allocation11 + $0x50] sm:$0xff]
    %v2026 = vld [vmem:[#allocation11 + $0x58] sm:$0xff]
    %v2027 = vld [vmem:[#allocation11 + $0x60] sm:$0xff]
    %v2028 = vld [vmem:[#allocation11 + $0x68] sm:$0xff]
    %v2029 = vld [vmem:[#allocation11 + $0x70] sm:$0xff]
    %v2030 = vld [vmem:[#allocation11 + $0x78] sm:$0xff]
    %v2031 = vld [vmem:[#allocation11 + $0x80] sm:$0xff]
    %v2032 = vld [vmem:[#allocation11 + $0x88] sm:$0xff]
    %v2033 = vld [vmem:[#allocation11 + $0x90] sm:$0xff]
    %v2034 = vld [vmem:[#allocation11 + $0x98] sm:$0xff]
    %v2035 = vld [vmem:[#allocation11 + $0xa0] sm:$0xff]
    %v2036 = vld [vmem:[#allocation11 + $0xa8] sm:$0xff]
    %v2037 = vld [vmem:[#allocation11 + $0xb0] sm:$0xff]
    %v2038 = vld [vmem:[#allocation11 + $0xb8] sm:$0xff]
    %v2039 = vld [vmem:[#allocation11 + $0xc0] sm:$0xff]
    %v2040 = vld [vmem:[#allocation11 + $0xc8] sm:$0xff]
    %v2041 = vld [vmem:[#allocation11 + $0xd0] sm:$0xff]
    %v2042 = vld [vmem:[#allocation11 + $0xd8] sm:$0xff]
    %v2043 = vld [vmem:[#allocation11 + $0xe0] sm:$0xff]
    %v2044 = vld [vmem:[#allocation11 + $0xe8] sm:$0xff]
    %v2045 = vld [vmem:[#allocation11 + $0xf0] sm:$0xff]
    %v2046 = vld [vmem:[#allocation11 + $0xf8] sm:$0xff]
    %v2047 = vld [vmem:[#allocation11 + $0x100] sm:$0xff]
    %v2048 = vld [vmem:[#allocation11 + $0x108] sm:$0xff]
    %v2049 = vld [vmem:[#allocation11 + $0x110] sm:$0xff]
    %v2050 = vld [vmem:[#allocation11 + $0x118] sm:$0xff]
    %v2051 = vld [vmem:[#allocation11 + $0x120] sm:$0xff]
    %v2052 = vld [vmem:[#allocation11 + $0x128] sm:$0xff]
    %v2053 = vld [vmem:[#allocation11 + $0x130] sm:$0xff]
    %v2054 = vld [vmem:[#allocation11 + $0x138] sm:$0xff]
    %v2055 = vld [vmem:[#allocation11 + $0x140] sm:$0xff]
    %v2056 = vld [vmem:[#allocation11 + $0x148] sm:$0xff]
    %v2057 = vld [vmem:[#allocation11 + $0x150] sm:$0xff]
    %v2058 = vld [vmem:[#allocation11 + $0x158] sm:$0xff]
    %v2059 = vld [vmem:[#allocation11 + $0x160] sm:$0xff]
    %v2060 = vld [vmem:[#allocation11 + $0x168] sm:$0xff]
    %v2061 = vld [vmem:[#allocation11 + $0x170] sm:$0xff]
    %v2062 = vld [vmem:[#allocation11 + $0x178] sm:$0xff]
    %v2063 = vld [vmem:[%s8] sm:$0x7]
    %v2065 = vlaneseq
    %v2066 = vshrl.u32 %v2065, 7
    %v2067 = vsub.s32 0, %v2066
    %v2068 = vrot.slane %v2063, %v2067
    %v2069 = vlaneseq
    %v2070 = vshrl.u32 %v2069, 7
    %v2071 = vsub.s32 1, %v2070
    %v2072 = vrot.slane %v2063, %v2071
    %v2073 = vlaneseq
    %v2074 = vshrl.u32 %v2073, 7
    %v2075 = vsub.s32 2, %v2074
    %v2076 = vrot.slane %v2063, %v2075
    %2080 = vmatprep.subr.mxu0 %v2016
    %2081 = vmatpush1.msra.mxu0 %v2015
    %2082 = vmatprep.subr.mxu0 %v2019
    %2083 = vmatpush1.msra.mxu0 %v2018
    %2084 = vmatprep.subr.mxu0 %v2022
    %2085 = vmatpush1.msra.mxu0 %v2021
    %2086 = vmatprep.subr.mxu0 %v2025
    %2087 = vmatpush1.msra.mxu0 %v2024
    %2088 = vmatprep.subr.mxu0 %v2028
    %2089 = vmatpush1.msra.mxu0 %v2027
    %2090 = vmatprep.subr.mxu0 %v2031
    %2091 = vmatpush1.msra.mxu0 %v2030
    %2092 = vmatprep.subr.mxu0 %v2034
    %2093 = vmatpush1.msra.mxu0 %v2033
    %2094 = vmatprep.subr.mxu0 %v2037
    %2095 = vmatpush1.msra.mxu0 %v2036
    %2096 = vmatprep.subr.mxu0 %v2040
    %2097 = vmatpush1.msra.mxu0 %v2039
    %2098 = vmatprep.subr.mxu0 %v2043
    %2099 = vmatpush1.msra.mxu0 %v2042
    %2100 = vmatprep.subr.mxu0 %v2046
    %2101 = vmatpush1.msra.mxu0 %v2045
    %2102 = vmatprep.subr.mxu0 %v2049
    %2103 = vmatpush1.msra.mxu0 %v2048
    %2104 = vmatprep.subr.mxu0 %v2052
    %2105 = vmatpush1.msra.mxu0 %v2051
    %2106 = vmatprep.subr.mxu0 %v2055
    %2107 = vmatpush1.msra.mxu0 %v2054
    %2108 = vmatprep.subr.mxu0 %v2058
    %2109 = vmatpush1.msra.mxu0 %v2057
    %2110 = vmatprep.subr.mxu0 %v2061
    %2111 = vmatpush1.msra.mxu0 %v2060
    %2112 = vmatprep.subr.mxu0 0.0
    %2113 = vmatpush1.msra.mxu0 0.0
    %2114 = vmatprep.subr.mxu0 0.0
    %2115 = vmatpush1.msra.mxu0 0.0
    %2116 = vmatprep.subr.mxu0 0.0
    %2117 = vmatpush1.msra.mxu0 0.0
    %2118 = vmatprep.subr.mxu0 0.0
    %2119 = vmatpush1.msra.mxu0 0.0
    %2120 = vmatprep.subr.mxu0 0.0
    %2121 = vmatpush1.msra.mxu0 0.0
    %2122 = vmatprep.subr.mxu0 0.0
    %2123 = vmatpush1.msra.mxu0 0.0
    %2124 = vmatprep.subr.mxu0 0.0
    %2125 = vmatpush1.msra.mxu0 0.0
    %2126 = vmatprep.subr.mxu0 0.0
    %2127 = vmatpush1.msra.mxu0 0.0
    %2128 = vmatprep.subr.mxu0 0.0
    %2129 = vmatpush1.msra.mxu0 0.0
    %2130 = vmatprep.subr.mxu0 0.0
    %2131 = vmatpush1.msra.mxu0 0.0
    %2132 = vmatprep.subr.mxu0 0.0
    %2133 = vmatpush1.msra.mxu0 0.0
    %2134 = vmatprep.subr.mxu0 0.0
    %2135 = vmatpush1.msra.mxu0 0.0
    %2136 = vmatprep.subr.mxu0 0.0
    %2137 = vmatpush1.msra.mxu0 0.0
    %2138 = vmatprep.subr.mxu0 0.0
    %2139 = vmatpush1.msra.mxu0 0.0
    %2140 = vmatprep.subr.mxu0 0.0
    %2141 = vmatpush1.msra.mxu0 0.0
    %2142 = vmatprep.subr.mxu0 0.0
    %2143 = vmatpush1.msra.mxu0 0.0
    %2144 = vmatprep.mubr.f32.mxu0 0.0
    %2145 = vmatmul.mubr.f32.gmra.mrb[0].mxu0 0.0
    %v2146 = vpop.f32.mrb[0].mxu0
    %v2147 = vadd.f32 %v2068, %v2146
    %v2148 = vpop.f32.mrb[0].mxu0
    %v2149 = vadd.f32 %v2072, %v2148
    %2150 = vdwg.mxu0
    %2151 = vmatprep.subr.mxu0 0.0
    %2152 = vmatpush1.msra.mxu0 %v2017
    %2153 = vmatprep.subr.mxu0 0.0
    %2154 = vmatpush1.msra.mxu0 %v2020
    %2155 = vmatprep.subr.mxu0 0.0
    %2156 = vmatpush1.msra.mxu0 %v2023
    %2157 = vmatprep.subr.mxu0 0.0
    %2158 = vmatpush1.msra.mxu0 %v2026
    %2159 = vmatprep.subr.mxu0 0.0
    %2160 = vmatpush1.msra.mxu0 %v2029
    %2161 = vmatprep.subr.mxu0 0.0
    %2162 = vmatpush1.msra.mxu0 %v2032
    %2163 = vmatprep.subr.mxu0 0.0
    %2164 = vmatpush1.msra.mxu0 %v2035
    %2165 = vmatprep.subr.mxu0 0.0
    %2166 = vmatpush1.msra.mxu0 %v2038
    %2167 = vmatprep.subr.mxu0 0.0
    %2168 = vmatpush1.msra.mxu0 %v2041
    %2169 = vmatprep.subr.mxu0 0.0
    %2170 = vmatpush1.msra.mxu0 %v2044
    %2171 = vmatprep.subr.mxu0 0.0
    %2172 = vmatpush1.msra.mxu0 %v2047
    %2173 = vmatprep.subr.mxu0 0.0
    %2174 = vmatpush1.msra.mxu0 %v2050
    %2175 = vmatprep.subr.mxu0 0.0
    %2176 = vmatpush1.msra.mxu0 %v2053
    %2177 = vmatprep.subr.mxu0 0.0
    %2178 = vmatpush1.msra.mxu0 %v2056
    %2179 = vmatprep.subr.mxu0 0.0
    %2180 = vmatpush1.msra.mxu0 %v2059
    %2181 = vmatprep.subr.mxu0 0.0
    %2182 = vmatpush1.msra.mxu0 %v2062
    %2183 = vmatprep.subr.mxu0 0.0
    %2184 = vmatpush1.msra.mxu0 0.0
    %2185 = vmatprep.subr.mxu0 0.0
    %2186 = vmatpush1.msra.mxu0 0.0
    %2187 = vmatprep.subr.mxu0 0.0
    %2188 = vmatpush1.msra.mxu0 0.0
    %2189 = vmatprep.subr.mxu0 0.0
    %2190 = vmatpush1.msra.mxu0 0.0
    %2191 = vmatprep.subr.mxu0 0.0
    %2192 = vmatpush1.msra.mxu0 0.0
    %2193 = vmatprep.subr.mxu0 0.0
    %2194 = vmatpush1.msra.mxu0 0.0
    %2195 = vmatprep.subr.mxu0 0.0
    %2196 = vmatpush1.msra.mxu0 0.0
    %2197 = vmatprep.subr.mxu0 0.0
    %2198 = vmatpush1.msra.mxu0 0.0
    %2199 = vmatprep.subr.mxu0 0.0
    %2200 = vmatpush1.msra.mxu0 0.0
    %2201 = vmatprep.subr.mxu0 0.0
    %2202 = vmatpush1.msra.mxu0 0.0
    %2203 = vmatprep.subr.mxu0 0.0
    %2204 = vmatpush1.msra.mxu0 0.0
    %2205 = vmatprep.subr.mxu0 0.0
    %2206 = vmatpush1.msra.mxu0 0.0
    %2207 = vmatprep.subr.mxu0 0.0
    %2208 = vmatpush1.msra.mxu0 0.0
    %2209 = vmatprep.subr.mxu0 0.0
    %2210 = vmatpush1.msra.mxu0 0.0
    %2211 = vmatprep.subr.mxu0 0.0
    %2212 = vmatpush1.msra.mxu0 0.0
    %2213 = vmatprep.subr.mxu0 0.0
    %2214 = vmatpush1.msra.mxu0 0.0
    %2215 = vmatprep.mubr.f32.mxu0 0.0
    %2216 = vmatmul.mubr.f32.gmra.mrb[0].mxu0 0.0
    %v2217 = vpop.f32.mrb[0].mxu0
    %v2218 = vadd.f32 %v2076, %v2217
    %v2219 = vpop.f32.mrb[0].mxu0
    %2220 = vdwg.mxu0
    %v2221 = vadd.f32 %v1930, %v2147
    %v2222 = vxor.u32 %v2221, 2147483648
    %v2223 = vmul.f32 %v2222, 1.442695
    %v2224 = vpow.pop %v2223
    %v2225 = vadd.f32 %v2224, 1.0
    %v2226 = vrcp.pop %v2225
    %v2227 = vmul.f32 1.0, %v2226
    %v2228 = vadd.f32 %v1932, %v2149
    %v2229 = vxor.u32 %v2228, 2147483648
    %v2230 = vmul.f32 %v2229, 1.442695
    %v2231 = vpow.pop %v2230
    %v2232 = vadd.f32 %v2231, 1.0
    %v2233 = vrcp.pop %v2232
    %v2234 = vmul.f32 1.0, %v2233
    %v2235 = vmul.f32 %v2227, %v2218
    %v2236 = vadd.f32 %v2007, %v2235
    %v2237 = vtanh.pop %v2236
    %v2238 = vsub.f32 0.0, %v2237
    %v2239 = vmul.f32 %v2234, %v2238
    %v2240 = vadd.f32 %v2237, %v2239
    %2241 = vmatprep.subr.mxu0 %v2016
    %2242 = vmatpush1.msra.mxu0 %v2015
    %2243 = vmatprep.subr.mxu0 %v2019
    %2244 = vmatpush1.msra.mxu0 %v2018
    %2245 = vmatprep.subr.mxu0 %v2022
    %2246 = vmatpush1.msra.mxu0 %v2021
    %2247 = vmatprep.subr.mxu0 %v2025
    %2248 = vmatpush1.msra.mxu0 %v2024
    %2249 = vmatprep.subr.mxu0 %v2028
    %2250 = vmatpush1.msra.mxu0 %v2027
    %2251 = vmatprep.subr.mxu0 %v2031
    %2252 = vmatpush1.msra.mxu0 %v2030
    %2253 = vmatprep.subr.mxu0 %v2034
    %2254 = vmatpush1.msra.mxu0 %v2033
    %2255 = vmatprep.subr.mxu0 %v2037
    %2256 = vmatpush1.msra.mxu0 %v2036
    %2257 = vmatprep.subr.mxu0 %v2040
    %2258 = vmatpush1.msra.mxu0 %v2039
    %2259 = vmatprep.subr.mxu0 %v2043
    %2260 = vmatpush1.msra.mxu0 %v2042
    %2261 = vmatprep.subr.mxu0 %v2046
    %2262 = vmatpush1.msra.mxu0 %v2045
    %2263 = vmatprep.subr.mxu0 %v2049
    %2264 = vmatpush1.msra.mxu0 %v2048
    %2265 = vmatprep.subr.mxu0 %v2052
    %2266 = vmatpush1.msra.mxu0 %v2051
    %2267 = vmatprep.subr.mxu0 %v2055
    %2268 = vmatpush1.msra.mxu0 %v2054
    %2269 = vmatprep.subr.mxu0 %v2058
    %2270 = vmatpush1.msra.mxu0 %v2057
    %2271 = vmatprep.subr.mxu0 %v2061
    %2272 = vmatpush1.msra.mxu0 %v2060
    %2273 = vmatprep.subr.mxu0 0.0
    %2274 = vmatpush1.msra.mxu0 0.0
    %2275 = vmatprep.subr.mxu0 0.0
    %2276 = vmatpush1.msra.mxu0 0.0
    %2277 = vmatprep.subr.mxu0 0.0
    %2278 = vmatpush1.msra.mxu0 0.0
    %2279 = vmatprep.subr.mxu0 0.0
    %2280 = vmatpush1.msra.mxu0 0.0
    %2281 = vmatprep.subr.mxu0 0.0
    %2282 = vmatpush1.msra.mxu0 0.0
    %2283 = vmatprep.subr.mxu0 0.0
    %2284 = vmatpush1.msra.mxu0 0.0
    %2285 = vmatprep.subr.mxu0 0.0
    %2286 = vmatpush1.msra.mxu0 0.0
    %2287 = vmatprep.subr.mxu0 0.0
    %2288 = vmatpush1.msra.mxu0 0.0
    %2289 = vmatprep.subr.mxu0 0.0
    %2290 = vmatpush1.msra.mxu0 0.0
    %2291 = vmatprep.subr.mxu0 0.0
    %2292 = vmatpush1.msra.mxu0 0.0
    %2293 = vmatprep.subr.mxu0 0.0
    %2294 = vmatpush1.msra.mxu0 0.0
    %2295 = vmatprep.subr.mxu0 0.0
    %2296 = vmatpush1.msra.mxu0 0.0
    %2297 = vmatprep.subr.mxu0 0.0
    %2298 = vmatpush1.msra.mxu0 0.0
    %2299 = vmatprep.subr.mxu0 0.0
    %2300 = vmatpush1.msra.mxu0 0.0
    %2301 = vmatprep.subr.mxu0 0.0
    %2302 = vmatpush1.msra.mxu0 0.0
    %2303 = vmatprep.subr.mxu0 0.0
    %2304 = vmatpush1.msra.mxu0 0.0
    %2305 = vmatprep.mubr.f32.mxu0 0.0
    %2306 = vmatmul.mubr.f32.gmra.mrb[0].mxu0 %v2240
    %v2307 = vpop.f32.mrb[0].mxu0
    %v2308 = vadd.f32 %v2068, %v2307
    %v2309 = vpop.f32.mrb[0].mxu0
    %v2310 = vadd.f32 %v2072, %v2309
    %2311 = vdwg.mxu0
    %2312 = vmatprep.subr.mxu0 0.0
    %2313 = vmatpush1.msra.mxu0 %v2017
    %2314 = vmatprep.subr.mxu0 0.0
    %2315 = vmatpush1.msra.mxu0 %v2020
    %2316 = vmatprep.subr.mxu0 0.0
    %2317 = vmatpush1.msra.mxu0 %v2023
    %2318 = vmatprep.subr.mxu0 0.0
    %2319 = vmatpush1.msra.mxu0 %v2026
    %2320 = vmatprep.subr.mxu0 0.0
    %2321 = vmatpush1.msra.mxu0 %v2029
    %2322 = vmatprep.subr.mxu0 0.0
    %2323 = vmatpush1.msra.mxu0 %v2032
    %2324 = vmatprep.subr.mxu0 0.0
    %2325 = vmatpush1.msra.mxu0 %v2035
    %2326 = vmatprep.subr.mxu0 0.0
    %2327 = vmatpush1.msra.mxu0 %v2038
    %2328 = vmatprep.subr.mxu0 0.0
    %2329 = vmatpush1.msra.mxu0 %v2041
    %2330 = vmatprep.subr.mxu0 0.0
    %2331 = vmatpush1.msra.mxu0 %v2044
    %2332 = vmatprep.subr.mxu0 0.0
    %2333 = vmatpush1.msra.mxu0 %v2047
    %2334 = vmatprep.subr.mxu0 0.0
    %2335 = vmatpush1.msra.mxu0 %v2050
    %2336 = vmatprep.subr.mxu0 0.0
    %2337 = vmatpush1.msra.mxu0 %v2053
    %2338 = vmatprep.subr.mxu0 0.0
    %2339 = vmatpush1.msra.mxu0 %v2056
    %2340 = vmatprep.subr.mxu0 0.0
    %2341 = vmatpush1.msra.mxu0 %v2059
    %2342 = vmatprep.subr.mxu0 0.0
    %2343 = vmatpush1.msra.mxu0 %v2062
    %2344 = vmatprep.subr.mxu0 0.0
    %2345 = vmatpush1.msra.mxu0 0.0
    %2346 = vmatprep.subr.mxu0 0.0
    %2347 = vmatpush1.msra.mxu0 0.0
    %2348 = vmatprep.subr.mxu0 0.0
    %2349 = vmatpush1.msra.mxu0 0.0
    %2350 = vmatprep.subr.mxu0 0.0
    %2351 = vmatpush1.msra.mxu0 0.0
    %2352 = vmatprep.subr.mxu0 0.0
    %2353 = vmatpush1.msra.mxu0 0.0
    %2354 = vmatprep.subr.mxu0 0.0
    %2355 = vmatpush1.msra.mxu0 0.0
    %2356 = vmatprep.subr.mxu0 0.0
    %2357 = vmatpush1.msra.mxu0 0.0
    %2358 = vmatprep.subr.mxu0 0.0
    %2359 = vmatpush1.msra.mxu0 0.0
    %2360 = vmatprep.subr.mxu0 0.0
    %2361 = vmatpush1.msra.mxu0 0.0
    %2362 = vmatprep.subr.mxu0 0.0
    %2363 = vmatpush1.msra.mxu0 0.0
    %2364 = vmatprep.subr.mxu0 0.0
    %2365 = vmatpush1.msra.mxu0 0.0
    %2366 = vmatprep.subr.mxu0 0.0
    %2367 = vmatpush1.msra.mxu0 0.0
    %2368 = vmatprep.subr.mxu0 0.0
    %2369 = vmatpush1.msra.mxu0 0.0
    %2370 = vmatprep.subr.mxu0 0.0
    %2371 = vmatpush1.msra.mxu0 0.0
    %2372 = vmatprep.subr.mxu0 0.0
    %2373 = vmatpush1.msra.mxu0 0.0
    %2374 = vmatprep.subr.mxu0 0.0
    %2375 = vmatpush1.msra.mxu0 0.0
    %2376 = vmatprep.mubr.f32.mxu0 0.0
    %2377 = vmatmul.mubr.f32.gmra.mrb[0].mxu0 %v2240
    %v2378 = vpop.f32.mrb[0].mxu0
    %v2379 = vadd.f32 %v2076, %v2378
    %v2380 = vpop.f32.mrb[0].mxu0
    %2381 = vdwg.mxu0
    %v2383 = vrot.slane %v2308, 6
    %v2385 = vadd.f32 %v1930, %v2383
    %v2386 = vxor.u32 %v2385, 2147483648
    %v2387 = vmul.f32 %v2386, 1.442695
    %v2388 = vpow.pop %v2387
    %v2389 = vadd.f32 %v2388, 1.0
    %v2390 = vrcp.pop %v2389
    %v2391 = vmul.f32 1.0, %v2390
    %v2393 = vrot.slane %v2310, 6
    %v2395 = vadd.f32 %v1932, %v2393
    %v2396 = vxor.u32 %v2395, 2147483648
    %v2397 = vmul.f32 %v2396, 1.442695
    %v2398 = vpow.pop %v2397
    %v2399 = vadd.f32 %v2398, 1.0
    %v2400 = vrcp.pop %v2399
    %v2401 = vmul.f32 1.0, %v2400
    %v2403 = vrot.slane %v2379, 6
    %v2405 = vmul.f32 %v2391, %v2403
    %v2406 = vadd.f32 %v2007, %v2405
    %v2407 = vtanh.pop %v2406
    %v2409 = vrot.slane %v2407, 2
    %v2411 = vsub.f32 %v2240, %v2409
    %v2413 = vrot.slane %v2411, 6
    %v2415 = vmul.f32 %v2401, %v2413
    %v2416 = vadd.f32 %v2407, %v2415
    %v2418 = vrot.slane %v2416, 2
    %2420 = vmatprep.subr.mxu0 %v2016
    %2421 = vmatpush1.msra.mxu0 %v2015
    %2422 = vmatprep.subr.mxu0 %v2019
    %2423 = vmatpush1.msra.mxu0 %v2018
    %2424 = vmatprep.subr.mxu0 %v2022
    %2425 = vmatpush1.msra.mxu0 %v2021
    %2426 = vmatprep.subr.mxu0 %v2025
    %2427 = vmatpush1.msra.mxu0 %v2024
    %2428 = vmatprep.subr.mxu0 %v2028
    %2429 = vmatpush1.msra.mxu0 %v2027
    %2430 = vmatprep.subr.mxu0 %v2031
    %2431 = vmatpush1.msra.mxu0 %v2030
    %2432 = vmatprep.subr.mxu0 %v2034
    %2433 = vmatpush1.msra.mxu0 %v2033
    %2434 = vmatprep.subr.mxu0 %v2037
    %2435 = vmatpush1.msra.mxu0 %v2036
    %2436 = vmatprep.subr.mxu0 %v2040
    %2437 = vmatpush1.msra.mxu0 %v2039
    %2438 = vmatprep.subr.mxu0 %v2043
    %2439 = vmatpush1.msra.mxu0 %v2042
    %2440 = vmatprep.subr.mxu0 %v2046
    %2441 = vmatpush1.msra.mxu0 %v2045
    %2442 = vmatprep.subr.mxu0 %v2049
    %2443 = vmatpush1.msra.mxu0 %v2048
    %2444 = vmatprep.subr.mxu0 %v2052
    %2445 = vmatpush1.msra.mxu0 %v2051
    %2446 = vmatprep.subr.mxu0 %v2055
    %2447 = vmatpush1.msra.mxu0 %v2054
    %2448 = vmatprep.subr.mxu0 %v2058
    %2449 = vmatpush1.msra.mxu0 %v2057
    %2450 = vmatprep.subr.mxu0 %v2061
    %2451 = vmatpush1.msra.mxu0 %v2060
    %2452 = vmatprep.subr.mxu0 0.0
    %2453 = vmatpush1.msra.mxu0 0.0
    %2454 = vmatprep.subr.mxu0 0.0
    %2455 = vmatpush1.msra.mxu0 0.0
    %2456 = vmatprep.subr.mxu0 0.0
    %2457 = vmatpush1.msra.mxu0 0.0
    %2458 = vmatprep.subr.mxu0 0.0
    %2459 = vmatpush1.msra.mxu0 0.0
    %2460 = vmatprep.subr.mxu0 0.0
    %2461 = vmatpush1.msra.mxu0 0.0
    %2462 = vmatprep.subr.mxu0 0.0
    %2463 = vmatpush1.msra.mxu0 0.0
    %2464 = vmatprep.subr.mxu0 0.0
    %2465 = vmatpush1.msra.mxu0 0.0
    %2466 = vmatprep.subr.mxu0 0.0
    %2467 = vmatpush1.msra.mxu0 0.0
    %2468 = vmatprep.subr.mxu0 0.0
    %2469 = vmatpush1.msra.mxu0 0.0
    %2470 = vmatprep.subr.mxu0 0.0
    %2471 = vmatpush1.msra.mxu0 0.0
    %2472 = vmatprep.subr.mxu0 0.0
    %2473 = vmatpush1.msra.mxu0 0.0
    %2474 = vmatprep.subr.mxu0 0.0
    %2475 = vmatpush1.msra.mxu0 0.0
    %2476 = vmatprep.subr.mxu0 0.0
    %2477 = vmatpush1.msra.mxu0 0.0
    %2478 = vmatprep.subr.mxu0 0.0
    %2479 = vmatpush1.msra.mxu0 0.0
    %2480 = vmatprep.subr.mxu0 0.0
    %2481 = vmatpush1.msra.mxu0 0.0
    %2482 = vmatprep.subr.mxu0 0.0
    %2483 = vmatpush1.msra.mxu0 0.0
    %2484 = vmatprep.mubr.f32.mxu0 0.0
    %2485 = vmatmul.mubr.f32.gmra.mrb[0].mxu0 %v2418
    %v2486 = vpop.f32.mrb[0].mxu0
    %v2487 = vadd.f32 %v2068, %v2486
    %v2488 = vpop.f32.mrb[0].mxu0
    %v2489 = vadd.f32 %v2072, %v2488
    %2490 = vdwg.mxu0
    %2491 = vmatprep.subr.mxu0 0.0
    %2492 = vmatpush1.msra.mxu0 %v2017
    %2493 = vmatprep.subr.mxu0 0.0
    %2494 = vmatpush1.msra.mxu0 %v2020
    %2495 = vmatprep.subr.mxu0 0.0
    %2496 = vmatpush1.msra.mxu0 %v2023
    %2497 = vmatprep.subr.mxu0 0.0
    %2498 = vmatpush1.msra.mxu0 %v2026
    %2499 = vmatprep.subr.mxu0 0.0
    %2500 = vmatpush1.msra.mxu0 %v2029
    %2501 = vmatprep.subr.mxu0 0.0
    %2502 = vmatpush1.msra.mxu0 %v2032
    %2503 = vmatprep.subr.mxu0 0.0
    %2504 = vmatpush1.msra.mxu0 %v2035
    %2505 = vmatprep.subr.mxu0 0.0
    %2506 = vmatpush1.msra.mxu0 %v2038
    %2507 = vmatprep.subr.mxu0 0.0
    %2508 = vmatpush1.msra.mxu0 %v2041
    %2509 = vmatprep.subr.mxu0 0.0
    %2510 = vmatpush1.msra.mxu0 %v2044
    %2511 = vmatprep.subr.mxu0 0.0
    %2512 = vmatpush1.msra.mxu0 %v2047
    %2513 = vmatprep.subr.mxu0 0.0
    %2514 = vmatpush1.msra.mxu0 %v2050
    %2515 = vmatprep.subr.mxu0 0.0
    %2516 = vmatpush1.msra.mxu0 %v2053
    %2517 = vmatprep.subr.mxu0 0.0
    %2518 = vmatpush1.msra.mxu0 %v2056
    %2519 = vmatprep.subr.mxu0 0.0
    %2520 = vmatpush1.msra.mxu0 %v2059
    %2521 = vmatprep.subr.mxu0 0.0
    %2522 = vmatpush1.msra.mxu0 %v2062
    %2523 = vmatprep.subr.mxu0 0.0
    %2524 = vmatpush1.msra.mxu0 0.0
    %2525 = vmatprep.subr.mxu0 0.0
    %2526 = vmatpush1.msra.mxu0 0.0
    %2527 = vmatprep.subr.mxu0 0.0
    %2528 = vmatpush1.msra.mxu0 0.0
    %2529 = vmatprep.subr.mxu0 0.0
    %2530 = vmatpush1.msra.mxu0 0.0
    %2531 = vmatprep.subr.mxu0 0.0
    %2532 = vmatpush1.msra.mxu0 0.0
    %2533 = vmatprep.subr.mxu0 0.0
    %2534 = vmatpush1.msra.mxu0 0.0
    %2535 = vmatprep.subr.mxu0 0.0
    %2536 = vmatpush1.msra.mxu0 0.0
    %2537 = vmatprep.subr.mxu0 0.0
    %2538 = vmatpush1.msra.mxu0 0.0
    %2539 = vmatprep.subr.mxu0 0.0
    %2540 = vmatpush1.msra.mxu0 0.0
    %2541 = vmatprep.subr.mxu0 0.0
    %2542 = vmatpush1.msra.mxu0 0.0
    %2543 = vmatprep.subr.mxu0 0.0
    %2544 = vmatpush1.msra.mxu0 0.0
    %2545 = vmatprep.subr.mxu0 0.0
    %2546 = vmatpush1.msra.mxu0 0.0
    %2547 = vmatprep.subr.mxu0 0.0
    %2548 = vmatpush1.msra.mxu0 0.0
    %2549 = vmatprep.subr.mxu0 0.0
    %2550 = vmatpush1.msra.mxu0 0.0
    %2551 = vmatprep.subr.mxu0 0.0
    %2552 = vmatpush1.msra.mxu0 0.0
    %2553 = vmatprep.subr.mxu0 0.0
    %2554 = vmatpush1.msra.mxu0 0.0
    %2555 = vmatprep.mubr.f32.mxu0 0.0
    %2556 = vmatmul.mubr.f32.gmra.mrb[0].mxu0 %v2418
    %v2557 = vpop.f32.mrb[0].mxu0
    %v2558 = vadd.f32 %v2076, %v2557
    %v2559 = vpop.f32.mrb[0].mxu0
    %2560 = vdwg.mxu0
    %v2562 = vrot.slane %v2487, 4
    %v2564 = vadd.f32 %v1930, %v2562
    %v2565 = vxor.u32 %v2564, 2147483648
    %v2566 = vmul.f32 %v2565, 1.442695
    %v2567 = vpow.pop %v2566
    %v2568 = vadd.f32 %v2567, 1.0
    %v2569 = vrcp.pop %v2568
    %v2570 = vmul.f32 1.0, %v2569
    %v2572 = vrot.slane %v2489, 4
    %v2574 = vadd.f32 %v1932, %v2572
    %v2575 = vxor.u32 %v2574, 2147483648
    %v2576 = vmul.f32 %v2575, 1.442695
    %v2577 = vpow.pop %v2576
    %v2578 = vadd.f32 %v2577, 1.0
    %v2579 = vrcp.pop %v2578
    %v2580 = vmul.f32 1.0, %v2579
    %v2582 = vrot.slane %v2558, 4
    %v2584 = vmul.f32 %v2570, %v2582
    %v2585 = vadd.f32 %v2007, %v2584
    %v2586 = vtanh.pop %v2585
    %v2588 = vrot.slane %v2586, 2
    %v2590 = vsub.f32 %v2416, %v2588
    %v2592 = vrot.slane %v2590, 6
    %v2594 = vmul.f32 %v2580, %v2592
    %v2595 = vadd.f32 %v2586, %v2594
    %v2597 = vrot.slane %v2595, 4
    %2599 = vmatprep.subr.mxu0 %v2016
    %2600 = vmatpush1.msra.mxu0 %v2015
    %2601 = vmatprep.subr.mxu0 %v2019
    %2602 = vmatpush1.msra.mxu0 %v2018
    %2603 = vmatprep.subr.mxu0 %v2022
    %2604 = vmatpush1.msra.mxu0 %v2021
    %2605 = vmatprep.subr.mxu0 %v2025
    %2606 = vmatpush1.msra.mxu0 %v2024
    %2607 = vmatprep.subr.mxu0 %v2028
    %2608 = vmatpush1.msra.mxu0 %v2027
    %2609 = vmatprep.subr.mxu0 %v2031
    %2610 = vmatpush1.msra.mxu0 %v2030
    %2611 = vmatprep.subr.mxu0 %v2034
    %2612 = vmatpush1.msra.mxu0 %v2033
    %2613 = vmatprep.subr.mxu0 %v2037
    %2614 = vmatpush1.msra.mxu0 %v2036
    %2615 = vmatprep.subr.mxu0 %v2040
    %2616 = vmatpush1.msra.mxu0 %v2039
    %2617 = vmatprep.subr.mxu0 %v2043
    %2618 = vmatpush1.msra.mxu0 %v2042
    %2619 = vmatprep.subr.mxu0 %v2046
    %2620 = vmatpush1.msra.mxu0 %v2045
    %2621 = vmatprep.subr.mxu0 %v2049
    %2622 = vmatpush1.msra.mxu0 %v2048
    %2623 = vmatprep.subr.mxu0 %v2052
    %2624 = vmatpush1.msra.mxu0 %v2051
    %2625 = vmatprep.subr.mxu0 %v2055
    %2626 = vmatpush1.msra.mxu0 %v2054
    %2627 = vmatprep.subr.mxu0 %v2058
    %2628 = vmatpush1.msra.mxu0 %v2057
    %2629 = vmatprep.subr.mxu0 %v2061
    %2630 = vmatpush1.msra.mxu0 %v2060
    %2631 = vmatprep.subr.mxu0 0.0
    %2632 = vmatpush1.msra.mxu0 0.0
    %2633 = vmatprep.subr.mxu0 0.0
    %2634 = vmatpush1.msra.mxu0 0.0
    %2635 = vmatprep.subr.mxu0 0.0
    %2636 = vmatpush1.msra.mxu0 0.0
    %2637 = vmatprep.subr.mxu0 0.0
    %2638 = vmatpush1.msra.mxu0 0.0
    %2639 = vmatprep.subr.mxu0 0.0
    %2640 = vmatpush1.msra.mxu0 0.0
    %2641 = vmatprep.subr.mxu0 0.0
    %2642 = vmatpush1.msra.mxu0 0.0
    %2643 = vmatprep.subr.mxu0 0.0
    %2644 = vmatpush1.msra.mxu0 0.0
    %2645 = vmatprep.subr.mxu0 0.0
    %2646 = vmatpush1.msra.mxu0 0.0
    %2647 = vmatprep.subr.mxu0 0.0
    %2648 = vmatpush1.msra.mxu0 0.0
    %2649 = vmatprep.subr.mxu0 0.0
    %2650 = vmatpush1.msra.mxu0 0.0
    %2651 = vmatprep.subr.mxu0 0.0
    %2652 = vmatpush1.msra.mxu0 0.0
    %2653 = vmatprep.subr.mxu0 0.0
    %2654 = vmatpush1.msra.mxu0 0.0
    %2655 = vmatprep.subr.mxu0 0.0
    %2656 = vmatpush1.msra.mxu0 0.0
    %2657 = vmatprep.subr.mxu0 0.0
    %2658 = vmatpush1.msra.mxu0 0.0
    %2659 = vmatprep.subr.mxu0 0.0
    %2660 = vmatpush1.msra.mxu0 0.0
    %2661 = vmatprep.subr.mxu0 0.0
    %2662 = vmatpush1.msra.mxu0 0.0
    %2663 = vmatprep.mubr.f32.mxu0 0.0
    %2664 = vmatmul.mubr.f32.gmra.mrb[0].mxu0 %v2597
    %v2665 = vpop.f32.mrb[0].mxu0
    %v2666 = vadd.f32 %v2068, %v2665
    %v2667 = vpop.f32.mrb[0].mxu0
    %v2668 = vadd.f32 %v2072, %v2667
    %2669 = vdwg.mxu0
    %2670 = vmatprep.subr.mxu0 0.0
    %2671 = vmatpush1.msra.mxu0 %v2017
    %2672 = vmatprep.subr.mxu0 0.0
    %2673 = vmatpush1.msra.mxu0 %v2020
    %2674 = vmatprep.subr.mxu0 0.0
    %2675 = vmatpush1.msra.mxu0 %v2023
    %2676 = vmatprep.subr.mxu0 0.0
    %2677 = vmatpush1.msra.mxu0 %v2026
    %2678 = vmatprep.subr.mxu0 0.0
    %2679 = vmatpush1.msra.mxu0 %v2029
    %2680 = vmatprep.subr.mxu0 0.0
    %2681 = vmatpush1.msra.mxu0 %v2032
    %2682 = vmatprep.subr.mxu0 0.0
    %2683 = vmatpush1.msra.mxu0 %v2035
    %2684 = vmatprep.subr.mxu0 0.0
    %2685 = vmatpush1.msra.mxu0 %v2038
    %2686 = vmatprep.subr.mxu0 0.0
    %2687 = vmatpush1.msra.mxu0 %v2041
    %2688 = vmatprep.subr.mxu0 0.0
    %2689 = vmatpush1.msra.mxu0 %v2044
    %2690 = vmatprep.subr.mxu0 0.0
    %2691 = vmatpush1.msra.mxu0 %v2047
    %2692 = vmatprep.subr.mxu0 0.0
    %2693 = vmatpush1.msra.mxu0 %v2050
    %2694 = vmatprep.subr.mxu0 0.0
    %2695 = vmatpush1.msra.mxu0 %v2053
    %2696 = vmatprep.subr.mxu0 0.0
    %2697 = vmatpush1.msra.mxu0 %v2056
    %2698 = vmatprep.subr.mxu0 0.0
    %2699 = vmatpush1.msra.mxu0 %v2059
    %2700 = vmatprep.subr.mxu0 0.0
    %2701 = vmatpush1.msra.mxu0 %v2062
    %2702 = vmatprep.subr.mxu0 0.0
    %2703 = vmatpush1.msra.mxu0 0.0
    %2704 = vmatprep.subr.mxu0 0.0
    %2705 = vmatpush1.msra.mxu0 0.0
    %2706 = vmatprep.subr.mxu0 0.0
    %2707 = vmatpush1.msra.mxu0 0.0
    %2708 = vmatprep.subr.mxu0 0.0
    %2709 = vmatpush1.msra.mxu0 0.0
    %2710 = vmatprep.subr.mxu0 0.0
    %2711 = vmatpush1.msra.mxu0 0.0
    %2712 = vmatprep.subr.mxu0 0.0
    %2713 = vmatpush1.msra.mxu0 0.0
    %2714 = vmatprep.subr.mxu0 0.0
    %2715 = vmatpush1.msra.mxu0 0.0
    %2716 = vmatprep.subr.mxu0 0.0
    %2717 = vmatpush1.msra.mxu0 0.0
    %2718 = vmatprep.subr.mxu0 0.0
    %2719 = vmatpush1.msra.mxu0 0.0
    %2720 = vmatprep.subr.mxu0 0.0
    %2721 = vmatpush1.msra.mxu0 0.0
    %2722 = vmatprep.subr.mxu0 0.0
    %2723 = vmatpush1.msra.mxu0 0.0
    %2724 = vmatprep.subr.mxu0 0.0
    %2725 = vmatpush1.msra.mxu0 0.0
    %2726 = vmatprep.subr.mxu0 0.0
    %2727 = vmatpush1.msra.mxu0 0.0
    %2728 = vmatprep.subr.mxu0 0.0
    %2729 = vmatpush1.msra.mxu0 0.0
    %2730 = vmatprep.subr.mxu0 0.0
    %2731 = vmatpush1.msra.mxu0 0.0
    %2732 = vmatprep.subr.mxu0 0.0
    %2733 = vmatpush1.msra.mxu0 0.0
    %2734 = vmatprep.mubr.f32.mxu0 0.0
    %2735 = vmatmul.mubr.f32.gmra.mrb[0].mxu0 %v2597
    %v2736 = vpop.f32.mrb[0].mxu0
    %v2737 = vadd.f32 %v2076, %v2736
    %v2738 = vpop.f32.mrb[0].mxu0
    %2739 = vdwg.mxu0
    %v2741 = vrot.slane %v2666, 2
    %v2743 = vadd.f32 %v1930, %v2741
    %v2744 = vxor.u32 %v2743, 2147483648
    %v2745 = vmul.f32 %v2744, 1.442695
    %v2746 = vpow.pop %v2745
    %v2747 = vadd.f32 %v2746, 1.0
    %v2748 = vrcp.pop %v2747
    %v2749 = vmul.f32 1.0, %v2748
    %v2751 = vrot.slane %v2668, 2
    %v2753 = vadd.f32 %v1932, %v2751
    %v2754 = vxor.u32 %v2753, 2147483648
    %v2755 = vmul.f32 %v2754, 1.442695
    %v2756 = vpow.pop %v2755
    %v2757 = vadd.f32 %v2756, 1.0
    %v2758 = vrcp.pop %v2757
    %v2759 = vmul.f32 1.0, %v2758
    %v2761 = vrot.slane %v2737, 2
    %v2763 = vmul.f32 %v2749, %v2761
    %v2764 = vadd.f32 %v2007, %v2763
    %v2765 = vtanh.pop %v2764
    %v2767 = vrot.slane %v2765, 2
    %v2769 = vsub.f32 %v2595, %v2767
    %v2771 = vrot.slane %v2769, 6
    %v2773 = vmul.f32 %v2759, %v2771
    %v2774 = vadd.f32 %v2765, %v2773
    %v2776 = vrot.slane %v2774, 6
    %2778 = vmatprep.subr.mxu0 %v2016
    %2779 = vmatpush1.msra.mxu0 %v2015
    %2780 = vmatprep.subr.mxu0 %v2019
    %2781 = vmatpush1.msra.mxu0 %v2018
    %2782 = vmatprep.subr.mxu0 %v2022
    %2783 = vmatpush1.msra.mxu0 %v2021
    %2784 = vmatprep.subr.mxu0 %v2025
    %2785 = vmatpush1.msra.mxu0 %v2024
    %2786 = vmatprep.subr.mxu0 %v2028
    %2787 = vmatpush1.msra.mxu0 %v2027
    %2788 = vmatprep.subr.mxu0 %v2031
    %2789 = vmatpush1.msra.mxu0 %v2030
    %2790 = vmatprep.subr.mxu0 %v2034
    %2791 = vmatpush1.msra.mxu0 %v2033
    %2792 = vmatprep.subr.mxu0 %v2037
    %2793 = vmatpush1.msra.mxu0 %v2036
    %2794 = vmatprep.subr.mxu0 %v2040
    %2795 = vmatpush1.msra.mxu0 %v2039
    %2796 = vmatprep.subr.mxu0 %v2043
    %2797 = vmatpush1.msra.mxu0 %v2042
    %2798 = vmatprep.subr.mxu0 %v2046
    %2799 = vmatpush1.msra.mxu0 %v2045
    %2800 = vmatprep.subr.mxu0 %v2049
    %2801 = vmatpush1.msra.mxu0 %v2048
    %2802 = vmatprep.subr.mxu0 %v2052
    %2803 = vmatpush1.msra.mxu0 %v2051
    %2804 = vmatprep.subr.mxu0 %v2055
    %2805 = vmatpush1.msra.mxu0 %v2054
    %2806 = vmatprep.subr.mxu0 %v2058
    %2807 = vmatpush1.msra.mxu0 %v2057
    %2808 = vmatprep.subr.mxu0 %v2061
    %2809 = vmatpush1.msra.mxu0 %v2060
    %2810 = vmatprep.subr.mxu0 0.0
    %2811 = vmatpush1.msra.mxu0 0.0
    %2812 = vmatprep.subr.mxu0 0.0
    %2813 = vmatpush1.msra.mxu0 0.0
    %2814 = vmatprep.subr.mxu0 0.0
    %2815 = vmatpush1.msra.mxu0 0.0
    %2816 = vmatprep.subr.mxu0 0.0
    %2817 = vmatpush1.msra.mxu0 0.0
    %2818 = vmatprep.subr.mxu0 0.0
    %2819 = vmatpush1.msra.mxu0 0.0
    %2820 = vmatprep.subr.mxu0 0.0
    %2821 = vmatpush1.msra.mxu0 0.0
    %2822 = vmatprep.subr.mxu0 0.0
    %2823 = vmatpush1.msra.mxu0 0.0
    %2824 = vmatprep.subr.mxu0 0.0
    %2825 = vmatpush1.msra.mxu0 0.0
    %2826 = vmatprep.subr.mxu0 0.0
    %2827 = vmatpush1.msra.mxu0 0.0
    %2828 = vmatprep.subr.mxu0 0.0
    %2829 = vmatpush1.msra.mxu0 0.0
    %2830 = vmatprep.subr.mxu0 0.0
    %2831 = vmatpush1.msra.mxu0 0.0
    %2832 = vmatprep.subr.mxu0 0.0
    %2833 = vmatpush1.msra.mxu0 0.0
    %2834 = vmatprep.subr.mxu0 0.0
    %2835 = vmatpush1.msra.mxu0 0.0
    %2836 = vmatprep.subr.mxu0 0.0
    %2837 = vmatpush1.msra.mxu0 0.0
    %2838 = vmatprep.subr.mxu0 0.0
    %2839 = vmatpush1.msra.mxu0 0.0
    %2840 = vmatprep.subr.mxu0 0.0
    %2841 = vmatpush1.msra.mxu0 0.0
    %2842 = vmatprep.mubr.f32.mxu0 0.0
    %2843 = vmatmul.mubr.f32.gmra.mrb[0].mxu0 %v2776
    %v2844 = vpop.f32.mrb[0].mxu0
    %v2845 = vadd.f32 %v2068, %v2844
    %v2846 = vpop.f32.mrb[0].mxu0
    %v2847 = vadd.f32 %v2072, %v2846
    %2848 = vdwg.mxu0
    %2849 = vmatprep.subr.mxu0 0.0
    %2850 = vmatpush1.msra.mxu0 %v2017
    %2851 = vmatprep.subr.mxu0 0.0
    %2852 = vmatpush1.msra.mxu0 %v2020
    %2853 = vmatprep.subr.mxu0 0.0
    %2854 = vmatpush1.msra.mxu0 %v2023
    %2855 = vmatprep.subr.mxu0 0.0
    %2856 = vmatpush1.msra.mxu0 %v2026
    %2857 = vmatprep.subr.mxu0 0.0
    %2858 = vmatpush1.msra.mxu0 %v2029
    %2859 = vmatprep.subr.mxu0 0.0
    %2860 = vmatpush1.msra.mxu0 %v2032
    %2861 = vmatprep.subr.mxu0 0.0
    %2862 = vmatpush1.msra.mxu0 %v2035
    %2863 = vmatprep.subr.mxu0 0.0
    %2864 = vmatpush1.msra.mxu0 %v2038
    %2865 = vmatprep.subr.mxu0 0.0
    %2866 = vmatpush1.msra.mxu0 %v2041
    %2867 = vmatprep.subr.mxu0 0.0
    %2868 = vmatpush1.msra.mxu0 %v2044
    %2869 = vmatprep.subr.mxu0 0.0
    %2870 = vmatpush1.msra.mxu0 %v2047
    %2871 = vmatprep.subr.mxu0 0.0
    %2872 = vmatpush1.msra.mxu0 %v2050
    %2873 = vmatprep.subr.mxu0 0.0
    %2874 = vmatpush1.msra.mxu0 %v2053
    %2875 = vmatprep.subr.mxu0 0.0
    %2876 = vmatpush1.msra.mxu0 %v2056
    %2877 = vmatprep.subr.mxu0 0.0
    %2878 = vmatpush1.msra.mxu0 %v2059
    %2879 = vmatprep.subr.mxu0 0.0
    %2880 = vmatpush1.msra.mxu0 %v2062
    %2881 = vmatprep.subr.mxu0 0.0
    %2882 = vmatpush1.msra.mxu0 0.0
    %2883 = vmatprep.subr.mxu0 0.0
    %2884 = vmatpush1.msra.mxu0 0.0
    %2885 = vmatprep.subr.mxu0 0.0
    %2886 = vmatpush1.msra.mxu0 0.0
    %2887 = vmatprep.subr.mxu0 0.0
    %2888 = vmatpush1.msra.mxu0 0.0
    %2889 = vmatprep.subr.mxu0 0.0
    %2890 = vmatpush1.msra.mxu0 0.0
    %2891 = vmatprep.subr.mxu0 0.0
    %2892 = vmatpush1.msra.mxu0 0.0
    %2893 = vmatprep.subr.mxu0 0.0
    %2894 = vmatpush1.msra.mxu0 0.0
    %2895 = vmatprep.subr.mxu0 0.0
    %2896 = vmatpush1.msra.mxu0 0.0
    %2897 = vmatprep.subr.mxu0 0.0
    %2898 = vmatpush1.msra.mxu0 0.0
    %2899 = vmatprep.subr.mxu0 0.0
    %2900 = vmatpush1.msra.mxu0 0.0
    %2901 = vmatprep.subr.mxu0 0.0
    %2902 = vmatpush1.msra.mxu0 0.0
    %2903 = vmatprep.subr.mxu0 0.0
    %2904 = vmatpush1.msra.mxu0 0.0
    %2905 = vmatprep.subr.mxu0 0.0
    %2906 = vmatpush1.msra.mxu0 0.0
    %2907 = vmatprep.subr.mxu0 0.0
    %2908 = vmatpush1.msra.mxu0 0.0
    %2909 = vmatprep.subr.mxu0 0.0
    %2910 = vmatpush1.msra.mxu0 0.0
    %2911 = vmatprep.subr.mxu0 0.0
    %2912 = vmatpush1.msra.mxu0 0.0
    %2913 = vmatprep.mubr.f32.mxu0 0.0
    %2914 = vmatmul.mubr.f32.gmra.mrb[0].mxu0 %v2776
    %v2915 = vpop.f32.mrb[0].mxu0
    %v2916 = vadd.f32 %v2076, %v2915
    %v2917 = vpop.f32.mrb[0].mxu0
    %2918 = vdwg.mxu0
    %v2919 = vadd.f32 %v1936, %v2845
    %v2920 = vxor.u32 %v2919, 2147483648
    %v2921 = vmul.f32 %v2920, 1.442695
    %v2922 = vpow.pop %v2921
    %v2923 = vadd.f32 %v2922, 1.0
    %v2924 = vrcp.pop %v2923
    %v2925 = vmul.f32 1.0, %v2924
    %v2926 = vadd.f32 %v1938, %v2847
    %v2927 = vxor.u32 %v2926, 2147483648
    %v2928 = vmul.f32 %v2927, 1.442695
    %v2929 = vpow.pop %v2928
    %v2930 = vadd.f32 %v2929, 1.0
    %v2931 = vrcp.pop %v2930
    %v2932 = vmul.f32 1.0, %v2931
    %v2933 = vmul.f32 %v2925, %v2916
    %v2934 = vadd.f32 %v2012, %v2933
    %v2935 = vtanh.pop %v2934
    %v2937 = vrot.slane %v2935, 2
    %v2939 = vsub.f32 %v2774, %v2937
    %v2941 = vrot.slane %v2939, 6
    %v2943 = vmul.f32 %v2932, %v2941
    %v2944 = vadd.f32 %v2935, %v2943
    %2945 = vmatprep.subr.mxu0 %v2016
    %2946 = vmatpush1.msra.mxu0 %v2015
    %2947 = vmatprep.subr.mxu0 %v2019
    %2948 = vmatpush1.msra.mxu0 %v2018
    %2949 = vmatprep.subr.mxu0 %v2022
    %2950 = vmatpush1.msra.mxu0 %v2021
    %2951 = vmatprep.subr.mxu0 %v2025
    %2952 = vmatpush1.msra.mxu0 %v2024
    %2953 = vmatprep.subr.mxu0 %v2028
    %2954 = vmatpush1.msra.mxu0 %v2027
    %2955 = vmatprep.subr.mxu0 %v2031
    %2956 = vmatpush1.msra.mxu0 %v2030
    %2957 = vmatprep.subr.mxu0 %v2034
    %2958 = vmatpush1.msra.mxu0 %v2033
    %2959 = vmatprep.subr.mxu0 %v2037
    %2960 = vmatpush1.msra.mxu0 %v2036
    %2961 = vmatprep.subr.mxu0 %v2040
    %2962 = vmatpush1.msra.mxu0 %v2039
    %2963 = vmatprep.subr.mxu0 %v2043
    %2964 = vmatpush1.msra.mxu0 %v2042
    %2965 = vmatprep.subr.mxu0 %v2046
    %2966 = vmatpush1.msra.mxu0 %v2045
    %2967 = vmatprep.subr.mxu0 %v2049
    %2968 = vmatpush1.msra.mxu0 %v2048
    %2969 = vmatprep.subr.mxu0 %v2052
    %2970 = vmatpush1.msra.mxu0 %v2051
    %2971 = vmatprep.subr.mxu0 %v2055
    %2972 = vmatpush1.msra.mxu0 %v2054
    %2973 = vmatprep.subr.mxu0 %v2058
    %2974 = vmatpush1.msra.mxu0 %v2057
    %2975 = vmatprep.subr.mxu0 %v2061
    %2976 = vmatpush1.msra.mxu0 %v2060
    %2977 = vmatprep.subr.mxu0 0.0
    %2978 = vmatpush1.msra.mxu0 0.0
    %2979 = vmatprep.subr.mxu0 0.0
    %2980 = vmatpush1.msra.mxu0 0.0
    %2981 = vmatprep.subr.mxu0 0.0
    %2982 = vmatpush1.msra.mxu0 0.0
    %2983 = vmatprep.subr.mxu0 0.0
    %2984 = vmatpush1.msra.mxu0 0.0
    %2985 = vmatprep.subr.mxu0 0.0
    %2986 = vmatpush1.msra.mxu0 0.0
    %2987 = vmatprep.subr.mxu0 0.0
    %2988 = vmatpush1.msra.mxu0 0.0
    %2989 = vmatprep.subr.mxu0 0.0
    %2990 = vmatpush1.msra.mxu0 0.0
    %2991 = vmatprep.subr.mxu0 0.0
    %2992 = vmatpush1.msra.mxu0 0.0
    %2993 = vmatprep.subr.mxu0 0.0
    %2994 = vmatpush1.msra.mxu0 0.0
    %2995 = vmatprep.subr.mxu0 0.0
    %2996 = vmatpush1.msra.mxu0 0.0
    %2997 = vmatprep.subr.mxu0 0.0
    %2998 = vmatpush1.msra.mxu0 0.0
    %2999 = vmatprep.subr.mxu0 0.0
    %3000 = vmatpush1.msra.mxu0 0.0
    %3001 = vmatprep.subr.mxu0 0.0
    %3002 = vmatpush1.msra.mxu0 0.0
    %3003 = vmatprep.subr.mxu0 0.0
    %3004 = vmatpush1.msra.mxu0 0.0
    %3005 = vmatprep.subr.mxu0 0.0
    %3006 = vmatpush1.msra.mxu0 0.0
    %3007 = vmatprep.subr.mxu0 0.0
    %3008 = vmatpush1.msra.mxu0 0.0
    %3009 = vmatprep.mubr.f32.mxu0 0.0
    %3010 = vmatmul.mubr.f32.gmra.mrb[0].mxu0 %v2944
    %v3011 = vpop.f32.mrb[0].mxu0
    %v3012 = vadd.f32 %v2068, %v3011
    %v3013 = vpop.f32.mrb[0].mxu0
    %v3014 = vadd.f32 %v2072, %v3013
    %3015 = vdwg.mxu0
    %3016 = vmatprep.subr.mxu0 0.0
    %3017 = vmatpush1.msra.mxu0 %v2017
    %3018 = vmatprep.subr.mxu0 0.0
    %3019 = vmatpush1.msra.mxu0 %v2020
    %3020 = vmatprep.subr.mxu0 0.0
    %3021 = vmatpush1.msra.mxu0 %v2023
    %3022 = vmatprep.subr.mxu0 0.0
    %3023 = vmatpush1.msra.mxu0 %v2026
    %3024 = vmatprep.subr.mxu0 0.0
    %3025 = vmatpush1.msra.mxu0 %v2029
    %3026 = vmatprep.subr.mxu0 0.0
    %3027 = vmatpush1.msra.mxu0 %v2032
    %3028 = vmatprep.subr.mxu0 0.0
    %3029 = vmatpush1.msra.mxu0 %v2035
    %3030 = vmatprep.subr.mxu0 0.0
    %3031 = vmatpush1.msra.mxu0 %v2038
    %3032 = vmatprep.subr.mxu0 0.0
    %3033 = vmatpush1.msra.mxu0 %v2041
    %3034 = vmatprep.subr.mxu0 0.0
    %3035 = vmatpush1.msra.mxu0 %v2044
    %3036 = vmatprep.subr.mxu0 0.0
    %3037 = vmatpush1.msra.mxu0 %v2047
    %3038 = vmatprep.subr.mxu0 0.0
    %3039 = vmatpush1.msra.mxu0 %v2050
    %3040 = vmatprep.subr.mxu0 0.0
    %3041 = vmatpush1.msra.mxu0 %v2053
    %3042 = vmatprep.subr.mxu0 0.0
    %3043 = vmatpush1.msra.mxu0 %v2056
    %3044 = vmatprep.subr.mxu0 0.0
    %3045 = vmatpush1.msra.mxu0 %v2059
    %3046 = vmatprep.subr.mxu0 0.0
    %3047 = vmatpush1.msra.mxu0 %v2062
    %3048 = vmatprep.subr.mxu0 0.0
    %3049 = vmatpush1.msra.mxu0 0.0
    %3050 = vmatprep.subr.mxu0 0.0
    %3051 = vmatpush1.msra.mxu0 0.0
    %3052 = vmatprep.subr.mxu0 0.0
    %3053 = vmatpush1.msra.mxu0 0.0
    %3054 = vmatprep.subr.mxu0 0.0
    %3055 = vmatpush1.msra.mxu0 0.0
    %3056 = vmatprep.subr.mxu0 0.0
    %3057 = vmatpush1.msra.mxu0 0.0
    %3058 = vmatprep.subr.mxu0 0.0
    %3059 = vmatpush1.msra.mxu0 0.0
    %3060 = vmatprep.subr.mxu0 0.0
    %3061 = vmatpush1.msra.mxu0 0.0
    %3062 = vmatprep.subr.mxu0 0.0
    %3063 = vmatpush1.msra.mxu0 0.0
    %3064 = vmatprep.subr.mxu0 0.0
    %3065 = vmatpush1.msra.mxu0 0.0
    %3066 = vmatprep.subr.mxu0 0.0
    %3067 = vmatpush1.msra.mxu0 0.0
    %3068 = vmatprep.subr.mxu0 0.0
    %3069 = vmatpush1.msra.mxu0 0.0
    %3070 = vmatprep.subr.mxu0 0.0
    %3071 = vmatpush1.msra.mxu0 0.0
    %3072 = vmatprep.subr.mxu0 0.0
    %3073 = vmatpush1.msra.mxu0 0.0
    %3074 = vmatprep.subr.mxu0 0.0
    %3075 = vmatpush1.msra.mxu0 0.0
    %3076 = vmatprep.subr.mxu0 0.0
    %3077 = vmatpush1.msra.mxu0 0.0
    %3078 = vmatprep.subr.mxu0 0.0
    %3079 = vmatpush1.msra.mxu0 0.0
    %3080 = vmatprep.mubr.f32.mxu0 0.0
    %3081 = vmatmul.mubr.f32.gmra.mrb[0].mxu0 %v2944
    %v3082 = vpop.f32.mrb[0].mxu0
    %v3083 = vadd.f32 %v2076, %v3082
    %v3084 = vpop.f32.mrb[0].mxu0
    %3085 = vdwg.mxu0
    %v3087 = vrot.slane %v3012, 6
    %v3089 = vadd.f32 %v1936, %v3087
    %v3090 = vxor.u32 %v3089, 2147483648
    %v3091 = vmul.f32 %v3090, 1.442695
    %v3092 = vpow.pop %v3091
    %v3093 = vadd.f32 %v3092, 1.0
    %v3094 = vrcp.pop %v3093
    %v3095 = vmul.f32 1.0, %v3094
    %v3097 = vrot.slane %v3014, 6
    %v3099 = vadd.f32 %v1938, %v3097
    %v3100 = vxor.u32 %v3099, 2147483648
    %v3101 = vmul.f32 %v3100, 1.442695
    %v3102 = vpow.pop %v3101
    %v3103 = vadd.f32 %v3102, 1.0
    %v3104 = vrcp.pop %v3103
    %v3105 = vmul.f32 1.0, %v3104
    %v3107 = vrot.slane %v3083, 6
    %v3109 = vmul.f32 %v3095, %v3107
    %v3110 = vadd.f32 %v2012, %v3109
    %v3111 = vtanh.pop %v3110
    %v3113 = vrot.slane %v3111, 2
    %v3115 = vsub.f32 %v2944, %v3113
    %v3117 = vrot.slane %v3115, 6
    %v3119 = vmul.f32 %v3105, %v3117
    %v3120 = vadd.f32 %v3111, %v3119
    %v3122 = vrot.slane %v3120, 2
    %3124 = vmatprep.subr.mxu0 %v2016
    %3125 = vmatpush1.msra.mxu0 %v2015
    %3126 = vmatprep.subr.mxu0 %v2019
    %3127 = vmatpush1.msra.mxu0 %v2018
    %3128 = vmatprep.subr.mxu0 %v2022
    %3129 = vmatpush1.msra.mxu0 %v2021
    %3130 = vmatprep.subr.mxu0 %v2025
    %3131 = vmatpush1.msra.mxu0 %v2024
    %3132 = vmatprep.subr.mxu0 %v2028
    %3133 = vmatpush1.msra.mxu0 %v2027
    %3134 = vmatprep.subr.mxu0 %v2031
    %3135 = vmatpush1.msra.mxu0 %v2030
    %3136 = vmatprep.subr.mxu0 %v2034
    %3137 = vmatpush1.msra.mxu0 %v2033
    %3138 = vmatprep.subr.mxu0 %v2037
    %3139 = vmatpush1.msra.mxu0 %v2036
    %3140 = vmatprep.subr.mxu0 %v2040
    %3141 = vmatpush1.msra.mxu0 %v2039
    %3142 = vmatprep.subr.mxu0 %v2043
    %3143 = vmatpush1.msra.mxu0 %v2042
    %3144 = vmatprep.subr.mxu0 %v2046
    %3145 = vmatpush1.msra.mxu0 %v2045
    %3146 = vmatprep.subr.mxu0 %v2049
    %3147 = vmatpush1.msra.mxu0 %v2048
    %3148 = vmatprep.subr.mxu0 %v2052
    %3149 = vmatpush1.msra.mxu0 %v2051
    %3150 = vmatprep.subr.mxu0 %v2055
    %3151 = vmatpush1.msra.mxu0 %v2054
    %3152 = vmatprep.subr.mxu0 %v2058
    %3153 = vmatpush1.msra.mxu0 %v2057
    %3154 = vmatprep.subr.mxu0 %v2061
    %3155 = vmatpush1.msra.mxu0 %v2060
    %3156 = vmatprep.subr.mxu0 0.0
    %3157 = vmatpush1.msra.mxu0 0.0
    %3158 = vmatprep.subr.mxu0 0.0
    %3159 = vmatpush1.msra.mxu0 0.0
    %3160 = vmatprep.subr.mxu0 0.0
    %3161 = vmatpush1.msra.mxu0 0.0
    %3162 = vmatprep.subr.mxu0 0.0
    %3163 = vmatpush1.msra.mxu0 0.0
    %3164 = vmatprep.subr.mxu0 0.0
    %3165 = vmatpush1.msra.mxu0 0.0
    %3166 = vmatprep.subr.mxu0 0.0
    %3167 = vmatpush1.msra.mxu0 0.0
    %3168 = vmatprep.subr.mxu0 0.0
    %3169 = vmatpush1.msra.mxu0 0.0
    %3170 = vmatprep.subr.mxu0 0.0
    %3171 = vmatpush1.msra.mxu0 0.0
    %3172 = vmatprep.subr.mxu0 0.0
    %3173 = vmatpush1.msra.mxu0 0.0
    %3174 = vmatprep.subr.mxu0 0.0
    %3175 = vmatpush1.msra.mxu0 0.0
    %3176 = vmatprep.subr.mxu0 0.0
    %3177 = vmatpush1.msra.mxu0 0.0
    %3178 = vmatprep.subr.mxu0 0.0
    %3179 = vmatpush1.msra.mxu0 0.0
    %3180 = vmatprep.subr.mxu0 0.0
    %3181 = vmatpush1.msra.mxu0 0.0
    %3182 = vmatprep.subr.mxu0 0.0
    %3183 = vmatpush1.msra.mxu0 0.0
    %3184 = vmatprep.subr.mxu0 0.0
    %3185 = vmatpush1.msra.mxu0 0.0
    %3186 = vmatprep.subr.mxu0 0.0
    %3187 = vmatpush1.msra.mxu0 0.0
    %3188 = vmatprep.mubr.f32.mxu0 0.0
    %3189 = vmatmul.mubr.f32.gmra.mrb[0].mxu0 %v3122
    %v3190 = vpop.f32.mrb[0].mxu0
    %v3191 = vadd.f32 %v2068, %v3190
    %v3192 = vpop.f32.mrb[0].mxu0
    %v3193 = vadd.f32 %v2072, %v3192
    %3194 = vdwg.mxu0
    %3195 = vmatprep.subr.mxu0 0.0
    %3196 = vmatpush1.msra.mxu0 %v2017
    %3197 = vmatprep.subr.mxu0 0.0
    %3198 = vmatpush1.msra.mxu0 %v2020
    %3199 = vmatprep.subr.mxu0 0.0
    %3200 = vmatpush1.msra.mxu0 %v2023
    %3201 = vmatprep.subr.mxu0 0.0
    %3202 = vmatpush1.msra.mxu0 %v2026
    %3203 = vmatprep.subr.mxu0 0.0
    %3204 = vmatpush1.msra.mxu0 %v2029
    %3205 = vmatprep.subr.mxu0 0.0
    %3206 = vmatpush1.msra.mxu0 %v2032
    %3207 = vmatprep.subr.mxu0 0.0
    %3208 = vmatpush1.msra.mxu0 %v2035
    %3209 = vmatprep.subr.mxu0 0.0
    %3210 = vmatpush1.msra.mxu0 %v2038
    %3211 = vmatprep.subr.mxu0 0.0
    %3212 = vmatpush1.msra.mxu0 %v2041
    %3213 = vmatprep.subr.mxu0 0.0
    %3214 = vmatpush1.msra.mxu0 %v2044
    %3215 = vmatprep.subr.mxu0 0.0
    %3216 = vmatpush1.msra.mxu0 %v2047
    %3217 = vmatprep.subr.mxu0 0.0
    %3218 = vmatpush1.msra.mxu0 %v2050
    %3219 = vmatprep.subr.mxu0 0.0
    %3220 = vmatpush1.msra.mxu0 %v2053
    %3221 = vmatprep.subr.mxu0 0.0
    %3222 = vmatpush1.msra.mxu0 %v2056
    %3223 = vmatprep.subr.mxu0 0.0
    %3224 = vmatpush1.msra.mxu0 %v2059
    %3225 = vmatprep.subr.mxu0 0.0
    %3226 = vmatpush1.msra.mxu0 %v2062
    %3227 = vmatprep.subr.mxu0 0.0
    %3228 = vmatpush1.msra.mxu0 0.0
    %3229 = vmatprep.subr.mxu0 0.0
    %3230 = vmatpush1.msra.mxu0 0.0
    %3231 = vmatprep.subr.mxu0 0.0
    %3232 = vmatpush1.msra.mxu0 0.0
    %3233 = vmatprep.subr.mxu0 0.0
    %3234 = vmatpush1.msra.mxu0 0.0
    %3235 = vmatprep.subr.mxu0 0.0
    %3236 = vmatpush1.msra.mxu0 0.0
    %3237 = vmatprep.subr.mxu0 0.0
    %3238 = vmatpush1.msra.mxu0 0.0
    %3239 = vmatprep.subr.mxu0 0.0
    %3240 = vmatpush1.msra.mxu0 0.0
    %3241 = vmatprep.subr.mxu0 0.0
    %3242 = vmatpush1.msra.mxu0 0.0
    %3243 = vmatprep.subr.mxu0 0.0
    %3244 = vmatpush1.msra.mxu0 0.0
    %3245 = vmatprep.subr.mxu0 0.0
    %3246 = vmatpush1.msra.mxu0 0.0
    %3247 = vmatprep.subr.mxu0 0.0
    %3248 = vmatpush1.msra.mxu0 0.0
    %3249 = vmatprep.subr.mxu0 0.0
    %3250 = vmatpush1.msra.mxu0 0.0
    %3251 = vmatprep.subr.mxu0 0.0
    %3252 = vmatpush1.msra.mxu0 0.0
    %3253 = vmatprep.subr.mxu0 0.0
    %3254 = vmatpush1.msra.mxu0 0.0
    %3255 = vmatprep.subr.mxu0 0.0
    %3256 = vmatpush1.msra.mxu0 0.0
    %3257 = vmatprep.subr.mxu0 0.0
    %3258 = vmatpush1.msra.mxu0 0.0
    %3259 = vmatprep.mubr.f32.mxu0 0.0
    %3260 = vmatmul.mubr.f32.gmra.mrb[0].mxu0 %v3122
    %v3261 = vpop.f32.mrb[0].mxu0
    %v3262 = vadd.f32 %v2076, %v3261
    %v3263 = vpop.f32.mrb[0].mxu0
    %3264 = vdwg.mxu0
    %v3266 = vrot.slane %v3191, 4
    %v3268 = vadd.f32 %v1936, %v3266
    %v3269 = vxor.u32 %v3268, 2147483648
    %v3270 = vmul.f32 %v3269, 1.442695
    %v3271 = vpow.pop %v3270
    %v3272 = vadd.f32 %v3271, 1.0
    %v3273 = vrcp.pop %v3272
    %v3274 = vmul.f32 1.0, %v3273
    %v3276 = vrot.slane %v3193, 4
    %v3278 = vadd.f32 %v1938, %v3276
    %v3279 = vxor.u32 %v3278, 2147483648
    %v3280 = vmul.f32 %v3279, 1.442695
    %v3281 = vpow.pop %v3280
    %v3282 = vadd.f32 %v3281, 1.0
    %v3283 = vrcp.pop %v3282
    %v3284 = vmul.f32 1.0, %v3283
    %v3286 = vrot.slane %v3262, 4
    %v3288 = vmul.f32 %v3274, %v3286
    %v3289 = vadd.f32 %v2012, %v3288
    %v3290 = vtanh.pop %v3289
    %v3292 = vrot.slane %v3290, 2
    %v3294 = vsub.f32 %v3120, %v3292
    %v3296 = vrot.slane %v3294, 6
    %v3298 = vmul.f32 %v3284, %v3296
    %v3299 = vadd.f32 %v3290, %v3298
    %v3301 = vrot.slane %v3299, 4
    %3303 = vmatprep.subr.mxu0 %v2016
    %3304 = vmatpush1.msra.mxu0 %v2015
    %3305 = vmatprep.subr.mxu0 %v2019
    %3306 = vmatpush1.msra.mxu0 %v2018
    %3307 = vmatprep.subr.mxu0 %v2022
    %3308 = vmatpush1.msra.mxu0 %v2021
    %3309 = vmatprep.subr.mxu0 %v2025
    %3310 = vmatpush1.msra.mxu0 %v2024
    %3311 = vmatprep.subr.mxu0 %v2028
    %3312 = vmatpush1.msra.mxu0 %v2027
    %3313 = vmatprep.subr.mxu0 %v2031
    %3314 = vmatpush1.msra.mxu0 %v2030
    %3315 = vmatprep.subr.mxu0 %v2034
    %3316 = vmatpush1.msra.mxu0 %v2033
    %3317 = vmatprep.subr.mxu0 %v2037
    %3318 = vmatpush1.msra.mxu0 %v2036
    %3319 = vmatprep.subr.mxu0 %v2040
    %3320 = vmatpush1.msra.mxu0 %v2039
    %3321 = vmatprep.subr.mxu0 %v2043
    %3322 = vmatpush1.msra.mxu0 %v2042
    %3323 = vmatprep.subr.mxu0 %v2046
    %3324 = vmatpush1.msra.mxu0 %v2045
    %3325 = vmatprep.subr.mxu0 %v2049
    %3326 = vmatpush1.msra.mxu0 %v2048
    %3327 = vmatprep.subr.mxu0 %v2052
    %3328 = vmatpush1.msra.mxu0 %v2051
    %3329 = vmatprep.subr.mxu0 %v2055
    %3330 = vmatpush1.msra.mxu0 %v2054
    %3331 = vmatprep.subr.mxu0 %v2058
    %3332 = vmatpush1.msra.mxu0 %v2057
    %3333 = vmatprep.subr.mxu0 %v2061
    %3334 = vmatpush1.msra.mxu0 %v2060
    %3335 = vmatprep.subr.mxu0 0.0
    %3336 = vmatpush1.msra.mxu0 0.0
    %3337 = vmatprep.subr.mxu0 0.0
    %3338 = vmatpush1.msra.mxu0 0.0
    %3339 = vmatprep.subr.mxu0 0.0
    %3340 = vmatpush1.msra.mxu0 0.0
    %3341 = vmatprep.subr.mxu0 0.0
    %3342 = vmatpush1.msra.mxu0 0.0
    %3343 = vmatprep.subr.mxu0 0.0
    %3344 = vmatpush1.msra.mxu0 0.0
    %3345 = vmatprep.subr.mxu0 0.0
    %3346 = vmatpush1.msra.mxu0 0.0
    %3347 = vmatprep.subr.mxu0 0.0
    %3348 = vmatpush1.msra.mxu0 0.0
    %3349 = vmatprep.subr.mxu0 0.0
    %3350 = vmatpush1.msra.mxu0 0.0
    %3351 = vmatprep.subr.mxu0 0.0
    %3352 = vmatpush1.msra.mxu0 0.0
    %3353 = vmatprep.subr.mxu0 0.0
    %3354 = vmatpush1.msra.mxu0 0.0
    %3355 = vmatprep.subr.mxu0 0.0
    %3356 = vmatpush1.msra.mxu0 0.0
    %3357 = vmatprep.subr.mxu0 0.0
    %3358 = vmatpush1.msra.mxu0 0.0
    %3359 = vmatprep.subr.mxu0 0.0
    %3360 = vmatpush1.msra.mxu0 0.0
    %3361 = vmatprep.subr.mxu0 0.0
    %3362 = vmatpush1.msra.mxu0 0.0
    %3363 = vmatprep.subr.mxu0 0.0
    %3364 = vmatpush1.msra.mxu0 0.0
    %3365 = vmatprep.subr.mxu0 0.0
    %3366 = vmatpush1.msra.mxu0 0.0
    %3367 = vmatprep.mubr.f32.mxu0 0.0
    %3368 = vmatmul.mubr.f32.gmra.mrb[0].mxu0 %v3301
    %v3369 = vpop.f32.mrb[0].mxu0
    %v3370 = vadd.f32 %v2068, %v3369
    %v3371 = vpop.f32.mrb[0].mxu0
    %v3372 = vadd.f32 %v2072, %v3371
    %3373 = vdwg.mxu0
    %3374 = vmatprep.subr.mxu0 0.0
    %3375 = vmatpush1.msra.mxu0 %v2017
    %3376 = vmatprep.subr.mxu0 0.0
    %3377 = vmatpush1.msra.mxu0 %v2020
    %3378 = vmatprep.subr.mxu0 0.0
    %3379 = vmatpush1.msra.mxu0 %v2023
    %3380 = vmatprep.subr.mxu0 0.0
    %3381 = vmatpush1.msra.mxu0 %v2026
    %3382 = vmatprep.subr.mxu0 0.0
    %3383 = vmatpush1.msra.mxu0 %v2029
    %3384 = vmatprep.subr.mxu0 0.0
    %3385 = vmatpush1.msra.mxu0 %v2032
    %3386 = vmatprep.subr.mxu0 0.0
    %3387 = vmatpush1.msra.mxu0 %v2035
    %3388 = vmatprep.subr.mxu0 0.0
    %3389 = vmatpush1.msra.mxu0 %v2038
    %3390 = vmatprep.subr.mxu0 0.0
    %3391 = vmatpush1.msra.mxu0 %v2041
    %3392 = vmatprep.subr.mxu0 0.0
    %3393 = vmatpush1.msra.mxu0 %v2044
    %3394 = vmatprep.subr.mxu0 0.0
    %3395 = vmatpush1.msra.mxu0 %v2047
    %3396 = vmatprep.subr.mxu0 0.0
    %3397 = vmatpush1.msra.mxu0 %v2050
    %3398 = vmatprep.subr.mxu0 0.0
    %3399 = vmatpush1.msra.mxu0 %v2053
    %3400 = vmatprep.subr.mxu0 0.0
    %3401 = vmatpush1.msra.mxu0 %v2056
    %3402 = vmatprep.subr.mxu0 0.0
    %3403 = vmatpush1.msra.mxu0 %v2059
    %3404 = vmatprep.subr.mxu0 0.0
    %3405 = vmatpush1.msra.mxu0 %v2062
    %3406 = vmatprep.subr.mxu0 0.0
    %3407 = vmatpush1.msra.mxu0 0.0
    %3408 = vmatprep.subr.mxu0 0.0
    %3409 = vmatpush1.msra.mxu0 0.0
    %3410 = vmatprep.subr.mxu0 0.0
    %3411 = vmatpush1.msra.mxu0 0.0
    %3412 = vmatprep.subr.mxu0 0.0
    %3413 = vmatpush1.msra.mxu0 0.0
    %3414 = vmatprep.subr.mxu0 0.0
    %3415 = vmatpush1.msra.mxu0 0.0
    %3416 = vmatprep.subr.mxu0 0.0
    %3417 = vmatpush1.msra.mxu0 0.0
    %3418 = vmatprep.subr.mxu0 0.0
    %3419 = vmatpush1.msra.mxu0 0.0
    %3420 = vmatprep.subr.mxu0 0.0
    %3421 = vmatpush1.msra.mxu0 0.0
    %3422 = vmatprep.subr.mxu0 0.0
    %3423 = vmatpush1.msra.mxu0 0.0
    %3424 = vmatprep.subr.mxu0 0.0
    %3425 = vmatpush1.msra.mxu0 0.0
    %3426 = vmatprep.subr.mxu0 0.0
    %3427 = vmatpush1.msra.mxu0 0.0
    %3428 = vmatprep.subr.mxu0 0.0
    %3429 = vmatpush1.msra.mxu0 0.0
    %3430 = vmatprep.subr.mxu0 0.0
    %3431 = vmatpush1.msra.mxu0 0.0
    %3432 = vmatprep.subr.mxu0 0.0
    %3433 = vmatpush1.msra.mxu0 0.0
    %3434 = vmatprep.subr.mxu0 0.0
    %3435 = vmatpush1.msra.mxu0 0.0
    %3436 = vmatprep.subr.mxu0 0.0
    %3437 = vmatpush1.msra.mxu0 0.0
    %3438 = vmatprep.mubr.f32.mxu0 0.0
    %3439 = vmatmul.mubr.f32.gmra.mrb[0].mxu0 %v3301
    %v3440 = vpop.f32.mrb[0].mxu0
    %v3441 = vadd.f32 %v2076, %v3440
    %v3442 = vpop.f32.mrb[0].mxu0
    %3443 = vdwg.mxu0
    %v3445 = vrot.slane %v3370, 2
    %v3447 = vadd.f32 %v1936, %v3445
    %v3448 = vxor.u32 %v3447, 2147483648
    %v3449 = vmul.f32 %v3448, 1.442695
    %v3450 = vpow.pop %v3449
    %v3451 = vadd.f32 %v3450, 1.0
    %v3452 = vrcp.pop %v3451
    %v3453 = vmul.f32 1.0, %v3452
    %v3455 = vrot.slane %v3372, 2
    %v3457 = vadd.f32 %v1938, %v3455
    %v3458 = vxor.u32 %v3457, 2147483648
    %v3459 = vmul.f32 %v3458, 1.442695
    %v3460 = vpow.pop %v3459
    %v3461 = vadd.f32 %v3460, 1.0
    %v3462 = vrcp.pop %v3461
    %v3463 = vmul.f32 1.0, %v3462
    %v3465 = vrot.slane %v3441, 2
    %v3467 = vmul.f32 %v3453, %v3465
    %v3468 = vadd.f32 %v2012, %v3467
    %v3469 = vtanh.pop %v3468
    %v3471 = vrot.slane %v3469, 2
    %v3473 = vsub.f32 %v3299, %v3471
    %v3475 = vrot.slane %v3473, 6
    %v3477 = vmul.f32 %v3463, %v3475
    %v3478 = vadd.f32 %v3469, %v3477
    %v3479 = vmax.f32 %v3478, 0.0
    %v3480 = vld [vmem:[#allocation12] sm:$0xff]
    %v3481 = vld [vmem:[#allocation12 + $0x8] sm:$0xff]
    %v3482 = vld [vmem:[#allocation12 + $0x10] sm:$0xff]
    %v3483 = vld [vmem:[#allocation12 + $0x18] sm:$0xff]
    %v3484 = vld [vmem:[#allocation12 + $0x20] sm:$0xff]
    %v3485 = vld [vmem:[#allocation12 + $0x28] sm:$0xff]
    %v3486 = vld [vmem:[#allocation12 + $0x30] sm:$0xff]
    %v3487 = vld [vmem:[#allocation12 + $0x38] sm:$0xff]
    %v3488 = vld [vmem:[#allocation12 + $0x40] sm:$0xff]
    %v3489 = vld [vmem:[#allocation12 + $0x48] sm:$0xff]
    %v3490 = vld [vmem:[#allocation12 + $0x50] sm:$0xff]
    %v3491 = vld [vmem:[#allocation12 + $0x58] sm:$0xff]
    %v3492 = vld [vmem:[#allocation12 + $0x60] sm:$0xff]
    %v3493 = vld [vmem:[#allocation12 + $0x68] sm:$0xff]
    %v3494 = vld [vmem:[#allocation12 + $0x70] sm:$0xff]
    %v3495 = vld [vmem:[#allocation12 + $0x78] sm:$0xff]
    %v3496 = vld [vmem:[%s10] sm:$0x1]
    %v3498 = vlaneseq
    %v3499 = vshrl.u32 %v3498, 7
    %v3500 = vsub.s32 0, %v3499
    %v3501 = vrot.slane %v3496, %v3500
    %v3504 = vrot.slane %v3479, 6
    %3506 = vmatprep.subr.mxu0 0.0
    %3507 = vmatpush1.msra.mxu0 %v3480
    %3508 = vmatprep.subr.mxu0 0.0
    %3509 = vmatpush1.msra.mxu0 %v3481
    %3510 = vmatprep.subr.mxu0 0.0
    %3511 = vmatpush1.msra.mxu0 %v3482
    %3512 = vmatprep.subr.mxu0 0.0
    %3513 = vmatpush1.msra.mxu0 %v3483
    %3514 = vmatprep.subr.mxu0 0.0
    %3515 = vmatpush1.msra.mxu0 %v3484
    %3516 = vmatprep.subr.mxu0 0.0
    %3517 = vmatpush1.msra.mxu0 %v3485
    %3518 = vmatprep.subr.mxu0 0.0
    %3519 = vmatpush1.msra.mxu0 %v3486
    %3520 = vmatprep.subr.mxu0 0.0
    %3521 = vmatpush1.msra.mxu0 %v3487
    %3522 = vmatprep.subr.mxu0 0.0
    %3523 = vmatpush1.msra.mxu0 %v3488
    %3524 = vmatprep.subr.mxu0 0.0
    %3525 = vmatpush1.msra.mxu0 %v3489
    %3526 = vmatprep.subr.mxu0 0.0
    %3527 = vmatpush1.msra.mxu0 %v3490
    %3528 = vmatprep.subr.mxu0 0.0
    %3529 = vmatpush1.msra.mxu0 %v3491
    %3530 = vmatprep.subr.mxu0 0.0
    %3531 = vmatpush1.msra.mxu0 %v3492
    %3532 = vmatprep.subr.mxu0 0.0
    %3533 = vmatpush1.msra.mxu0 %v3493
    %3534 = vmatprep.subr.mxu0 0.0
    %3535 = vmatpush1.msra.mxu0 %v3494
    %3536 = vmatprep.subr.mxu0 0.0
    %3537 = vmatpush1.msra.mxu0 %v3495
    %3538 = vmatprep.subr.mxu0 0.0
    %3539 = vmatpush1.msra.mxu0 0.0
    %3540 = vmatprep.subr.mxu0 0.0
    %3541 = vmatpush1.msra.mxu0 0.0
    %3542 = vmatprep.subr.mxu0 0.0
    %3543 = vmatpush1.msra.mxu0 0.0
    %3544 = vmatprep.subr.mxu0 0.0
    %3545 = vmatpush1.msra.mxu0 0.0
    %3546 = vmatprep.subr.mxu0 0.0
    %3547 = vmatpush1.msra.mxu0 0.0
    %3548 = vmatprep.subr.mxu0 0.0
    %3549 = vmatpush1.msra.mxu0 0.0
    %3550 = vmatprep.subr.mxu0 0.0
    %3551 = vmatpush1.msra.mxu0 0.0
    %3552 = vmatprep.subr.mxu0 0.0
    %3553 = vmatpush1.msra.mxu0 0.0
    %3554 = vmatprep.subr.mxu0 0.0
    %3555 = vmatpush1.msra.mxu0 0.0
    %3556 = vmatprep.subr.mxu0 0.0
    %3557 = vmatpush1.msra.mxu0 0.0
    %3558 = vmatprep.subr.mxu0 0.0
    %3559 = vmatpush1.msra.mxu0 0.0
    %3560 = vmatprep.subr.mxu0 0.0
    %3561 = vmatpush1.msra.mxu0 0.0
    %3562 = vmatprep.subr.mxu0 0.0
    %3563 = vmatpush1.msra.mxu0 0.0
    %3564 = vmatprep.subr.mxu0 0.0
    %3565 = vmatpush1.msra.mxu0 0.0
    %3566 = vmatprep.subr.mxu0 0.0
    %3567 = vmatpush1.msra.mxu0 0.0
    %3568 = vmatprep.subr.mxu0 0.0
    %3569 = vmatpush1.msra.mxu0 0.0
    %3570 = vmatprep.mubr.f32.mxu0 0.0
    %3571 = vmatmul.mubr.f32.gmra.mrb[0].mxu0 %v3504
    %v3572 = vpop.f32.mrb[0].mxu0
    %v3573 = vadd.f32 %v3501, %v3572
    %v3574 = vpop.f32.mrb[0].mxu0
    %3575 = vdwg.mxu0
    %v3576 = vmax.f32 %v3573, 0.0
    %v3577 = vld [vmem:[#allocation14] sm:$0xff]
    %v3578 = vld [vmem:[#allocation14 + $0x8] sm:$0xff]
    %v3579 = vld [vmem:[#allocation14 + $0x10] sm:$0xff]
    %v3580 = vld [vmem:[#allocation14 + $0x18] sm:$0xff]
    %v3581 = vld [vmem:[#allocation14 + $0x20] sm:$0xff]
    %v3582 = vld [vmem:[#allocation14 + $0x28] sm:$0xff]
    %v3583 = vld [vmem:[#allocation14 + $0x30] sm:$0xff]
    %v3584 = vld [vmem:[#allocation14 + $0x38] sm:$0xff]
    %v3585 = vld [vmem:[#allocation14 + $0x40] sm:$0xff]
    %v3586 = vld [vmem:[#allocation14 + $0x48] sm:$0xff]
    %v3587 = vld [vmem:[#allocation14 + $0x50] sm:$0xff]
    %v3588 = vld [vmem:[#allocation14 + $0x58] sm:$0xff]
    %v3589 = vld [vmem:[#allocation14 + $0x60] sm:$0xff]
    %v3590 = vld [vmem:[#allocation14 + $0x68] sm:$0xff]
    %v3591 = vld [vmem:[#allocation14 + $0x70] sm:$0xff]
    %v3592 = vld [vmem:[#allocation14 + $0x78] sm:$0xff]
    %v3593 = vld [vmem:[%s12] sm:$0x1]
    %v3595 = vlaneseq
    %v3596 = vshrl.u32 %v3595, 7
    %v3597 = vsub.s32 0, %v3596
    %v3598 = vrot.slane %v3593, %v3597
    %3600 = vmatprep.subr.mxu0 0.0
    %3601 = vmatpush1.msra.mxu0 %v3577
    %3602 = vmatprep.subr.mxu0 0.0
    %3603 = vmatpush1.msra.mxu0 %v3578
    %3604 = vmatprep.subr.mxu0 0.0
    %3605 = vmatpush1.msra.mxu0 %v3579
    %3606 = vmatprep.subr.mxu0 0.0
    %3607 = vmatpush1.msra.mxu0 %v3580
    %3608 = vmatprep.subr.mxu0 0.0
    %3609 = vmatpush1.msra.mxu0 %v3581
    %3610 = vmatprep.subr.mxu0 0.0
    %3611 = vmatpush1.msra.mxu0 %v3582
    %3612 = vmatprep.subr.mxu0 0.0
    %3613 = vmatpush1.msra.mxu0 %v3583
    %3614 = vmatprep.subr.mxu0 0.0
    %3615 = vmatpush1.msra.mxu0 %v3584
    %3616 = vmatprep.subr.mxu0 0.0
    %3617 = vmatpush1.msra.mxu0 %v3585
    %3618 = vmatprep.subr.mxu0 0.0
    %3619 = vmatpush1.msra.mxu0 %v3586
    %3620 = vmatprep.subr.mxu0 0.0
    %3621 = vmatpush1.msra.mxu0 %v3587
    %3622 = vmatprep.subr.mxu0 0.0
    %3623 = vmatpush1.msra.mxu0 %v3588
    %3624 = vmatprep.subr.mxu0 0.0
    %3625 = vmatpush1.msra.mxu0 %v3589
    %3626 = vmatprep.subr.mxu0 0.0
    %3627 = vmatpush1.msra.mxu0 %v3590
    %3628 = vmatprep.subr.mxu0 0.0
    %3629 = vmatpush1.msra.mxu0 %v3591
    %3630 = vmatprep.subr.mxu0 0.0
    %3631 = vmatpush1.msra.mxu0 %v3592
    %3632 = vmatprep.subr.mxu0 0.0
    %3633 = vmatpush1.msra.mxu0 0.0
    %3634 = vmatprep.subr.mxu0 0.0
    %3635 = vmatpush1.msra.mxu0 0.0
    %3636 = vmatprep.subr.mxu0 0.0
    %3637 = vmatpush1.msra.mxu0 0.0
    %3638 = vmatprep.subr.mxu0 0.0
    %3639 = vmatpush1.msra.mxu0 0.0
    %3640 = vmatprep.subr.mxu0 0.0
    %3641 = vmatpush1.msra.mxu0 0.0
    %3642 = vmatprep.subr.mxu0 0.0
    %3643 = vmatpush1.msra.mxu0 0.0
    %3644 = vmatprep.subr.mxu0 0.0
    %3645 = vmatpush1.msra.mxu0 0.0
    %3646 = vmatprep.subr.mxu0 0.0
    %3647 = vmatpush1.msra.mxu0 0.0
    %3648 = vmatprep.subr.mxu0 0.0
    %3649 = vmatpush1.msra.mxu0 0.0
    %3650 = vmatprep.subr.mxu0 0.0
    %3651 = vmatpush1.msra.mxu0 0.0
    %3652 = vmatprep.subr.mxu0 0.0
    %3653 = vmatpush1.msra.mxu0 0.0
    %3654 = vmatprep.subr.mxu0 0.0
    %3655 = vmatpush1.msra.mxu0 0.0
    %3656 = vmatprep.subr.mxu0 0.0
    %3657 = vmatpush1.msra.mxu0 0.0
    %3658 = vmatprep.subr.mxu0 0.0
    %3659 = vmatpush1.msra.mxu0 0.0
    %3660 = vmatprep.subr.mxu0 0.0
    %3661 = vmatpush1.msra.mxu0 0.0
    %3662 = vmatprep.subr.mxu0 0.0
    %3663 = vmatpush1.msra.mxu0 0.0
    %3664 = vmatprep.mubr.f32.mxu0 0.0
    %3665 = vmatmul.mubr.f32.gmra.mrb[0].mxu0 %v3576
    %v3666 = vpop.f32.mrb[0].mxu0
    %v3667 = vadd.f32 %v3598, %v3666
    %v3668 = vpop.f32.mrb[0].mxu0
    %3669 = vdwg.mxu0
    %3670 = vst [vmem:[#allocation15] sm:$0x3] %v3667
    // Predicated region
    $region82: #{tpu_custom_call.1} parent=1 // pred_check
      _
    $region83: #{tpu_custom_call.1} parent=1 // pred_check_branch
      %3672 = sbr.rel (0) target = $region85
    $region84: #{tpu_custom_call.1} parent=1 // pred_region
      %s3674 = ssub.s32 32, 32
      %3675 = vsyncadd [#allocation5], %s3674
      %s3677 = sshll.u32 [#allocation15], 4
      %s3678 = int_to_ptr.vmem [resolvable:$true] %s3677
      %3680 = dma.vmem_to_hbm [thread:$0]  %s3678, 32, %s13, [#allocation5]
    $region85: #{tpu_custom_call.1} parent=1 // pred_fallthru
      _
    // Predicated region
    $region86: #{tpu_custom_call.1} parent=1 // pred_check
      _
    $region87: #{tpu_custom_call.1} parent=1 // pred_check_branch
      %3682 = sbr.rel (0) target = $region89
    $region88: #{tpu_custom_call.1} parent=1 // pred_region
      %3683 = dma.done [#allocation5], 32
    $region89: #{tpu_custom_call.1} parent=1 // pred_fallthru
      _
    %3684 = vsyncpa [#allocation4], 1
    %3685 = vsyncpa [#allocation7], 1
    %3686 = vsyncpa [#allocation10], 1
    %3687 = vsyncpa [#allocation13], 1
    %3688 = vsyncpa [#allocation5], 1

</llo_original>
